<compile_context>
chip_gen: v7x
topology: tpu7x:2x2x1
jax: 0.10.0
libtpu: 0.0.40
codegen_flags: <defaults>
</compile_context>

<pallas_src>
import jax
import jax.numpy as jnp
import numpy as np
from jax.experimental import pallas as pl
from jax.experimental.pallas import tpu as pltpu

_EPS = 1e-5  # nn.InstanceNorm2d default eps


# ----------------------------- fused Pallas kernel -------------------------- #

def _make_fused_kernel(H, W, C):
    """Build the fused (conv+IN+ReLU) x2 + residual kernel for one image.

    Flat "padded-width" layout: a reflect-padded (Hp, Wp) image is stored
    row-major as Hp*Wp lanes (+2 zero tail lanes so every tap slice stays in
    bounds).  Output position (h, w) is flat index j = h*Wp + w; tap (dy, dx)
    is then simply slab[:, dy*Wp+dx : dy*Wp+dx + H*Wp].  Columns with
    w in {W, W+1} are junk and are masked out of the IN statistics and stripped
    by the wrapper.
    """
    Hp, Wp = H + 2, W + 2
    OUT = H * Wp                  # flat output length (incl. 2 junk cols / row)
    SLAB = Hp * Wp + 2            # padded slab length (+2 so taps never read OOB)
    inv_hw = 1.0 / float(H * W)

    def conv_in_relu(src_ref, w_ref, mask):
        # src_ref: (C, SLAB) reflect-padded slab; w_ref: (9*C, C) bf16; mask: (1, OUT)
        y = jnp.zeros((C, OUT), jnp.float32)
        for t in range(9):                       # 9 shifted-slice MXU dots
            dy, dx = t // 3, t % 3
            off = dy * Wp + dx
            tap = src_ref[:, off:off + OUT].astype(jnp.bfloat16)      # (C, OUT)
            w_t = w_ref[t * C:(t + 1) * C, :]                         # (C, C) bf16
            y = y + jnp.dot(w_t, tap, preferred_element_type=jnp.float32)
        # InstanceNorm2d(affine=False): one-pass masked stats over valid columns.
        s1 = jnp.sum(y * mask, axis=1, keepdims=True)                 # (C, 1)
        s2 = jnp.sum(y * y * mask, axis=1, keepdims=True)             # (C, 1)
        mean = s1 * inv_hw
        var = jnp.maximum(s2 * inv_hw - mean * mean, 0.0)
        inv = jax.lax.rsqrt(var + _EPS)
        return jnp.maximum((y - mean) * inv, 0.0)                     # ReLU

    def kernel(xpad_ref, w1_ref, w2_ref, mask_ref, o_ref, hpad_ref):
        mask = mask_ref[...]                                          # (1, OUT)

        # ---- stage 1: conv1 + IN + ReLU (reads the pre-padded input slab) ----
        h = conv_in_relu(xpad_ref, w1_ref, mask)                      # (C, OUT)

        # ---- in-VMEM reflection pad of h into the scratch slab ----
        hpad_ref[...] = jnp.zeros_like(hpad_ref)
        # interior rows 1..H, cols 1..W (single shifted bulk copy; the junk it
        # writes into pad columns is overwritten below)
        hpad_ref[:, Wp + 1:Wp + 1 + OUT] = h
        # top / bottom pad rows (reflect rows 1 and H-2)
        hpad_ref[:, 1:1 + W] = h[:, Wp:Wp + W]
        hpad_ref[:, (Hp - 1) * Wp + 1:(Hp - 1) * Wp + 1 + W] = \
            h[:, (H - 2) * Wp:(H - 2) * Wp + W]
        # left / right pad columns (reflect cols 1 and W-2)
        for hp in range(1, H + 1):
            src = (hp - 1) * Wp
            hpad_ref[:, hp * Wp:hp * Wp + 1] = h[:, src + 1:src + 2]
            hpad_ref[:, hp * Wp + W + 1:hp * Wp + W + 2] = \
                h[:, src + W - 2:src + W - 1]
        # four corners
        hpad_ref[:, 0:1] = h[:, Wp + 1:Wp + 2]
        hpad_ref[:, W + 1:W + 2] = h[:, Wp + W - 2:Wp + W - 1]
        hpad_ref[:, (Hp - 1) * Wp:(Hp - 1) * Wp + 1] = \
            h[:, (H - 2) * Wp + 1:(H - 2) * Wp + 2]
        hpad_ref[:, (Hp - 1) * Wp + W + 1:(Hp - 1) * Wp + W + 2] = \
            h[:, (H - 2) * Wp + W - 2:(H - 2) * Wp + W - 1]

        # ---- stage 2: conv2 + IN + ReLU + residual add (all in VMEM) ----
        h2 = conv_in_relu(hpad_ref, w2_ref, mask)                     # (C, OUT)
        res = xpad_ref[:, Wp + 1:Wp + 1 + OUT]                        # x in flat coords
        o_ref[...] = (h2 + res).astype(o_ref.dtype)

    return kernel, OUT, SLAB


# --------------------------------- JAX glue --------------------------------- #

def resnet_block(x_nchw, w1, b1, w2, b2):
    """ResnetBlock forward.  x_nchw: (N, C, H, W); weights in PyTorch
    (Cout, Cin, 3, 3) layout.  b1/b2 accepted for API parity but unused: the
    conv bias is cancelled exactly by InstanceNorm2d(affine=False)."""
    del b1, b2
    x = x_nchw.astype(jnp.float32)
    N, C, H, W = x.shape
    Hp, Wp = H + 2, W + 2

    kernel, OUT, SLAB = _make_fused_kernel(H, W, C)

    # Reflect-pad x once (reads x once, ~1.1x bytes) and flatten row-major,
    # with 2 zero tail lanes so every tap slice is in bounds.
    xp = jnp.pad(x, ((0, 0), (0, 0), (1, 1), (1, 1)), mode="reflect")
    xp = xp.reshape(N, C, Hp * Wp)
    xp = jnp.pad(xp, ((0, 0), (0, 0), (0, SLAB - Hp * Wp)))           # (N, C, SLAB)

    # (Cout, Cin, kh, kw) -> (kh, kw, Cout, Cin) -> (9*Cout, Cin), bf16 for MXU.
    def to_wmat(w):
        return jnp.transpose(w, (2, 3, 0, 1)).reshape(9 * C, C).astype(jnp.bfloat16)
    wm1, wm2 = to_wmat(w1), to_wmat(w2)

    # Valid-column mask for the IN statistics (junk cols have w in {W, W+1}).
    col = jnp.arange(OUT, dtype=jnp.int32) % Wp
    mask = (col < W).astype(jnp.float32).reshape(1, OUT)

    out_flat = pl.pallas_call(
        kernel,
        out_shape=jax.ShapeDtypeStruct((N, C, OUT), jnp.float32),
        grid=(N,),
        in_specs=[
            pl.BlockSpec((None, C, SLAB), lambda n: (n, 0, 0)),   # padded x slab
            pl.BlockSpec((9 * C, C), lambda n: (0, 0)),           # conv1 weights (resident)
            pl.BlockSpec((9 * C, C), lambda n: (0, 0)),           # conv2 weights (resident)
            pl.BlockSpec((1, OUT), lambda n: (0, 0)),             # valid-column mask
        ],
        out_specs=pl.BlockSpec((None, C, OUT), lambda n: (n, 0, 0)),
        scratch_shapes=[pltpu.VMEM((C, SLAB), jnp.float32)],      # padded h slab
        compiler_params=pltpu.CompilerParams(dimension_semantics=("parallel",)),
    )(xp, wm1, wm2, mask)

    # Strip the 2 junk columns per row and return NCHW.
    out = out_flat.reshape(N, C, H, Wp)[:, :, :, :W]
    return out
    # TODO(synk): nn.Dropout path (use_dropout=True) not implemented (module default is False).


# --------------------------- numpy reference (f64) -------------------------- #

def _ref_numpy(x, w1, b1, w2, b2):
    def conv_in_relu(xin, w, b):
        N, C, H, W = xin.shape
        xp = np.pad(xin, ((0, 0), (0, 0), (1, 1), (1, 1)), mode="reflect")
        out = np.zeros((N, C, H, W), np.float64)
        for co in range(C):
            acc = np.full((N, H, W), b[co], np.float64)
            for ci in range(C):
                for dy in range(3):
                    for dx in range(3):
                        acc += w[co, ci, dy, dx] * xp[:, ci, dy:dy + H, dx:dx + W]
            out[:, co] = acc
        mean = out.mean(axis=(2, 3), keepdims=True)
        var = out.var(axis=(2, 3), keepdims=True)
        out = (out - mean) / np.sqrt(var + _EPS)
        return np.maximum(out, 0.0)

    h = conv_in_relu(x, w1, b1)
    h = conv_in_relu(h, w2, b2)
    return x + h


# ----------------------------------- main ----------------------------------- #

if __name__ == "__main__":
    N, C, H, W = 2, 4, 16, 16        # dim = 4
    key = jax.random.PRNGKey(0)
    k1, k2, k3, k4, k5 = jax.random.split(key, 5)
    x = jax.random.normal(k1, (N, C, H, W), jnp.float32)
    w1 = 0.2 * jax.random.normal(k2, (C, C, 3, 3), jnp.float32)
    b1 = 0.1 * jax.random.normal(k3, (C,), jnp.float32)
    w2 = 0.2 * jax.random.normal(k4, (C, C, 3, 3), jnp.float32)
    b2 = 0.1 * jax.random.normal(k5, (C,), jnp.float32)

    out = jax.jit(resnet_block)(x, w1, b1, w2, b2)
    out = jax.block_until_ready(out)

    ref = _ref_numpy(np.asarray(x, np.float64), np.asarray(w1, np.float64),
                     np.asarray(b1, np.float64), np.asarray(w2, np.float64),
                     np.asarray(b2, np.float64))
    # Tolerance loosened (vs f32-exact) because MXU operands are bf16 per the
    # performance review; statistics/normalization/residual remain f32.
    np.testing.assert_allclose(np.asarray(out), ref, rtol=0, atol=1e-1)

    print("KERNEL_OK")
</pallas_src>

<mosaic_0001>
module attributes {stable_mosaic.version = 11 : i64} {
  func.func @kernel(%arg0: i32, %arg1: memref<1x4x326xf32, #tpu.memory_space<vmem>>, %arg2: memref<36x4xbf16, #tpu.memory_space<vmem>>, %arg3: memref<36x4xbf16, #tpu.memory_space<vmem>>, %arg4: memref<1x288xf32, #tpu.memory_space<vmem>>, %arg5: memref<1x4x288xf32, #tpu.memory_space<vmem>>, %arg6: memref<4x326xf32, #tpu.memory_space<vmem>>) attributes {dimension_semantics = [#tpu.dimension_semantics<parallel>], iteration_bounds = array<i64: 2>, scalar_prefetch = 0 : i64, scratch_operands = 1 : i64, tpu.core_type = #tpu.core_type<tc>, window_params = [{transform_indices = @transform_0, window_bounds = array<i64: 1, 4, 326>}, {pipeline_mode = #tpu.pipeline_mode<synchronous>, transform_indices = @transform_1, window_bounds = array<i64: 36, 4>}, {pipeline_mode = #tpu.pipeline_mode<synchronous>, transform_indices = @transform_2, window_bounds = array<i64: 36, 4>}, {pipeline_mode = #tpu.pipeline_mode<synchronous>, transform_indices = @transform_3, window_bounds = array<i64: 1, 288>}, {transform_indices = @transform_4, window_bounds = array<i64: 1, 4, 288>}]} {
    %c0 = arith.constant 0 : index
    %c0_0 = arith.constant 0 : index
    %0 = vector.load %arg4[%c0, %c0_0] : memref<1x288xf32, #tpu.memory_space<vmem>>, vector<1x288xf32>
    %cst = arith.constant 0.000000e+00 : f32
    %1 = vector.broadcast %cst : f32 to vector<4x288xf32>
    %c0_1 = arith.constant 0 : index
    %c0_2 = arith.constant 0 : index
    %c0_3 = arith.constant 0 : index
    %2 = vector.load %arg1[%c0_1, %c0_2, %c0_3] : memref<1x4x326xf32, #tpu.memory_space<vmem>>, vector<1x4x288xf32>
    %3 = vector.shape_cast %2 : vector<1x4x288xf32> to vector<4x288xf32>
    %4 = arith.truncf %3 : vector<4x288xf32> to vector<4x288xbf16>
    %c0_4 = arith.constant 0 : index
    %c0_5 = arith.constant 0 : index
    %5 = vector.load %arg2[%c0_4, %c0_5] : memref<36x4xbf16, #tpu.memory_space<vmem>>, vector<4x4xbf16>
    %cst_6 = arith.constant dense<0.000000e+00> : vector<4x288xf32>
    %6 = tpu.matmul %5, %4, %cst_6 {dimension_numbers = #tpu.dot_dimension_numbers<[1], [0], [0], [1], [0, 0, 1, 1], [], []>} : vector<4x4xbf16>, vector<4x288xbf16>, vector<4x288xf32> -> vector<4x288xf32>
    %7 = arith.addf %1, %6 : vector<4x288xf32>
    %c0_7 = arith.constant 0 : index
    %c0_8 = arith.constant 0 : index
    %c1 = arith.constant 1 : index
    %8 = vector.load %arg1[%c0_7, %c0_8, %c1] : memref<1x4x326xf32, #tpu.memory_space<vmem>>, vector<1x4x288xf32>
    %9 = vector.shape_cast %8 : vector<1x4x288xf32> to vector<4x288xf32>
    %10 = arith.truncf %9 : vector<4x288xf32> to vector<4x288xbf16>
    %c4 = arith.constant 4 : index
    %c0_9 = arith.constant 0 : index
    %11 = vector.load %arg2[%c4, %c0_9] : memref<36x4xbf16, #tpu.memory_space<vmem>>, vector<4x4xbf16>
    %cst_10 = arith.constant dense<0.000000e+00> : vector<4x288xf32>
    %12 = tpu.matmul %11, %10, %cst_10 {dimension_numbers = #tpu.dot_dimension_numbers<[1], [0], [0], [1], [0, 0, 1, 1], [], []>} : vector<4x4xbf16>, vector<4x288xbf16>, vector<4x288xf32> -> vector<4x288xf32>
    %13 = arith.addf %7, %12 : vector<4x288xf32>
    %c0_11 = arith.constant 0 : index
    %c0_12 = arith.constant 0 : index
    %c2 = arith.constant 2 : index
    %14 = vector.load %arg1[%c0_11, %c0_12, %c2] : memref<1x4x326xf32, #tpu.memory_space<vmem>>, vector<1x4x288xf32>
    %15 = vector.shape_cast %14 : vector<1x4x288xf32> to vector<4x288xf32>
    %16 = arith.truncf %15 : vector<4x288xf32> to vector<4x288xbf16>
    %c8 = arith.constant 8 : index
    %c0_13 = arith.constant 0 : index
    %17 = vector.load %arg2[%c8, %c0_13] : memref<36x4xbf16, #tpu.memory_space<vmem>>, vector<4x4xbf16>
    %cst_14 = arith.constant dense<0.000000e+00> : vector<4x288xf32>
    %18 = tpu.matmul %17, %16, %cst_14 {dimension_numbers = #tpu.dot_dimension_numbers<[1], [0], [0], [1], [0, 0, 1, 1], [], []>} : vector<4x4xbf16>, vector<4x288xbf16>, vector<4x288xf32> -> vector<4x288xf32>
    %19 = arith.addf %13, %18 : vector<4x288xf32>
    %c0_15 = arith.constant 0 : index
    %c0_16 = arith.constant 0 : index
    %c18 = arith.constant 18 : index
    %20 = vector.load %arg1[%c0_15, %c0_16, %c18] : memref<1x4x326xf32, #tpu.memory_space<vmem>>, vector<1x4x288xf32>
    %21 = vector.shape_cast %20 : vector<1x4x288xf32> to vector<4x288xf32>
    %22 = arith.truncf %21 : vector<4x288xf32> to vector<4x288xbf16>
    %c12 = arith.constant 12 : index
    %c0_17 = arith.constant 0 : index
    %23 = vector.load %arg2[%c12, %c0_17] : memref<36x4xbf16, #tpu.memory_space<vmem>>, vector<4x4xbf16>
    %cst_18 = arith.constant dense<0.000000e+00> : vector<4x288xf32>
    %24 = tpu.matmul %23, %22, %cst_18 {dimension_numbers = #tpu.dot_dimension_numbers<[1], [0], [0], [1], [0, 0, 1, 1], [], []>} : vector<4x4xbf16>, vector<4x288xbf16>, vector<4x288xf32> -> vector<4x288xf32>
    %25 = arith.addf %19, %24 : vector<4x288xf32>
    %c0_19 = arith.constant 0 : index
    %c0_20 = arith.constant 0 : index
    %c19 = arith.constant 19 : index
    %26 = vector.load %arg1[%c0_19, %c0_20, %c19] : memref<1x4x326xf32, #tpu.memory_space<vmem>>, vector<1x4x288xf32>
    %27 = vector.shape_cast %26 : vector<1x4x288xf32> to vector<4x288xf32>
    %28 = arith.truncf %27 : vector<4x288xf32> to vector<4x288xbf16>
    %c16 = arith.constant 16 : index
    %c0_21 = arith.constant 0 : index
    %29 = vector.load %arg2[%c16, %c0_21] : memref<36x4xbf16, #tpu.memory_space<vmem>>, vector<4x4xbf16>
    %cst_22 = arith.constant dense<0.000000e+00> : vector<4x288xf32>
    %30 = tpu.matmul %29, %28, %cst_22 {dimension_numbers = #tpu.dot_dimension_numbers<[1], [0], [0], [1], [0, 0, 1, 1], [], []>} : vector<4x4xbf16>, vector<4x288xbf16>, vector<4x288xf32> -> vector<4x288xf32>
    %31 = arith.addf %25, %30 : vector<4x288xf32>
    %c0_23 = arith.constant 0 : index
    %c0_24 = arith.constant 0 : index
    %c20 = arith.constant 20 : index
    %32 = vector.load %arg1[%c0_23, %c0_24, %c20] : memref<1x4x326xf32, #tpu.memory_space<vmem>>, vector<1x4x288xf32>
    %33 = vector.shape_cast %32 : vector<1x4x288xf32> to vector<4x288xf32>
    %34 = arith.truncf %33 : vector<4x288xf32> to vector<4x288xbf16>
    %c20_25 = arith.constant 20 : index
    %c0_26 = arith.constant 0 : index
    %35 = vector.load %arg2[%c20_25, %c0_26] : memref<36x4xbf16, #tpu.memory_space<vmem>>, vector<4x4xbf16>
    %cst_27 = arith.constant dense<0.000000e+00> : vector<4x288xf32>
    %36 = tpu.matmul %35, %34, %cst_27 {dimension_numbers = #tpu.dot_dimension_numbers<[1], [0], [0], [1], [0, 0, 1, 1], [], []>} : vector<4x4xbf16>, vector<4x288xbf16>, vector<4x288xf32> -> vector<4x288xf32>
    %37 = arith.addf %31, %36 : vector<4x288xf32>
    %c0_28 = arith.constant 0 : index
    %c0_29 = arith.constant 0 : index
    %c36 = arith.constant 36 : index
    %38 = vector.load %arg1[%c0_28, %c0_29, %c36] : memref<1x4x326xf32, #tpu.memory_space<vmem>>, vector<1x4x288xf32>
    %39 = vector.shape_cast %38 : vector<1x4x288xf32> to vector<4x288xf32>
    %40 = arith.truncf %39 : vector<4x288xf32> to vector<4x288xbf16>
    %c24 = arith.constant 24 : index
    %c0_30 = arith.constant 0 : index
    %41 = vector.load %arg2[%c24, %c0_30] : memref<36x4xbf16, #tpu.memory_space<vmem>>, vector<4x4xbf16>
    %cst_31 = arith.constant dense<0.000000e+00> : vector<4x288xf32>
    %42 = tpu.matmul %41, %40, %cst_31 {dimension_numbers = #tpu.dot_dimension_numbers<[1], [0], [0], [1], [0, 0, 1, 1], [], []>} : vector<4x4xbf16>, vector<4x288xbf16>, vector<4x288xf32> -> vector<4x288xf32>
    %43 = arith.addf %37, %42 : vector<4x288xf32>
    %c0_32 = arith.constant 0 : index
    %c0_33 = arith.constant 0 : index
    %c37 = arith.constant 37 : index
    %44 = vector.load %arg1[%c0_32, %c0_33, %c37] : memref<1x4x326xf32, #tpu.memory_space<vmem>>, vector<1x4x288xf32>
    %45 = vector.shape_cast %44 : vector<1x4x288xf32> to vector<4x288xf32>
    %46 = arith.truncf %45 : vector<4x288xf32> to vector<4x288xbf16>
    %c28 = arith.constant 28 : index
    %c0_34 = arith.constant 0 : index
    %47 = vector.load %arg2[%c28, %c0_34] : memref<36x4xbf16, #tpu.memory_space<vmem>>, vector<4x4xbf16>
    %cst_35 = arith.constant dense<0.000000e+00> : vector<4x288xf32>
    %48 = tpu.matmul %47, %46, %cst_35 {dimension_numbers = #tpu.dot_dimension_numbers<[1], [0], [0], [1], [0, 0, 1, 1], [], []>} : vector<4x4xbf16>, vector<4x288xbf16>, vector<4x288xf32> -> vector<4x288xf32>
    %49 = arith.addf %43, %48 : vector<4x288xf32>
    %c0_36 = arith.constant 0 : index
    %c0_37 = arith.constant 0 : index
    %c38 = arith.constant 38 : index
    %50 = vector.load %arg1[%c0_36, %c0_37, %c38] : memref<1x4x326xf32, #tpu.memory_space<vmem>>, vector<1x4x288xf32>
    %51 = vector.shape_cast %50 : vector<1x4x288xf32> to vector<4x288xf32>
    %52 = arith.truncf %51 : vector<4x288xf32> to vector<4x288xbf16>
    %c32 = arith.constant 32 : index
    %c0_38 = arith.constant 0 : index
    %53 = vector.load %arg2[%c32, %c0_38] : memref<36x4xbf16, #tpu.memory_space<vmem>>, vector<4x4xbf16>
    %cst_39 = arith.constant dense<0.000000e+00> : vector<4x288xf32>
    %54 = tpu.matmul %53, %52, %cst_39 {dimension_numbers = #tpu.dot_dimension_numbers<[1], [0], [0], [1], [0, 0, 1, 1], [], []>} : vector<4x4xbf16>, vector<4x288xbf16>, vector<4x288xf32> -> vector<4x288xf32>
    %55 = arith.addf %49, %54 : vector<4x288xf32>
    %56 = vector.broadcast %0 : vector<1x288xf32> to vector<4x288xf32>
    %57 = arith.mulf %55, %56 : vector<4x288xf32>
    %cst_40 = arith.constant dense<0.000000e+00> : vector<4xf32>
    %58 = vector.multi_reduction <add>, %57, %cst_40 [1] : vector<4x288xf32> to vector<4xf32>
    %59 = vector.shape_cast %58 : vector<4xf32> to vector<4x1xf32>
    %60 = arith.mulf %55, %55 : vector<4x288xf32>
    %61 = vector.broadcast %0 : vector<1x288xf32> to vector<4x288xf32>
    %62 = arith.mulf %60, %61 : vector<4x288xf32>
    %cst_41 = arith.constant dense<0.000000e+00> : vector<4xf32>
    %63 = vector.multi_reduction <add>, %62, %cst_41 [1] : vector<4x288xf32> to vector<4xf32>
    %64 = vector.shape_cast %63 : vector<4xf32> to vector<4x1xf32>
    %cst_42 = arith.constant 3.906250e-03 : f32
    %65 = vector.broadcast %cst_42 : f32 to vector<4x1xf32>
    %66 = arith.mulf %59, %65 : vector<4x1xf32>
    %cst_43 = arith.constant 3.906250e-03 : f32
    %67 = vector.broadcast %cst_43 : f32 to vector<4x1xf32>
    %68 = arith.mulf %64, %67 : vector<4x1xf32>
    %69 = arith.mulf %66, %66 : vector<4x1xf32>
    %70 = arith.subf %68, %69 : vector<4x1xf32>
    %cst_44 = arith.constant 0.000000e+00 : f32
    %71 = vector.broadcast %cst_44 : f32 to vector<4x1xf32>
    %72 = arith.maximumf %70, %71 : vector<4x1xf32>
    %cst_45 = arith.constant 9.99999974E-6 : f32
    %73 = vector.broadcast %cst_45 : f32 to vector<4x1xf32>
    %74 = arith.addf %72, %73 : vector<4x1xf32>
    %75 = math.rsqrt %74 : vector<4x1xf32>
    %76 = vector.broadcast %66 : vector<4x1xf32> to vector<4x288xf32>
    %77 = arith.subf %55, %76 : vector<4x288xf32>
    %78 = vector.broadcast %75 : vector<4x1xf32> to vector<4x288xf32>
    %79 = arith.mulf %77, %78 : vector<4x288xf32>
    %cst_46 = arith.constant 0.000000e+00 : f32
    %80 = vector.broadcast %cst_46 : f32 to vector<4x288xf32>
    %81 = arith.maximumf %79, %80 : vector<4x288xf32>
    %cst_47 = arith.constant 0.000000e+00 : f32
    %82 = vector.broadcast %cst_47 : f32 to vector<4x326xf32>
    %c0_48 = arith.constant 0 : index
    %c0_49 = arith.constant 0 : index
    %83 = vector.load %arg6[%c0_48, %c0_49] : memref<4x326xf32, #tpu.memory_space<vmem>>, vector<4x326xf32>
    tpu.vector_store %arg6[%c0_48, %c0_49], %82 {strides = array<i32>} : memref<4x326xf32, #tpu.memory_space<vmem>>, vector<4x326xf32>,
    %c0_50 = arith.constant 0 : index
    %c19_51 = arith.constant 19 : index
    %84 = vector.load %arg6[%c0_50, %c19_51] : memref<4x326xf32, #tpu.memory_space<vmem>>, vector<4x288xf32>
    tpu.vector_store %arg6[%c0_50, %c19_51], %81 {strides = array<i32>} : memref<4x326xf32, #tpu.memory_space<vmem>>, vector<4x288xf32>,
    %85 = vector.extract_strided_slice %81 {offsets = [0, 18], sizes = [4, 16], strides = [1, 1]} : vector<4x288xf32> to vector<4x16xf32>
    %c0_52 = arith.constant 0 : index
    %c1_53 = arith.constant 1 : index
    %86 = vector.load %arg6[%c0_52, %c1_53] : memref<4x326xf32, #tpu.memory_space<vmem>>, vector<4x16xf32>
    tpu.vector_store %arg6[%c0_52, %c1_53], %85 {strides = array<i32>} : memref<4x326xf32, #tpu.memory_space<vmem>>, vector<4x16xf32>,
    %87 = vector.extract_strided_slice %81 {offsets = [0, 252], sizes = [4, 16], strides = [1, 1]} : vector<4x288xf32> to vector<4x16xf32>
    %c0_54 = arith.constant 0 : index
    %c307 = arith.constant 307 : index
    %88 = vector.load %arg6[%c0_54, %c307] : memref<4x326xf32, #tpu.memory_space<vmem>>, vector<4x16xf32>
    tpu.vector_store %arg6[%c0_54, %c307], %87 {strides = array<i32>} : memref<4x326xf32, #tpu.memory_space<vmem>>, vector<4x16xf32>,
    %89 = vector.extract_strided_slice %81 {offsets = [0, 1], sizes = [4, 1], strides = [1, 1]} : vector<4x288xf32> to vector<4x1xf32>
    %c0_55 = arith.constant 0 : index
    %c18_56 = arith.constant 18 : index
    %90 = vector.load %arg6[%c0_55, %c18_56] : memref<4x326xf32, #tpu.memory_space<vmem>>, vector<4x1xf32>
    tpu.vector_store %arg6[%c0_55, %c18_56], %89 {strides = array<i32>} : memref<4x326xf32, #tpu.memory_space<vmem>>, vector<4x1xf32>,
    %91 = vector.extract_strided_slice %81 {offsets = [0, 14], sizes = [4, 1], strides = [1, 1]} : vector<4x288xf32> to vector<4x1xf32>
    %c0_57 = arith.constant 0 : index
    %c35 = arith.constant 35 : index
    %92 = vector.load %arg6[%c0_57, %c35] : memref<4x326xf32, #tpu.memory_space<vmem>>, vector<4x1xf32>
    tpu.vector_store %arg6[%c0_57, %c35], %91 {strides = array<i32>} : memref<4x326xf32, #tpu.memory_space<vmem>>, vector<4x1xf32>,
    %93 = vector.extract_strided_slice %81 {offsets = [0, 19], sizes = [4, 1], strides = [1, 1]} : vector<4x288xf32> to vector<4x1xf32>
    %c0_58 = arith.constant 0 : index
    %c36_59 = arith.constant 36 : index
    %94 = vector.load %arg6[%c0_58, %c36_59] : memref<4x326xf32, #tpu.memory_space<vmem>>, vector<4x1xf32>
    tpu.vector_store %arg6[%c0_58, %c36_59], %93 {strides = array<i32>} : memref<4x326xf32, #tpu.memory_space<vmem>>, vector<4x1xf32>,
    %95 = vector.extract_strided_slice %81 {offsets = [0, 32], sizes = [4, 1], strides = [1, 1]} : vector<4x288xf32> to vector<4x1xf32>
    %c0_60 = arith.constant 0 : index
    %c53 = arith.constant 53 : index
    %96 = vector.load %arg6[%c0_60, %c53] : memref<4x326xf32, #tpu.memory_space<vmem>>, vector<4x1xf32>
    tpu.vector_store %arg6[%c0_60, %c53], %95 {strides = array<i32>} : memref<4x326xf32, #tpu.memory_space<vmem>>, vector<4x1xf32>,
    %97 = vector.extract_strided_slice %81 {offsets = [0, 37], sizes = [4, 1], strides = [1, 1]} : vector<4x288xf32> to vector<4x1xf32>
    %c0_61 = arith.constant 0 : index
    %c54 = arith.constant 54 : index
    %98 = vector.load %arg6[%c0_61, %c54] : memref<4x326xf32, #tpu.memory_space<vmem>>, vector<4x1xf32>
    tpu.vector_store %arg6[%c0_61, %c54], %97 {strides = array<i32>} : memref<4x326xf32, #tpu.memory_space<vmem>>, vector<4x1xf32>,
    %99 = vector.extract_strided_slice %81 {offsets = [0, 50], sizes = [4, 1], strides = [1, 1]} : vector<4x288xf32> to vector<4x1xf32>
    %c0_62 = arith.constant 0 : index
    %c71 = arith.constant 71 : index
    %100 = vector.load %arg6[%c0_62, %c71] : memref<4x326xf32, #tpu.memory_space<vmem>>, vector<4x1xf32>
    tpu.vector_store %arg6[%c0_62, %c71], %99 {strides = array<i32>} : memref<4x326xf32, #tpu.memory_space<vmem>>, vector<4x1xf32>,
    %101 = vector.extract_strided_slice %81 {offsets = [0, 55], sizes = [4, 1], strides = [1, 1]} : vector<4x288xf32> to vector<4x1xf32>
    %c0_63 = arith.constant 0 : index
    %c72 = arith.constant 72 : index
    %102 = vector.load %arg6[%c0_63, %c72] : memref<4x326xf32, #tpu.memory_space<vmem>>, vector<4x1xf32>
    tpu.vector_store %arg6[%c0_63, %c72], %101 {strides = array<i32>} : memref<4x326xf32, #tpu.memory_space<vmem>>, vector<4x1xf32>,
    %103 = vector.extract_strided_slice %81 {offsets = [0, 68], sizes = [4, 1], strides = [1, 1]} : vector<4x288xf32> to vector<4x1xf32>
    %c0_64 = arith.constant 0 : index
    %c89 = arith.constant 89 : index
    %104 = vector.load %arg6[%c0_64, %c89] : memref<4x326xf32, #tpu.memory_space<vmem>>, vector<4x1xf32>
    tpu.vector_store %arg6[%c0_64, %c89], %103 {strides = array<i32>} : memref<4x326xf32, #tpu.memory_space<vmem>>, vector<4x1xf32>,
    %105 = vector.extract_strided_slice %81 {offsets = [0, 73], sizes = [4, 1], strides = [1, 1]} : vector<4x288xf32> to vector<4x1xf32>
    %c0_65 = arith.constant 0 : index
    %c90 = arith.constant 90 : index
    %106 = vector.load %arg6[%c0_65, %c90] : memref<4x326xf32, #tpu.memory_space<vmem>>, vector<4x1xf32>
    tpu.vector_store %arg6[%c0_65, %c90], %105 {strides = array<i32>} : memref<4x326xf32, #tpu.memory_space<vmem>>, vector<4x1xf32>,
    %107 = vector.extract_strided_slice %81 {offsets = [0, 86], sizes = [4, 1], strides = [1, 1]} : vector<4x288xf32> to vector<4x1xf32>
    %c0_66 = arith.constant 0 : index
    %c107 = arith.constant 107 : index
    %108 = vector.load %arg6[%c0_66, %c107] : memref<4x326xf32, #tpu.memory_space<vmem>>, vector<4x1xf32>
    tpu.vector_store %arg6[%c0_66, %c107], %107 {strides = array<i32>} : memref<4x326xf32, #tpu.memory_space<vmem>>, vector<4x1xf32>,
    %109 = vector.extract_strided_slice %81 {offsets = [0, 91], sizes = [4, 1], strides = [1, 1]} : vector<4x288xf32> to vector<4x1xf32>
    %c0_67 = arith.constant 0 : index
    %c108 = arith.constant 108 : index
    %110 = vector.load %arg6[%c0_67, %c108] : memref<4x326xf32, #tpu.memory_space<vmem>>, vector<4x1xf32>
    tpu.vector_store %arg6[%c0_67, %c108], %109 {strides = array<i32>} : memref<4x326xf32, #tpu.memory_space<vmem>>, vector<4x1xf32>,
    %111 = vector.extract_strided_slice %81 {offsets = [0, 104], sizes = [4, 1], strides = [1, 1]} : vector<4x288xf32> to vector<4x1xf32>
    %c0_68 = arith.constant 0 : index
    %c125 = arith.constant 125 : index
    %112 = vector.load %arg6[%c0_68, %c125] : memref<4x326xf32, #tpu.memory_space<vmem>>, vector<4x1xf32>
    tpu.vector_store %arg6[%c0_68, %c125], %111 {strides = array<i32>} : memref<4x326xf32, #tpu.memory_space<vmem>>, vector<4x1xf32>,
    %113 = vector.extract_strided_slice %81 {offsets = [0, 109], sizes = [4, 1], strides = [1, 1]} : vector<4x288xf32> to vector<4x1xf32>
    %c0_69 = arith.constant 0 : index
    %c126 = arith.constant 126 : index
    %114 = vector.load %arg6[%c0_69, %c126] : memref<4x326xf32, #tpu.memory_space<vmem>>, vector<4x1xf32>
    tpu.vector_store %arg6[%c0_69, %c126], %113 {strides = array<i32>} : memref<4x326xf32, #tpu.memory_space<vmem>>, vector<4x1xf32>,
    %115 = vector.extract_strided_slice %81 {offsets = [0, 122], sizes = [4, 1], strides = [1, 1]} : vector<4x288xf32> to vector<4x1xf32>
    %c0_70 = arith.constant 0 : index
    %c143 = arith.constant 143 : index
    %116 = vector.load %arg6[%c0_70, %c143] : memref<4x326xf32, #tpu.memory_space<vmem>>, vector<4x1xf32>
    tpu.vector_store %arg6[%c0_70, %c143], %115 {strides = array<i32>} : memref<4x326xf32, #tpu.memory_space<vmem>>, vector<4x1xf32>,
    %117 = vector.extract_strided_slice %81 {offsets = [0, 127], sizes = [4, 1], strides = [1, 1]} : vector<4x288xf32> to vector<4x1xf32>
    %c0_71 = arith.constant 0 : index
    %c144 = arith.constant 144 : index
    %118 = vector.load %arg6[%c0_71, %c144] : memref<4x326xf32, #tpu.memory_space<vmem>>, vector<4x1xf32>
    tpu.vector_store %arg6[%c0_71, %c144], %117 {strides = array<i32>} : memref<4x326xf32, #tpu.memory_space<vmem>>, vector<4x1xf32>,
    %119 = vector.extract_strided_slice %81 {offsets = [0, 140], sizes = [4, 1], strides = [1, 1]} : vector<4x288xf32> to vector<4x1xf32>
    %c0_72 = arith.constant 0 : index
    %c161 = arith.constant 161 : index
    %120 = vector.load %arg6[%c0_72, %c161] : memref<4x326xf32, #tpu.memory_space<vmem>>, vector<4x1xf32>
    tpu.vector_store %arg6[%c0_72, %c161], %119 {strides = array<i32>} : memref<4x326xf32, #tpu.memory_space<vmem>>, vector<4x1xf32>,
    %121 = vector.extract_strided_slice %81 {offsets = [0, 145], sizes = [4, 1], strides = [1, 1]} : vector<4x288xf32> to vector<4x1xf32>
    %c0_73 = arith.constant 0 : index
    %c162 = arith.constant 162 : index
    %122 = vector.load %arg6[%c0_73, %c162] : memref<4x326xf32, #tpu.memory_space<vmem>>, vector<4x1xf32>
    tpu.vector_store %arg6[%c0_73, %c162], %121 {strides = array<i32>} : memref<4x326xf32, #tpu.memory_space<vmem>>, vector<4x1xf32>,
    %123 = vector.extract_strided_slice %81 {offsets = [0, 158], sizes = [4, 1], strides = [1, 1]} : vector<4x288xf32> to vector<4x1xf32>
    %c0_74 = arith.constant 0 : index
    %c179 = arith.constant 179 : index
    %124 = vector.load %arg6[%c0_74, %c179] : memref<4x326xf32, #tpu.memory_space<vmem>>, vector<4x1xf32>
    tpu.vector_store %arg6[%c0_74, %c179], %123 {strides = array<i32>} : memref<4x326xf32, #tpu.memory_space<vmem>>, vector<4x1xf32>,
    %125 = vector.extract_strided_slice %81 {offsets = [0, 163], sizes = [4, 1], strides = [1, 1]} : vector<4x288xf32> to vector<4x1xf32>
    %c0_75 = arith.constant 0 : index
    %c180 = arith.constant 180 : index
    %126 = vector.load %arg6[%c0_75, %c180] : memref<4x326xf32, #tpu.memory_space<vmem>>, vector<4x1xf32>
    tpu.vector_store %arg6[%c0_75, %c180], %125 {strides = array<i32>} : memref<4x326xf32, #tpu.memory_space<vmem>>, vector<4x1xf32>,
    %127 = vector.extract_strided_slice %81 {offsets = [0, 176], sizes = [4, 1], strides = [1, 1]} : vector<4x288xf32> to vector<4x1xf32>
    %c0_76 = arith.constant 0 : index
    %c197 = arith.constant 197 : index
    %128 = vector.load %arg6[%c0_76, %c197] : memref<4x326xf32, #tpu.memory_space<vmem>>, vector<4x1xf32>
    tpu.vector_store %arg6[%c0_76, %c197], %127 {strides = array<i32>} : memref<4x326xf32, #tpu.memory_space<vmem>>, vector<4x1xf32>,
    %129 = vector.extract_strided_slice %81 {offsets = [0, 181], sizes = [4, 1], strides = [1, 1]} : vector<4x288xf32> to vector<4x1xf32>
    %c0_77 = arith.constant 0 : index
    %c198 = arith.constant 198 : index
    %130 = vector.load %arg6[%c0_77, %c198] : memref<4x326xf32, #tpu.memory_space<vmem>>, vector<4x1xf32>
    tpu.vector_store %arg6[%c0_77, %c198], %129 {strides = array<i32>} : memref<4x326xf32, #tpu.memory_space<vmem>>, vector<4x1xf32>,
    %131 = vector.extract_strided_slice %81 {offsets = [0, 194], sizes = [4, 1], strides = [1, 1]} : vector<4x288xf32> to vector<4x1xf32>
    %c0_78 = arith.constant 0 : index
    %c215 = arith.constant 215 : index
    %132 = vector.load %arg6[%c0_78, %c215] : memref<4x326xf32, #tpu.memory_space<vmem>>, vector<4x1xf32>
    tpu.vector_store %arg6[%c0_78, %c215], %131 {strides = array<i32>} : memref<4x326xf32, #tpu.memory_space<vmem>>, vector<4x1xf32>,
    %133 = vector.extract_strided_slice %81 {offsets = [0, 199], sizes = [4, 1], strides = [1, 1]} : vector<4x288xf32> to vector<4x1xf32>
    %c0_79 = arith.constant 0 : index
    %c216 = arith.constant 216 : index
    %134 = vector.load %arg6[%c0_79, %c216] : memref<4x326xf32, #tpu.memory_space<vmem>>, vector<4x1xf32>
    tpu.vector_store %arg6[%c0_79, %c216], %133 {strides = array<i32>} : memref<4x326xf32, #tpu.memory_space<vmem>>, vector<4x1xf32>,
    %135 = vector.extract_strided_slice %81 {offsets = [0, 212], sizes = [4, 1], strides = [1, 1]} : vector<4x288xf32> to vector<4x1xf32>
    %c0_80 = arith.constant 0 : index
    %c233 = arith.constant 233 : index
    %136 = vector.load %arg6[%c0_80, %c233] : memref<4x326xf32, #tpu.memory_space<vmem>>, vector<4x1xf32>
    tpu.vector_store %arg6[%c0_80, %c233], %135 {strides = array<i32>} : memref<4x326xf32, #tpu.memory_space<vmem>>, vector<4x1xf32>,
    %137 = vector.extract_strided_slice %81 {offsets = [0, 217], sizes = [4, 1], strides = [1, 1]} : vector<4x288xf32> to vector<4x1xf32>
    %c0_81 = arith.constant 0 : index
    %c234 = arith.constant 234 : index
    %138 = vector.load %arg6[%c0_81, %c234] : memref<4x326xf32, #tpu.memory_space<vmem>>, vector<4x1xf32>
    tpu.vector_store %arg6[%c0_81, %c234], %137 {strides = array<i32>} : memref<4x326xf32, #tpu.memory_space<vmem>>, vector<4x1xf32>,
    %139 = vector.extract_strided_slice %81 {offsets = [0, 230], sizes = [4, 1], strides = [1, 1]} : vector<4x288xf32> to vector<4x1xf32>
    %c0_82 = arith.constant 0 : index
    %c251 = arith.constant 251 : index
    %140 = vector.load %arg6[%c0_82, %c251] : memref<4x326xf32, #tpu.memory_space<vmem>>, vector<4x1xf32>
    tpu.vector_store %arg6[%c0_82, %c251], %139 {strides = array<i32>} : memref<4x326xf32, #tpu.memory_space<vmem>>, vector<4x1xf32>,
    %141 = vector.extract_strided_slice %81 {offsets = [0, 235], sizes = [4, 1], strides = [1, 1]} : vector<4x288xf32> to vector<4x1xf32>
    %c0_83 = arith.constant 0 : index
    %c252 = arith.constant 252 : index
    %142 = vector.load %arg6[%c0_83, %c252] : memref<4x326xf32, #tpu.memory_space<vmem>>, vector<4x1xf32>
    tpu.vector_store %arg6[%c0_83, %c252], %141 {strides = array<i32>} : memref<4x326xf32, #tpu.memory_space<vmem>>, vector<4x1xf32>,
    %143 = vector.extract_strided_slice %81 {offsets = [0, 248], sizes = [4, 1], strides = [1, 1]} : vector<4x288xf32> to vector<4x1xf32>
    %c0_84 = arith.constant 0 : index
    %c269 = arith.constant 269 : index
    %144 = vector.load %arg6[%c0_84, %c269] : memref<4x326xf32, #tpu.memory_space<vmem>>, vector<4x1xf32>
    tpu.vector_store %arg6[%c0_84, %c269], %143 {strides = array<i32>} : memref<4x326xf32, #tpu.memory_space<vmem>>, vector<4x1xf32>,
    %145 = vector.extract_strided_slice %81 {offsets = [0, 253], sizes = [4, 1], strides = [1, 1]} : vector<4x288xf32> to vector<4x1xf32>
    %c0_85 = arith.constant 0 : index
    %c270 = arith.constant 270 : index
    %146 = vector.load %arg6[%c0_85, %c270] : memref<4x326xf32, #tpu.memory_space<vmem>>, vector<4x1xf32>
    tpu.vector_store %arg6[%c0_85, %c270], %145 {strides = array<i32>} : memref<4x326xf32, #tpu.memory_space<vmem>>, vector<4x1xf32>,
    %147 = vector.extract_strided_slice %81 {offsets = [0, 266], sizes = [4, 1], strides = [1, 1]} : vector<4x288xf32> to vector<4x1xf32>
    %c0_86 = arith.constant 0 : index
    %c287 = arith.constant 287 : index
    %148 = vector.load %arg6[%c0_86, %c287] : memref<4x326xf32, #tpu.memory_space<vmem>>, vector<4x1xf32>
    tpu.vector_store %arg6[%c0_86, %c287], %147 {strides = array<i32>} : memref<4x326xf32, #tpu.memory_space<vmem>>, vector<4x1xf32>,
    %149 = vector.extract_strided_slice %81 {offsets = [0, 271], sizes = [4, 1], strides = [1, 1]} : vector<4x288xf32> to vector<4x1xf32>
    %c0_87 = arith.constant 0 : index
    %c288 = arith.constant 288 : index
    %150 = vector.load %arg6[%c0_87, %c288] : memref<4x326xf32, #tpu.memory_space<vmem>>, vector<4x1xf32>
    tpu.vector_store %arg6[%c0_87, %c288], %149 {strides = array<i32>} : memref<4x326xf32, #tpu.memory_space<vmem>>, vector<4x1xf32>,
    %151 = vector.extract_strided_slice %81 {offsets = [0, 284], sizes = [4, 1], strides = [1, 1]} : vector<4x288xf32> to vector<4x1xf32>
    %c0_88 = arith.constant 0 : index
    %c305 = arith.constant 305 : index
    %152 = vector.load %arg6[%c0_88, %c305] : memref<4x326xf32, #tpu.memory_space<vmem>>, vector<4x1xf32>
    tpu.vector_store %arg6[%c0_88, %c305], %151 {strides = array<i32>} : memref<4x326xf32, #tpu.memory_space<vmem>>, vector<4x1xf32>,
    %153 = vector.extract_strided_slice %81 {offsets = [0, 19], sizes = [4, 1], strides = [1, 1]} : vector<4x288xf32> to vector<4x1xf32>
    %c0_89 = arith.constant 0 : index
    %c0_90 = arith.constant 0 : index
    %154 = vector.load %arg6[%c0_89, %c0_90] : memref<4x326xf32, #tpu.memory_space<vmem>>, vector<4x1xf32>
    tpu.vector_store %arg6[%c0_89, %c0_90], %153 {strides = array<i32>} : memref<4x326xf32, #tpu.memory_space<vmem>>, vector<4x1xf32>,
    %155 = vector.extract_strided_slice %81 {offsets = [0, 32], sizes = [4, 1], strides = [1, 1]} : vector<4x288xf32> to vector<4x1xf32>
    %c0_91 = arith.constant 0 : index
    %c17 = arith.constant 17 : index
    %156 = vector.load %arg6[%c0_91, %c17] : memref<4x326xf32, #tpu.memory_space<vmem>>, vector<4x1xf32>
    tpu.vector_store %arg6[%c0_91, %c17], %155 {strides = array<i32>} : memref<4x326xf32, #tpu.memory_space<vmem>>, vector<4x1xf32>,
    %157 = vector.extract_strided_slice %81 {offsets = [0, 253], sizes = [4, 1], strides = [1, 1]} : vector<4x288xf32> to vector<4x1xf32>
    %c0_92 = arith.constant 0 : index
    %c306 = arith.constant 306 : index
    %158 = vector.load %arg6[%c0_92, %c306] : memref<4x326xf32, #tpu.memory_space<vmem>>, vector<4x1xf32>
    tpu.vector_store %arg6[%c0_92, %c306], %157 {strides = array<i32>} : memref<4x326xf32, #tpu.memory_space<vmem>>, vector<4x1xf32>,
    %159 = vector.extract_strided_slice %81 {offsets = [0, 266], sizes = [4, 1], strides = [1, 1]} : vector<4x288xf32> to vector<4x1xf32>
    %c0_93 = arith.constant 0 : index
    %c323 = arith.constant 323 : index
    %160 = vector.load %arg6[%c0_93, %c323] : memref<4x326xf32, #tpu.memory_space<vmem>>, vector<4x1xf32>
    tpu.vector_store %arg6[%c0_93, %c323], %159 {strides = array<i32>} : memref<4x326xf32, #tpu.memory_space<vmem>>, vector<4x1xf32>,
    %cst_94 = arith.constant 0.000000e+00 : f32
    %161 = vector.broadcast %cst_94 : f32 to vector<4x288xf32>
    %c0_95 = arith.constant 0 : index
    %c0_96 = arith.constant 0 : index
    %162 = vector.load %arg6[%c0_95, %c0_96] : memref<4x326xf32, #tpu.memory_space<vmem>>, vector<4x288xf32>
    %163 = arith.truncf %162 : vector<4x288xf32> to vector<4x288xbf16>
    %c0_97 = arith.constant 0 : index
    %c0_98 = arith.constant 0 : index
    %164 = vector.load %arg3[%c0_97, %c0_98] : memref<36x4xbf16, #tpu.memory_space<vmem>>, vector<4x4xbf16>
    %cst_99 = arith.constant dense<0.000000e+00> : vector<4x288xf32>
    %165 = tpu.matmul %164, %163, %cst_99 {dimension_numbers = #tpu.dot_dimension_numbers<[1], [0], [0], [1], [0, 0, 1, 1], [], []>} : vector<4x4xbf16>, vector<4x288xbf16>, vector<4x288xf32> -> vector<4x288xf32>
    %166 = arith.addf %161, %165 : vector<4x288xf32>
    %c0_100 = arith.constant 0 : index
    %c1_101 = arith.constant 1 : index
    %167 = vector.load %arg6[%c0_100, %c1_101] : memref<4x326xf32, #tpu.memory_space<vmem>>, vector<4x288xf32>
    %168 = arith.truncf %167 : vector<4x288xf32> to vector<4x288xbf16>
    %c4_102 = arith.constant 4 : index
    %c0_103 = arith.constant 0 : index
    %169 = vector.load %arg3[%c4_102, %c0_103] : memref<36x4xbf16, #tpu.memory_space<vmem>>, vector<4x4xbf16>
    %cst_104 = arith.constant dense<0.000000e+00> : vector<4x288xf32>
    %170 = tpu.matmul %169, %168, %cst_104 {dimension_numbers = #tpu.dot_dimension_numbers<[1], [0], [0], [1], [0, 0, 1, 1], [], []>} : vector<4x4xbf16>, vector<4x288xbf16>, vector<4x288xf32> -> vector<4x288xf32>
    %171 = arith.addf %166, %170 : vector<4x288xf32>
    %c0_105 = arith.constant 0 : index
    %c2_106 = arith.constant 2 : index
    %172 = vector.load %arg6[%c0_105, %c2_106] : memref<4x326xf32, #tpu.memory_space<vmem>>, vector<4x288xf32>
    %173 = arith.truncf %172 : vector<4x288xf32> to vector<4x288xbf16>
    %c8_107 = arith.constant 8 : index
    %c0_108 = arith.constant 0 : index
    %174 = vector.load %arg3[%c8_107, %c0_108] : memref<36x4xbf16, #tpu.memory_space<vmem>>, vector<4x4xbf16>
    %cst_109 = arith.constant dense<0.000000e+00> : vector<4x288xf32>
    %175 = tpu.matmul %174, %173, %cst_109 {dimension_numbers = #tpu.dot_dimension_numbers<[1], [0], [0], [1], [0, 0, 1, 1], [], []>} : vector<4x4xbf16>, vector<4x288xbf16>, vector<4x288xf32> -> vector<4x288xf32>
    %176 = arith.addf %171, %175 : vector<4x288xf32>
    %c0_110 = arith.constant 0 : index
    %c18_111 = arith.constant 18 : index
    %177 = vector.load %arg6[%c0_110, %c18_111] : memref<4x326xf32, #tpu.memory_space<vmem>>, vector<4x288xf32>
    %178 = arith.truncf %177 : vector<4x288xf32> to vector<4x288xbf16>
    %c12_112 = arith.constant 12 : index
    %c0_113 = arith.constant 0 : index
    %179 = vector.load %arg3[%c12_112, %c0_113] : memref<36x4xbf16, #tpu.memory_space<vmem>>, vector<4x4xbf16>
    %cst_114 = arith.constant dense<0.000000e+00> : vector<4x288xf32>
    %180 = tpu.matmul %179, %178, %cst_114 {dimension_numbers = #tpu.dot_dimension_numbers<[1], [0], [0], [1], [0, 0, 1, 1], [], []>} : vector<4x4xbf16>, vector<4x288xbf16>, vector<4x288xf32> -> vector<4x288xf32>
    %181 = arith.addf %176, %180 : vector<4x288xf32>
    %c0_115 = arith.constant 0 : index
    %c19_116 = arith.constant 19 : index
    %182 = vector.load %arg6[%c0_115, %c19_116] : memref<4x326xf32, #tpu.memory_space<vmem>>, vector<4x288xf32>
    %183 = arith.truncf %182 : vector<4x288xf32> to vector<4x288xbf16>
    %c16_117 = arith.constant 16 : index
    %c0_118 = arith.constant 0 : index
    %184 = vector.load %arg3[%c16_117, %c0_118] : memref<36x4xbf16, #tpu.memory_space<vmem>>, vector<4x4xbf16>
    %cst_119 = arith.constant dense<0.000000e+00> : vector<4x288xf32>
    %185 = tpu.matmul %184, %183, %cst_119 {dimension_numbers = #tpu.dot_dimension_numbers<[1], [0], [0], [1], [0, 0, 1, 1], [], []>} : vector<4x4xbf16>, vector<4x288xbf16>, vector<4x288xf32> -> vector<4x288xf32>
    %186 = arith.addf %181, %185 : vector<4x288xf32>
    %c0_120 = arith.constant 0 : index
    %c20_121 = arith.constant 20 : index
    %187 = vector.load %arg6[%c0_120, %c20_121] : memref<4x326xf32, #tpu.memory_space<vmem>>, vector<4x288xf32>
    %188 = arith.truncf %187 : vector<4x288xf32> to vector<4x288xbf16>
    %c20_122 = arith.constant 20 : index
    %c0_123 = arith.constant 0 : index
    %189 = vector.load %arg3[%c20_122, %c0_123] : memref<36x4xbf16, #tpu.memory_space<vmem>>, vector<4x4xbf16>
    %cst_124 = arith.constant dense<0.000000e+00> : vector<4x288xf32>
    %190 = tpu.matmul %189, %188, %cst_124 {dimension_numbers = #tpu.dot_dimension_numbers<[1], [0], [0], [1], [0, 0, 1, 1], [], []>} : vector<4x4xbf16>, vector<4x288xbf16>, vector<4x288xf32> -> vector<4x288xf32>
    %191 = arith.addf %186, %190 : vector<4x288xf32>
    %c0_125 = arith.constant 0 : index
    %c36_126 = arith.constant 36 : index
    %192 = vector.load %arg6[%c0_125, %c36_126] : memref<4x326xf32, #tpu.memory_space<vmem>>, vector<4x288xf32>
    %193 = arith.truncf %192 : vector<4x288xf32> to vector<4x288xbf16>
    %c24_127 = arith.constant 24 : index
    %c0_128 = arith.constant 0 : index
    %194 = vector.load %arg3[%c24_127, %c0_128] : memref<36x4xbf16, #tpu.memory_space<vmem>>, vector<4x4xbf16>
    %cst_129 = arith.constant dense<0.000000e+00> : vector<4x288xf32>
    %195 = tpu.matmul %194, %193, %cst_129 {dimension_numbers = #tpu.dot_dimension_numbers<[1], [0], [0], [1], [0, 0, 1, 1], [], []>} : vector<4x4xbf16>, vector<4x288xbf16>, vector<4x288xf32> -> vector<4x288xf32>
    %196 = arith.addf %191, %195 : vector<4x288xf32>
    %c0_130 = arith.constant 0 : index
    %c37_131 = arith.constant 37 : index
    %197 = vector.load %arg6[%c0_130, %c37_131] : memref<4x326xf32, #tpu.memory_space<vmem>>, vector<4x288xf32>
    %198 = arith.truncf %197 : vector<4x288xf32> to vector<4x288xbf16>
    %c28_132 = arith.constant 28 : index
    %c0_133 = arith.constant 0 : index
    %199 = vector.load %arg3[%c28_132, %c0_133] : memref<36x4xbf16, #tpu.memory_space<vmem>>, vector<4x4xbf16>
    %cst_134 = arith.constant dense<0.000000e+00> : vector<4x288xf32>
    %200 = tpu.matmul %199, %198, %cst_134 {dimension_numbers = #tpu.dot_dimension_numbers<[1], [0], [0], [1], [0, 0, 1, 1], [], []>} : vector<4x4xbf16>, vector<4x288xbf16>, vector<4x288xf32> -> vector<4x288xf32>
    %201 = arith.addf %196, %200 : vector<4x288xf32>
    %c0_135 = arith.constant 0 : index
    %c38_136 = arith.constant 38 : index
    %202 = vector.load %arg6[%c0_135, %c38_136] : memref<4x326xf32, #tpu.memory_space<vmem>>, vector<4x288xf32>
    %203 = arith.truncf %202 : vector<4x288xf32> to vector<4x288xbf16>
    %c32_137 = arith.constant 32 : index
    %c0_138 = arith.constant 0 : index
    %204 = vector.load %arg3[%c32_137, %c0_138] : memref<36x4xbf16, #tpu.memory_space<vmem>>, vector<4x4xbf16>
    %cst_139 = arith.constant dense<0.000000e+00> : vector<4x288xf32>
    %205 = tpu.matmul %204, %203, %cst_139 {dimension_numbers = #tpu.dot_dimension_numbers<[1], [0], [0], [1], [0, 0, 1, 1], [], []>} : vector<4x4xbf16>, vector<4x288xbf16>, vector<4x288xf32> -> vector<4x288xf32>
    %206 = arith.addf %201, %205 : vector<4x288xf32>
    %207 = vector.broadcast %0 : vector<1x288xf32> to vector<4x288xf32>
    %208 = arith.mulf %206, %207 : vector<4x288xf32>
    %cst_140 = arith.constant dense<0.000000e+00> : vector<4xf32>
    %209 = vector.multi_reduction <add>, %208, %cst_140 [1] : vector<4x288xf32> to vector<4xf32>
    %210 = vector.shape_cast %209 : vector<4xf32> to vector<4x1xf32>
    %211 = arith.mulf %206, %206 : vector<4x288xf32>
    %212 = vector.broadcast %0 : vector<1x288xf32> to vector<4x288xf32>
    %213 = arith.mulf %211, %212 : vector<4x288xf32>
    %cst_141 = arith.constant dense<0.000000e+00> : vector<4xf32>
    %214 = vector.multi_reduction <add>, %213, %cst_141 [1] : vector<4x288xf32> to vector<4xf32>
    %215 = vector.shape_cast %214 : vector<4xf32> to vector<4x1xf32>
    %cst_142 = arith.constant 3.906250e-03 : f32
    %216 = vector.broadcast %cst_142 : f32 to vector<4x1xf32>
    %217 = arith.mulf %210, %216 : vector<4x1xf32>
    %cst_143 = arith.constant 3.906250e-03 : f32
    %218 = vector.broadcast %cst_143 : f32 to vector<4x1xf32>
    %219 = arith.mulf %215, %218 : vector<4x1xf32>
    %220 = arith.mulf %217, %217 : vector<4x1xf32>
    %221 = arith.subf %219, %220 : vector<4x1xf32>
    %cst_144 = arith.constant 0.000000e+00 : f32
    %222 = vector.broadcast %cst_144 : f32 to vector<4x1xf32>
    %223 = arith.maximumf %221, %222 : vector<4x1xf32>
    %cst_145 = arith.constant 9.99999974E-6 : f32
    %224 = vector.broadcast %cst_145 : f32 to vector<4x1xf32>
    %225 = arith.addf %223, %224 : vector<4x1xf32>
    %226 = math.rsqrt %225 : vector<4x1xf32>
    %227 = vector.broadcast %217 : vector<4x1xf32> to vector<4x288xf32>
    %228 = arith.subf %206, %227 : vector<4x288xf32>
    %229 = vector.broadcast %226 : vector<4x1xf32> to vector<4x288xf32>
    %230 = arith.mulf %228, %229 : vector<4x288xf32>
    %cst_146 = arith.constant 0.000000e+00 : f32
    %231 = vector.broadcast %cst_146 : f32 to vector<4x288xf32>
    %232 = arith.maximumf %230, %231 : vector<4x288xf32>
    %c0_147 = arith.constant 0 : index
    %c0_148 = arith.constant 0 : index
    %c19_149 = arith.constant 19 : index
    %233 = vector.load %arg1[%c0_147, %c0_148, %c19_149] : memref<1x4x326xf32, #tpu.memory_space<vmem>>, vector<1x4x288xf32>
    %234 = vector.shape_cast %233 : vector<1x4x288xf32> to vector<4x288xf32>
    %235 = arith.addf %232, %234 : vector<4x288xf32>
    %c0_150 = arith.constant 0 : index
    %c0_151 = arith.constant 0 : index
    %c0_152 = arith.constant 0 : index
    %236 = vector.load %arg5[%c0_150, %c0_151, %c0_152] : memref<1x4x288xf32, #tpu.memory_space<vmem>>, vector<1x4x288xf32>
    %237 = vector.shape_cast %236 : vector<1x4x288xf32> to vector<4x288xf32>
    %238 = vector.shape_cast %235 : vector<4x288xf32> to vector<1x4x288xf32>
    tpu.vector_store %arg5[%c0_150, %c0_151, %c0_152], %238 {strides = array<i32>} : memref<1x4x288xf32, #tpu.memory_space<vmem>>, vector<1x4x288xf32>,
    return
  }
  func.func @transform_0(%arg0: i32) -> (i32, i32, i32) {
    %c0_i32 = arith.constant 0 : i32
    %c0_i32_0 = arith.constant 0 : i32
    %c0_i32_1 = arith.constant 0 : i32
    return %arg0, %c0_i32, %c0_i32_0 : i32, i32, i32
  }
  func.func @transform_1(%arg0: i32) -> (i32, i32) {
    %c0_i32 = arith.constant 0 : i32
    %c0_i32_0 = arith.constant 0 : i32
    %c0_i32_1 = arith.constant 0 : i32
    return %c0_i32, %c0_i32_0 : i32, i32
  }
  func.func @transform_2(%arg0: i32) -> (i32, i32) {
    %c0_i32 = arith.constant 0 : i32
    %c0_i32_0 = arith.constant 0 : i32
    %c0_i32_1 = arith.constant 0 : i32
    return %c0_i32, %c0_i32_0 : i32, i32
  }
  func.func @transform_3(%arg0: i32) -> (i32, i32) {
    %c0_i32 = arith.constant 0 : i32
    %c0_i32_0 = arith.constant 0 : i32
    %c0_i32_1 = arith.constant 0 : i32
    return %c0_i32, %c0_i32_0 : i32, i32
  }
  func.func @transform_4(%arg0: i32) -> (i32, i32, i32) {
    %c0_i32 = arith.constant 0 : i32
    %c0_i32_0 = arith.constant 0 : i32
    %c0_i32_1 = arith.constant 0 : i32
    return %arg0, %c0_i32, %c0_i32_0 : i32, i32, i32
  }
}

</mosaic_0001>

<llo_original>
// kernel: resnet_block.1
$region0: #{resnet_block.1}
  #allocation0 [shape = 'u32[]', space=smem, size = 0x4, offset = 0x4, fixed_abs, tag = 'smem constant byte address 0x4 - core index']
  #allocation1 [shape = 'u32[144,128]{1,0:T(1,128)}', space=vmem, size = 0x12000, scoped, tag = 'internal scratch']
  #allocation2 [shape = 'f32[4,326]{1,0:T(4,128)}', space=vmem, size = 0x1800, scoped, tag = 'scratch operand']
  %s0 = inlined_call_operand.vmem [shape: f32[2,4,326], index: 0, kind: input, shape index: {}]
  %s1 = inlined_call_operand.vmem [shape: bf16[36,4], index: 1, kind: input, shape index: {}]
  %s2 = inlined_call_operand.vmem [shape: bf16[36,4], index: 2, kind: input, shape index: {}]
  %s3 = inlined_call_operand.vmem [shape: f32[1,288], index: 3, kind: input, shape index: {}]
  %s4 = inlined_call_operand.vmem [shape: f32[2,4,288], index: 4, kind: output, shape index: {}]
  %s5 = sld [smem:[#allocation0]]
  $region49: #{resnet_block.1} parent=0
    _
  %s7 = ssub.s32 1, %s5
  %s8 = scalar_select 0, %s7, %s5
  loop: start=0, step=1, limit=4
  $region2: #{resnet_block.1} parent=0 // loop_pre_header
    _
  $region3: #{resnet_block.1} parent=0 // loop_header
    %s10 = sphi 0, %s14
    %p11 = scmp.ge.s32.totalorder %s10, 4
    %s20 = sphi 0, %s22
    %s23 = sphi 0, %s20
    %s24 = sphi 0, %s23
    %s40 = sphi 0, %s24
    %s44 = sphi 0, %s44
    %s46 = sphi 0, %s44
    %s47 = sphi 0, %s46
    %s61 = sphi 0, %s47
    %s65 = sphi 0, %s65
    %s67 = sphi 0, %s65
    %s68 = sphi 0, %s67
    %s82 = sphi 0, %s68
    %s86 = sphi 0, %s86
    %s88 = sphi 0, %s86
    %s89 = sphi 0, %s88
    %s103 = sphi 0, %s89
    %s109 = sphi 0, %s111
    %s112 = sphi 0, %s109
    %s113 = sphi 0, %s112
    %s129 = sphi 0, %s113
  $region4: #{resnet_block.1} parent=0 // loop_header_branch
    %13 = sbr.rel (%p11) target = $region8
  $region5: #{resnet_block.1} parent=0 // loop_body
    %s15 = ssub.s32 %s10, 1
    %s16 = ssub.s32 %s10, 2
    %s17 = sadd.s32 %s10, 1
    %s18 = ssub.s32 %s10, %s17
    %p19 = scmp.eq.s32.totalorder %s18, 0
    %s21 = sadd.s32 %s20, 1
    %s22 = scalar_select %p19, %s20, %s21
    %p25 = pneg %p19
    %p26 = scmp.eq.s32.totalorder %s10, 1
    %p27 = por %p25, %p26
    %p28 = scmp.ne.s32.totalorder %s20, %s23
    %p29 = scmp.eq.s32.totalorder %s10, 0
    %p30 = por %p28, %p29
    %p31 = scmp.ne.s32.totalorder %s20, %s23
    %p32 = scmp.eq.s32.totalorder %s15, 1
    %p33 = por %p31, %p32
    %p34 = scmp.ne.s32.totalorder %s23, %s24
    %p35 = scmp.eq.s32.totalorder %s15, 0
    %p36 = por %p34, %p35
    %p37 = scmp.ne.s32.totalorder %s23, %s24
    %p38 = scmp.eq.s32.totalorder %s16, 1
    %p39 = por %p37, %p38
    %p41 = scmp.ne.s32.totalorder %s24, %s40
    %p42 = scmp.eq.s32.totalorder %s16, 0
    %p43 = por %p41, %p42
    %s45 = sadd.s32 %s44, 1
    %p48 = scmp.eq.s32.totalorder %s10, 1
    %p49 = scmp.ne.s32.totalorder %s44, %s46
    %p50 = scmp.eq.s32.totalorder %s10, 0
    %p51 = por %p49, %p50
    %p52 = scmp.ne.s32.totalorder %s44, %s46
    %p53 = scmp.eq.s32.totalorder %s15, 1
    %p54 = por %p52, %p53
    %p55 = scmp.ne.s32.totalorder %s46, %s47
    %p56 = scmp.eq.s32.totalorder %s15, 0
    %p57 = por %p55, %p56
    %p58 = scmp.ne.s32.totalorder %s46, %s47
    %p59 = scmp.eq.s32.totalorder %s16, 1
    %p60 = por %p58, %p59
    %p62 = scmp.ne.s32.totalorder %s47, %s61
    %p63 = scmp.eq.s32.totalorder %s16, 0
    %p64 = por %p62, %p63
    %s66 = sadd.s32 %s65, 1
    %p69 = scmp.eq.s32.totalorder %s10, 1
    %p70 = scmp.ne.s32.totalorder %s65, %s67
    %p71 = scmp.eq.s32.totalorder %s10, 0
    %p72 = por %p70, %p71
    %p73 = scmp.ne.s32.totalorder %s65, %s67
    %p74 = scmp.eq.s32.totalorder %s15, 1
    %p75 = por %p73, %p74
    %p76 = scmp.ne.s32.totalorder %s67, %s68
    %p77 = scmp.eq.s32.totalorder %s15, 0
    %p78 = por %p76, %p77
    %p79 = scmp.ne.s32.totalorder %s67, %s68
    %p80 = scmp.eq.s32.totalorder %s16, 1
    %p81 = por %p79, %p80
    %p83 = scmp.ne.s32.totalorder %s68, %s82
    %p84 = scmp.eq.s32.totalorder %s16, 0
    %p85 = por %p83, %p84
    %s87 = sadd.s32 %s86, 1
    %p90 = scmp.eq.s32.totalorder %s10, 1
    %p91 = scmp.ne.s32.totalorder %s86, %s88
    %p92 = scmp.eq.s32.totalorder %s10, 0
    %p93 = por %p91, %p92
    %p94 = scmp.ne.s32.totalorder %s86, %s88
    %p95 = scmp.eq.s32.totalorder %s15, 1
    %p96 = por %p94, %p95
    %p97 = scmp.ne.s32.totalorder %s88, %s89
    %p98 = scmp.eq.s32.totalorder %s15, 0
    %p99 = por %p97, %p98
    %p100 = scmp.ne.s32.totalorder %s88, %s89
    %p101 = scmp.eq.s32.totalorder %s16, 1
    %p102 = por %p100, %p101
    %p104 = scmp.ne.s32.totalorder %s89, %s103
    %p105 = scmp.eq.s32.totalorder %s16, 0
    %p106 = por %p104, %p105
    %s107 = ssub.s32 %s10, %s17
    %p108 = scmp.eq.s32.totalorder %s107, 0
    %s110 = sadd.s32 %s109, 1
    %s111 = scalar_select %p108, %s109, %s110
    %p114 = pneg %p108
    %p115 = scmp.eq.s32.totalorder %s10, 1
    %p116 = por %p114, %p115
    %p117 = scmp.ne.s32.totalorder %s109, %s112
    %p118 = scmp.eq.s32.totalorder %s10, 0
    %p119 = por %p117, %p118
    %p120 = scmp.ne.s32.totalorder %s109, %s112
    %p121 = scmp.eq.s32.totalorder %s15, 1
    %p122 = por %p120, %p121
    %p123 = scmp.ne.s32.totalorder %s112, %s113
    %p124 = scmp.eq.s32.totalorder %s15, 0
    %p125 = por %p123, %p124
    %p126 = scmp.ne.s32.totalorder %s112, %s113
    %p127 = scmp.eq.s32.totalorder %s16, 1
    %p128 = por %p126, %p127
    %p130 = scmp.ne.s32.totalorder %s113, %s129
    %p131 = scmp.eq.s32.totalorder %s16, 0
    %p132 = por %p130, %p131
    %p133 = scmp.le.s32.totalorder 1, %s10
    %p134 = scmp.lt.s32.totalorder %s10, 3
    %p135 = pnand %p133, %p134
    %p136 = pneg %p135
    // Predicated region
    $region9: #{resnet_block.1} parent=5 // pred_check
      _
    $region10: #{resnet_block.1} parent=5 // pred_check_branch
      %138 = sbr.rel (%p135) target = $region12
    $region11: #{resnet_block.1} parent=5 // pred_region
      %s139 = ssub.s32 %s10, 1
      // Predicated region
      $region13: #{resnet_block.1} parent=11 // pred_check
        %p140 = pneg %p57
      $region14: #{resnet_block.1} parent=11 // pred_check_branch
        %142 = sbr.rel (%p140) target = $region16
      $region15: #{resnet_block.1} parent=11 // pred_region
        _
      $region16: #{resnet_block.1} parent=11 // pred_fallthru
        _
      // Predicated region
      $region17: #{resnet_block.1} parent=11 // pred_check
        %p143 = pneg %p78
      $region18: #{resnet_block.1} parent=11 // pred_check_branch
        %145 = sbr.rel (%p143) target = $region20
      $region19: #{resnet_block.1} parent=11 // pred_region
        _
      $region20: #{resnet_block.1} parent=11 // pred_fallthru
        _
      // Predicated region
      $region21: #{resnet_block.1} parent=11 // pred_check
        %p146 = pneg %p99
      $region22: #{resnet_block.1} parent=11 // pred_check_branch
        %148 = sbr.rel (%p146) target = $region24
      $region23: #{resnet_block.1} parent=11 // pred_region
        _
      $region24: #{resnet_block.1} parent=11 // pred_fallthru
        _
    $region12: #{resnet_block.1} parent=5 // pred_fallthru
      _
    %p149 = scmp.lt.s32.totalorder %s10, 2
    // Predicated region
    $region25: #{resnet_block.1} parent=5 // pred_check
      %p150 = pneg %p149
    $region26: #{resnet_block.1} parent=5 // pred_check_branch
      %152 = sbr.rel (%p150) target = $region28
    $region27: #{resnet_block.1} parent=5 // pred_region
      // Predicated region
      $region29: #{resnet_block.1} parent=27 // pred_check
        %p153 = pneg %p30
      $region30: #{resnet_block.1} parent=27 // pred_check_branch
        %155 = sbr.rel (%p153) target = $region32
      $region31: #{resnet_block.1} parent=27 // pred_region
        %p156 = scmp.lt.s32.totalorder %s10, 1
        %s157 = scalar_select %p156, %s10, 1
        %s158 = smul.addr %s157, 3
        %s159 = smul.addr %s158, 4
        %s160 = scalar_lea.vmem %s0, %s159
      $region32: #{resnet_block.1} parent=27 // pred_fallthru
        _
    $region28: #{resnet_block.1} parent=5 // pred_fallthru
      _
    %p161 = scmp.le.s32.totalorder 1, %s10
    %p162 = scmp.lt.s32.totalorder %s10, 3
    %p163 = pnand %p161, %p162
    %p164 = pneg %p163
    // Predicated region
    $region33: #{resnet_block.1} parent=5 // pred_check
      _
    $region34: #{resnet_block.1} parent=5 // pred_check_branch
      %166 = sbr.rel (%p163) target = $region36
    $region35: #{resnet_block.1} parent=5 // pred_region
      %s167 = ssub.s32 %s10, 1
      %p168 = scmp.lt.s32.totalorder %s15, 1
      %s169 = scalar_select %p168, %s15, 1
      %s170 = smul.addr %s169, 3
      %s171 = smul.addr %s170, 4
      %s172 = scalar_lea.vmem %s0, %s171
      %p173 = pneg %p36
      %p174 = pneg %p33
      %p175 = pneg %p57
      %p176 = pneg %p54
      %p177 = pneg %p78
      %p178 = pneg %p75
      %p179 = pneg %p99
      %p180 = pneg %p96
      %p181 = pneg %p125
      %p182 = pneg %p122
      %p183 = scmp.lt.s32.totalorder %s15, 1
      %s184 = scalar_select %p183, %s15, 1
      %s185 = smul.addr %s184, 3
      %s186 = smul.addr %s185, 4
      %s187 = scalar_lea.vmem %s4, %s186
      %p188 = scmp.lt.s32.totalorder %s15, 1
      %s189 = scalar_select %p188, %s15, 1
      %s190 = smul.addr %s189, 3
      %s191 = smul.addr %s190, 4
      %s192 = scalar_lea.vmem %s0, %s191
      %p193 = scmp.lt.s32.totalorder %s15, 1
      %s194 = scalar_select %p193, %s15, 1
      %s195 = smul.addr %s194, 3
      %s196 = smul.addr %s195, 4
      %s197 = scalar_lea.vmem %s4, %s196
      %v199 = vld [vmem:[%s3] sm:$0x7]
      %v200 = vld [vmem:[%s192] sm:$0xff]
      %v201 = vld [vmem:[%s192 + $0x8] sm:$0xf]
      %v203 = vcombine.high %v200, %v200
      %v205 = vpack.c.bf16 %v200, %v200
      %v206 = vpack.c.bf16 %v203, %v203
      %v207 = vpack.c.bf16 %v201, %v201
      %v208 = vld [vmem:[%s1] sm:$0x3]
      %v209 = vld [vmem:[%s1] sm:$0xc]
      %v211 = vunpack.c.l.b16 %v209
      %v212 = vpack.c.b16 %v211, %v211
      %v213 = vrot.slane %v212, 2
      %217 = vrot.lane.b32.xlu0 %v205, 127
      %v218 = vpop.permute.xlu0 %217
      %219 = vrot.lane.b32.xlu0 %v206, 127
      %v220 = vpop.permute.xlu0 %219
      %221 = vrot.lane.b32.xlu0 %v207, 127
      %v222 = vpop.permute.xlu0 %221
      %vm223 = vcmask 1039360
      %v224 = vsel %vm223, %v218, %v220
      %v225 = vsel %vm223, %v220, %v222
      %vm226 = vcmask 31744
      %v228 = vsel %vm226, %v213, 0
      %vm230 = vcmask 1041408
      %v232 = vsel %vm230, %v224, 0
      %v235 = vsel %vm230, %v225, 0
      %v238 = vsel %vm230, %v222, 0
      %240 = vmatprep.subr.bf16.mxu0 %v235
      %241 = vmatpush1.bf16.msra.mxu0 %v232
      %242 = vmatprep.subr.bf16.mxu0 0
      %243 = vmatpush1.bf16.msra.mxu0 0
      %244 = vmatprep.subr.bf16.mxu0 0
      %245 = vmatpush1.bf16.msra.mxu0 0
      %246 = vmatprep.subr.bf16.mxu0 0
      %247 = vmatpush1.bf16.msra.mxu0 0
      %248 = vmatprep.subr.bf16.mxu0 0
      %249 = vmatpush1.bf16.msra.mxu0 0
      %250 = vmatprep.subr.bf16.mxu0 0
      %251 = vmatpush1.bf16.msra.mxu0 0
      %252 = vmatprep.subr.bf16.mxu0 0
      %253 = vmatpush1.bf16.msra.mxu0 0
      %254 = vmatprep.subr.bf16.mxu0 0
      %255 = vmatpush1.bf16.msra.mxu0 0
      %256 = vmatprep.subr.bf16.mxu0 0
      %257 = vmatpush1.bf16.msra.mxu0 0
      %258 = vmatprep.subr.bf16.mxu0 0
      %259 = vmatpush1.bf16.msra.mxu0 0
      %260 = vmatprep.subr.bf16.mxu0 0
      %261 = vmatpush1.bf16.msra.mxu0 0
      %262 = vmatprep.subr.bf16.mxu0 0
      %263 = vmatpush1.bf16.msra.mxu0 0
      %264 = vmatprep.subr.bf16.mxu0 0
      %265 = vmatpush1.bf16.msra.mxu0 0
      %266 = vmatprep.subr.bf16.mxu0 0
      %267 = vmatpush1.bf16.msra.mxu0 0
      %268 = vmatprep.subr.bf16.mxu0 0
      %269 = vmatpush1.bf16.msra.mxu0 0
      %270 = vmatprep.subr.bf16.mxu0 0
      %271 = vmatpush1.bf16.msra.mxu0 0
      %272 = vmatprep.mubr.bf16.mxu0 0
      %273 = vmatmul.mubr.bf16.gmra.mrb[0].mxu0 %v228
      %v274 = vpop.f32.mrb[0].mxu0
      %v275 = vadd.f32 0.0, %v274
      %v276 = vpop.f32.mrb[0].mxu0
      %v277 = vadd.f32 0.0, %v276
      %v278 = vpop.f32.mrb[0].mxu0
      %v279 = vpop.f32.mrb[0].mxu0
      %280 = vdwg.mxu0
      %281 = vmatprep.subr.bf16.mxu0 0
      %282 = vmatpush1.bf16.msra.mxu0 %v238
      %283 = vmatprep.subr.bf16.mxu0 0
      %284 = vmatpush1.bf16.msra.mxu0 0
      %285 = vmatprep.subr.bf16.mxu0 0
      %286 = vmatpush1.bf16.msra.mxu0 0
      %287 = vmatprep.subr.bf16.mxu0 0
      %288 = vmatpush1.bf16.msra.mxu0 0
      %289 = vmatprep.subr.bf16.mxu0 0
      %290 = vmatpush1.bf16.msra.mxu0 0
      %291 = vmatprep.subr.bf16.mxu0 0
      %292 = vmatpush1.bf16.msra.mxu0 0
      %293 = vmatprep.subr.bf16.mxu0 0
      %294 = vmatpush1.bf16.msra.mxu0 0
      %295 = vmatprep.subr.bf16.mxu0 0
      %296 = vmatpush1.bf16.msra.mxu0 0
      %297 = vmatprep.subr.bf16.mxu0 0
      %298 = vmatpush1.bf16.msra.mxu0 0
      %299 = vmatprep.subr.bf16.mxu0 0
      %300 = vmatpush1.bf16.msra.mxu0 0
      %301 = vmatprep.subr.bf16.mxu0 0
      %302 = vmatpush1.bf16.msra.mxu0 0
      %303 = vmatprep.subr.bf16.mxu0 0
      %304 = vmatpush1.bf16.msra.mxu0 0
      %305 = vmatprep.subr.bf16.mxu0 0
      %306 = vmatpush1.bf16.msra.mxu0 0
      %307 = vmatprep.subr.bf16.mxu0 0
      %308 = vmatpush1.bf16.msra.mxu0 0
      %309 = vmatprep.subr.bf16.mxu0 0
      %310 = vmatpush1.bf16.msra.mxu0 0
      %311 = vmatprep.subr.bf16.mxu0 0
      %312 = vmatpush1.bf16.msra.mxu0 0
      %313 = vmatprep.mubr.bf16.mxu0 0
      %314 = vmatmul.mubr.bf16.gmra.mrb[0].mxu0 %v228
      %v315 = vpop.f32.mrb[0].mxu0
      %v316 = vadd.f32 0.0, %v315
      %v317 = vpop.f32.mrb[0].mxu0
      %v318 = vpop.f32.mrb[0].mxu0
      %v319 = vpop.f32.mrb[0].mxu0
      %320 = vdwg.mxu0
      %v322 = vsel %vm226, %v208, 0
      %v325 = vsel %vm230, %v205, 0
      %v328 = vsel %vm230, %v206, 0
      %v331 = vsel %vm230, %v207, 0
      %333 = vmatprep.subr.bf16.mxu0 %v328
      %334 = vmatpush1.bf16.msra.mxu0 %v325
      %335 = vmatprep.subr.bf16.mxu0 0
      %336 = vmatpush1.bf16.msra.mxu0 0
      %337 = vmatprep.subr.bf16.mxu0 0
      %338 = vmatpush1.bf16.msra.mxu0 0
      %339 = vmatprep.subr.bf16.mxu0 0
      %340 = vmatpush1.bf16.msra.mxu0 0
      %341 = vmatprep.subr.bf16.mxu0 0
      %342 = vmatpush1.bf16.msra.mxu0 0
      %343 = vmatprep.subr.bf16.mxu0 0
      %344 = vmatpush1.bf16.msra.mxu0 0
      %345 = vmatprep.subr.bf16.mxu0 0
      %346 = vmatpush1.bf16.msra.mxu0 0
      %347 = vmatprep.subr.bf16.mxu0 0
      %348 = vmatpush1.bf16.msra.mxu0 0
      %349 = vmatprep.subr.bf16.mxu0 0
      %350 = vmatpush1.bf16.msra.mxu0 0
      %351 = vmatprep.subr.bf16.mxu0 0
      %352 = vmatpush1.bf16.msra.mxu0 0
      %353 = vmatprep.subr.bf16.mxu0 0
      %354 = vmatpush1.bf16.msra.mxu0 0
      %355 = vmatprep.subr.bf16.mxu0 0
      %356 = vmatpush1.bf16.msra.mxu0 0
      %357 = vmatprep.subr.bf16.mxu0 0
      %358 = vmatpush1.bf16.msra.mxu0 0
      %359 = vmatprep.subr.bf16.mxu0 0
      %360 = vmatpush1.bf16.msra.mxu0 0
      %361 = vmatprep.subr.bf16.mxu0 0
      %362 = vmatpush1.bf16.msra.mxu0 0
      %363 = vmatprep.subr.bf16.mxu0 0
      %364 = vmatpush1.bf16.msra.mxu0 0
      %365 = vmatprep.mubr.bf16.mxu0 0
      %366 = vmatmul.mubr.bf16.gmra.mrb[0].mxu0 %v322
      %v367 = vpop.f32.mrb[0].mxu0
      %v368 = vadd.f32 %v275, %v367
      %v369 = vpop.f32.mrb[0].mxu0
      %v370 = vadd.f32 %v277, %v369
      %v371 = vpop.f32.mrb[0].mxu0
      %v372 = vpop.f32.mrb[0].mxu0
      %373 = vdwg.mxu0
      %374 = vmatprep.subr.bf16.mxu0 0
      %375 = vmatpush1.bf16.msra.mxu0 %v331
      %376 = vmatprep.subr.bf16.mxu0 0
      %377 = vmatpush1.bf16.msra.mxu0 0
      %378 = vmatprep.subr.bf16.mxu0 0
      %379 = vmatpush1.bf16.msra.mxu0 0
      %380 = vmatprep.subr.bf16.mxu0 0
      %381 = vmatpush1.bf16.msra.mxu0 0
      %382 = vmatprep.subr.bf16.mxu0 0
      %383 = vmatpush1.bf16.msra.mxu0 0
      %384 = vmatprep.subr.bf16.mxu0 0
      %385 = vmatpush1.bf16.msra.mxu0 0
      %386 = vmatprep.subr.bf16.mxu0 0
      %387 = vmatpush1.bf16.msra.mxu0 0
      %388 = vmatprep.subr.bf16.mxu0 0
      %389 = vmatpush1.bf16.msra.mxu0 0
      %390 = vmatprep.subr.bf16.mxu0 0
      %391 = vmatpush1.bf16.msra.mxu0 0
      %392 = vmatprep.subr.bf16.mxu0 0
      %393 = vmatpush1.bf16.msra.mxu0 0
      %394 = vmatprep.subr.bf16.mxu0 0
      %395 = vmatpush1.bf16.msra.mxu0 0
      %396 = vmatprep.subr.bf16.mxu0 0
      %397 = vmatpush1.bf16.msra.mxu0 0
      %398 = vmatprep.subr.bf16.mxu0 0
      %399 = vmatpush1.bf16.msra.mxu0 0
      %400 = vmatprep.subr.bf16.mxu0 0
      %401 = vmatpush1.bf16.msra.mxu0 0
      %402 = vmatprep.subr.bf16.mxu0 0
      %403 = vmatpush1.bf16.msra.mxu0 0
      %404 = vmatprep.subr.bf16.mxu0 0
      %405 = vmatpush1.bf16.msra.mxu0 0
      %406 = vmatprep.mubr.bf16.mxu0 0
      %407 = vmatmul.mubr.bf16.gmra.mrb[0].mxu0 %v322
      %v408 = vpop.f32.mrb[0].mxu0
      %v409 = vadd.f32 %v316, %v408
      %v410 = vpop.f32.mrb[0].mxu0
      %v411 = vpop.f32.mrb[0].mxu0
      %v412 = vpop.f32.mrb[0].mxu0
      %413 = vdwg.mxu0
      %v414 = vld [vmem:[%s192] sm:$0xff]
      %v415 = vld [vmem:[%s192 + $0x8] sm:$0xf]
      %v417 = vcombine.high %v414, %v414
      %v419 = vpack.c.bf16 %v414, %v414
      %v420 = vpack.c.bf16 %v417, %v417
      %v421 = vpack.c.bf16 %v415, %v415
      %v422 = vld [vmem:[%s1 + $0x4] sm:$0x3]
      %426 = vrot.lane.b32.xlu0 %v419, 126
      %v427 = vpop.permute.xlu0 %426
      %428 = vrot.lane.b32.xlu0 %v420, 126
      %v429 = vpop.permute.xlu0 %428
      %430 = vrot.lane.b32.xlu0 %v421, 126
      %v431 = vpop.permute.xlu0 %430
      %vm432 = vcmask 1031168
      %v433 = vsel %vm432, %v427, %v429
      %v434 = vsel %vm432, %v429, %v431
      %v436 = vsel %vm226, %v422, 0
      %v439 = vsel %vm230, %v433, 0
      %v442 = vsel %vm230, %v434, 0
      %v445 = vsel %vm230, %v431, 0
      %447 = vmatprep.subr.bf16.mxu0 %v442
      %448 = vmatpush1.bf16.msra.mxu0 %v439
      %449 = vmatprep.subr.bf16.mxu0 0
      %450 = vmatpush1.bf16.msra.mxu0 0
      %451 = vmatprep.subr.bf16.mxu0 0
      %452 = vmatpush1.bf16.msra.mxu0 0
      %453 = vmatprep.subr.bf16.mxu0 0
      %454 = vmatpush1.bf16.msra.mxu0 0
      %455 = vmatprep.subr.bf16.mxu0 0
      %456 = vmatpush1.bf16.msra.mxu0 0
      %457 = vmatprep.subr.bf16.mxu0 0
      %458 = vmatpush1.bf16.msra.mxu0 0
      %459 = vmatprep.subr.bf16.mxu0 0
      %460 = vmatpush1.bf16.msra.mxu0 0
      %461 = vmatprep.subr.bf16.mxu0 0
      %462 = vmatpush1.bf16.msra.mxu0 0
      %463 = vmatprep.subr.bf16.mxu0 0
      %464 = vmatpush1.bf16.msra.mxu0 0
      %465 = vmatprep.subr.bf16.mxu0 0
      %466 = vmatpush1.bf16.msra.mxu0 0
      %467 = vmatprep.subr.bf16.mxu0 0
      %468 = vmatpush1.bf16.msra.mxu0 0
      %469 = vmatprep.subr.bf16.mxu0 0
      %470 = vmatpush1.bf16.msra.mxu0 0
      %471 = vmatprep.subr.bf16.mxu0 0
      %472 = vmatpush1.bf16.msra.mxu0 0
      %473 = vmatprep.subr.bf16.mxu0 0
      %474 = vmatpush1.bf16.msra.mxu0 0
      %475 = vmatprep.subr.bf16.mxu0 0
      %476 = vmatpush1.bf16.msra.mxu0 0
      %477 = vmatprep.subr.bf16.mxu0 0
      %478 = vmatpush1.bf16.msra.mxu0 0
      %479 = vmatprep.mubr.bf16.mxu0 0
      %480 = vmatmul.mubr.bf16.gmra.mrb[0].mxu0 %v436
      %v481 = vpop.f32.mrb[0].mxu0
      %v482 = vadd.f32 0.0, %v481
      %v483 = vpop.f32.mrb[0].mxu0
      %v484 = vadd.f32 0.0, %v483
      %v485 = vpop.f32.mrb[0].mxu0
      %v486 = vpop.f32.mrb[0].mxu0
      %487 = vdwg.mxu0
      %488 = vmatprep.subr.bf16.mxu0 0
      %489 = vmatpush1.bf16.msra.mxu0 %v445
      %490 = vmatprep.subr.bf16.mxu0 0
      %491 = vmatpush1.bf16.msra.mxu0 0
      %492 = vmatprep.subr.bf16.mxu0 0
      %493 = vmatpush1.bf16.msra.mxu0 0
      %494 = vmatprep.subr.bf16.mxu0 0
      %495 = vmatpush1.bf16.msra.mxu0 0
      %496 = vmatprep.subr.bf16.mxu0 0
      %497 = vmatpush1.bf16.msra.mxu0 0
      %498 = vmatprep.subr.bf16.mxu0 0
      %499 = vmatpush1.bf16.msra.mxu0 0
      %500 = vmatprep.subr.bf16.mxu0 0
      %501 = vmatpush1.bf16.msra.mxu0 0
      %502 = vmatprep.subr.bf16.mxu0 0
      %503 = vmatpush1.bf16.msra.mxu0 0
      %504 = vmatprep.subr.bf16.mxu0 0
      %505 = vmatpush1.bf16.msra.mxu0 0
      %506 = vmatprep.subr.bf16.mxu0 0
      %507 = vmatpush1.bf16.msra.mxu0 0
      %508 = vmatprep.subr.bf16.mxu0 0
      %509 = vmatpush1.bf16.msra.mxu0 0
      %510 = vmatprep.subr.bf16.mxu0 0
      %511 = vmatpush1.bf16.msra.mxu0 0
      %512 = vmatprep.subr.bf16.mxu0 0
      %513 = vmatpush1.bf16.msra.mxu0 0
      %514 = vmatprep.subr.bf16.mxu0 0
      %515 = vmatpush1.bf16.msra.mxu0 0
      %516 = vmatprep.subr.bf16.mxu0 0
      %517 = vmatpush1.bf16.msra.mxu0 0
      %518 = vmatprep.subr.bf16.mxu0 0
      %519 = vmatpush1.bf16.msra.mxu0 0
      %520 = vmatprep.mubr.bf16.mxu0 0
      %521 = vmatmul.mubr.bf16.gmra.mrb[0].mxu0 %v436
      %v522 = vpop.f32.mrb[0].mxu0
      %v523 = vadd.f32 0.0, %v522
      %v524 = vpop.f32.mrb[0].mxu0
      %v525 = vpop.f32.mrb[0].mxu0
      %v526 = vpop.f32.mrb[0].mxu0
      %527 = vdwg.mxu0
      %v528 = vadd.f32 %v368, %v482
      %v529 = vadd.f32 %v370, %v484
      %v530 = vadd.f32 %v409, %v523
      %v531 = vld [vmem:[%s192] sm:$0xff]
      %v532 = vld [vmem:[%s192 + $0x8] sm:$0xf]
      %v534 = vcombine.high %v531, %v531
      %v536 = vpack.c.bf16 %v531, %v531
      %v537 = vpack.c.bf16 %v534, %v534
      %v538 = vpack.c.bf16 %v532, %v532
      %v539 = vld [vmem:[%s1 + $0x4] sm:$0xc]
      %v541 = vunpack.c.l.b16 %v539
      %v542 = vpack.c.b16 %v541, %v541
      %v543 = vrot.slane %v542, 2
      %547 = vrot.lane.b32.xlu0 %v536, 110
      %v548 = vpop.permute.xlu0 %547
      %549 = vrot.lane.b32.xlu0 %v537, 110
      %v550 = vpop.permute.xlu0 %549
      %551 = vrot.lane.b32.xlu0 %v538, 110
      %v552 = vpop.permute.xlu0 %551
      %vm553 = vcmask 900096
      %v554 = vsel %vm553, %v548, %v550
      %v555 = vsel %vm553, %v550, %v552
      %v557 = vsel %vm226, %v543, 0
      %v560 = vsel %vm230, %v554, 0
      %v563 = vsel %vm230, %v555, 0
      %v566 = vsel %vm230, %v552, 0
      %568 = vmatprep.subr.bf16.mxu0 %v563
      %569 = vmatpush1.bf16.msra.mxu0 %v560
      %570 = vmatprep.subr.bf16.mxu0 0
      %571 = vmatpush1.bf16.msra.mxu0 0
      %572 = vmatprep.subr.bf16.mxu0 0
      %573 = vmatpush1.bf16.msra.mxu0 0
      %574 = vmatprep.subr.bf16.mxu0 0
      %575 = vmatpush1.bf16.msra.mxu0 0
      %576 = vmatprep.subr.bf16.mxu0 0
      %577 = vmatpush1.bf16.msra.mxu0 0
      %578 = vmatprep.subr.bf16.mxu0 0
      %579 = vmatpush1.bf16.msra.mxu0 0
      %580 = vmatprep.subr.bf16.mxu0 0
      %581 = vmatpush1.bf16.msra.mxu0 0
      %582 = vmatprep.subr.bf16.mxu0 0
      %583 = vmatpush1.bf16.msra.mxu0 0
      %584 = vmatprep.subr.bf16.mxu0 0
      %585 = vmatpush1.bf16.msra.mxu0 0
      %586 = vmatprep.subr.bf16.mxu0 0
      %587 = vmatpush1.bf16.msra.mxu0 0
      %588 = vmatprep.subr.bf16.mxu0 0
      %589 = vmatpush1.bf16.msra.mxu0 0
      %590 = vmatprep.subr.bf16.mxu0 0
      %591 = vmatpush1.bf16.msra.mxu0 0
      %592 = vmatprep.subr.bf16.mxu0 0
      %593 = vmatpush1.bf16.msra.mxu0 0
      %594 = vmatprep.subr.bf16.mxu0 0
      %595 = vmatpush1.bf16.msra.mxu0 0
      %596 = vmatprep.subr.bf16.mxu0 0
      %597 = vmatpush1.bf16.msra.mxu0 0
      %598 = vmatprep.subr.bf16.mxu0 0
      %599 = vmatpush1.bf16.msra.mxu0 0
      %600 = vmatprep.mubr.bf16.mxu0 0
      %601 = vmatmul.mubr.bf16.gmra.mrb[0].mxu0 %v557
      %v602 = vpop.f32.mrb[0].mxu0
      %v603 = vadd.f32 0.0, %v602
      %v604 = vpop.f32.mrb[0].mxu0
      %v605 = vadd.f32 0.0, %v604
      %v606 = vpop.f32.mrb[0].mxu0
      %v607 = vpop.f32.mrb[0].mxu0
      %608 = vdwg.mxu0
      %609 = vmatprep.subr.bf16.mxu0 0
      %610 = vmatpush1.bf16.msra.mxu0 %v566
      %611 = vmatprep.subr.bf16.mxu0 0
      %612 = vmatpush1.bf16.msra.mxu0 0
      %613 = vmatprep.subr.bf16.mxu0 0
      %614 = vmatpush1.bf16.msra.mxu0 0
      %615 = vmatprep.subr.bf16.mxu0 0
      %616 = vmatpush1.bf16.msra.mxu0 0
      %617 = vmatprep.subr.bf16.mxu0 0
      %618 = vmatpush1.bf16.msra.mxu0 0
      %619 = vmatprep.subr.bf16.mxu0 0
      %620 = vmatpush1.bf16.msra.mxu0 0
      %621 = vmatprep.subr.bf16.mxu0 0
      %622 = vmatpush1.bf16.msra.mxu0 0
      %623 = vmatprep.subr.bf16.mxu0 0
      %624 = vmatpush1.bf16.msra.mxu0 0
      %625 = vmatprep.subr.bf16.mxu0 0
      %626 = vmatpush1.bf16.msra.mxu0 0
      %627 = vmatprep.subr.bf16.mxu0 0
      %628 = vmatpush1.bf16.msra.mxu0 0
      %629 = vmatprep.subr.bf16.mxu0 0
      %630 = vmatpush1.bf16.msra.mxu0 0
      %631 = vmatprep.subr.bf16.mxu0 0
      %632 = vmatpush1.bf16.msra.mxu0 0
      %633 = vmatprep.subr.bf16.mxu0 0
      %634 = vmatpush1.bf16.msra.mxu0 0
      %635 = vmatprep.subr.bf16.mxu0 0
      %636 = vmatpush1.bf16.msra.mxu0 0
      %637 = vmatprep.subr.bf16.mxu0 0
      %638 = vmatpush1.bf16.msra.mxu0 0
      %639 = vmatprep.subr.bf16.mxu0 0
      %640 = vmatpush1.bf16.msra.mxu0 0
      %641 = vmatprep.mubr.bf16.mxu0 0
      %642 = vmatmul.mubr.bf16.gmra.mrb[0].mxu0 %v557
      %v643 = vpop.f32.mrb[0].mxu0
      %v644 = vadd.f32 0.0, %v643
      %v645 = vpop.f32.mrb[0].mxu0
      %v646 = vpop.f32.mrb[0].mxu0
      %v647 = vpop.f32.mrb[0].mxu0
      %648 = vdwg.mxu0
      %v649 = vadd.f32 %v528, %v603
      %v650 = vadd.f32 %v529, %v605
      %v651 = vadd.f32 %v530, %v644
      %v652 = vld [vmem:[%s192] sm:$0xff]
      %v653 = vld [vmem:[%s192 + $0x8] sm:$0xf]
      %v655 = vcombine.high %v652, %v652
      %v657 = vpack.c.bf16 %v652, %v652
      %v658 = vpack.c.bf16 %v655, %v655
      %v659 = vpack.c.bf16 %v653, %v653
      %v660 = vld [vmem:[%s1 + $0x8] sm:$0x3]
      %664 = vrot.lane.b32.xlu0 %v657, 109
      %v665 = vpop.permute.xlu0 %664
      %666 = vrot.lane.b32.xlu0 %v658, 109
      %v667 = vpop.permute.xlu0 %666
      %668 = vrot.lane.b32.xlu0 %v659, 109
      %v669 = vpop.permute.xlu0 %668
      %vm670 = vcmask 891904
      %v671 = vsel %vm670, %v665, %v667
      %v672 = vsel %vm670, %v667, %v669
      %v674 = vsel %vm226, %v660, 0
      %v677 = vsel %vm230, %v671, 0
      %v680 = vsel %vm230, %v672, 0
      %v683 = vsel %vm230, %v669, 0
      %685 = vmatprep.subr.bf16.mxu0 %v680
      %686 = vmatpush1.bf16.msra.mxu0 %v677
      %687 = vmatprep.subr.bf16.mxu0 0
      %688 = vmatpush1.bf16.msra.mxu0 0
      %689 = vmatprep.subr.bf16.mxu0 0
      %690 = vmatpush1.bf16.msra.mxu0 0
      %691 = vmatprep.subr.bf16.mxu0 0
      %692 = vmatpush1.bf16.msra.mxu0 0
      %693 = vmatprep.subr.bf16.mxu0 0
      %694 = vmatpush1.bf16.msra.mxu0 0
      %695 = vmatprep.subr.bf16.mxu0 0
      %696 = vmatpush1.bf16.msra.mxu0 0
      %697 = vmatprep.subr.bf16.mxu0 0
      %698 = vmatpush1.bf16.msra.mxu0 0
      %699 = vmatprep.subr.bf16.mxu0 0
      %700 = vmatpush1.bf16.msra.mxu0 0
      %701 = vmatprep.subr.bf16.mxu0 0
      %702 = vmatpush1.bf16.msra.mxu0 0
      %703 = vmatprep.subr.bf16.mxu0 0
      %704 = vmatpush1.bf16.msra.mxu0 0
      %705 = vmatprep.subr.bf16.mxu0 0
      %706 = vmatpush1.bf16.msra.mxu0 0
      %707 = vmatprep.subr.bf16.mxu0 0
      %708 = vmatpush1.bf16.msra.mxu0 0
      %709 = vmatprep.subr.bf16.mxu0 0
      %710 = vmatpush1.bf16.msra.mxu0 0
      %711 = vmatprep.subr.bf16.mxu0 0
      %712 = vmatpush1.bf16.msra.mxu0 0
      %713 = vmatprep.subr.bf16.mxu0 0
      %714 = vmatpush1.bf16.msra.mxu0 0
      %715 = vmatprep.subr.bf16.mxu0 0
      %716 = vmatpush1.bf16.msra.mxu0 0
      %717 = vmatprep.mubr.bf16.mxu0 0
      %718 = vmatmul.mubr.bf16.gmra.mrb[0].mxu0 %v674
      %v719 = vpop.f32.mrb[0].mxu0
      %v720 = vadd.f32 0.0, %v719
      %v721 = vpop.f32.mrb[0].mxu0
      %v722 = vadd.f32 0.0, %v721
      %v723 = vpop.f32.mrb[0].mxu0
      %v724 = vpop.f32.mrb[0].mxu0
      %725 = vdwg.mxu0
      %726 = vmatprep.subr.bf16.mxu0 0
      %727 = vmatpush1.bf16.msra.mxu0 %v683
      %728 = vmatprep.subr.bf16.mxu0 0
      %729 = vmatpush1.bf16.msra.mxu0 0
      %730 = vmatprep.subr.bf16.mxu0 0
      %731 = vmatpush1.bf16.msra.mxu0 0
      %732 = vmatprep.subr.bf16.mxu0 0
      %733 = vmatpush1.bf16.msra.mxu0 0
      %734 = vmatprep.subr.bf16.mxu0 0
      %735 = vmatpush1.bf16.msra.mxu0 0
      %736 = vmatprep.subr.bf16.mxu0 0
      %737 = vmatpush1.bf16.msra.mxu0 0
      %738 = vmatprep.subr.bf16.mxu0 0
      %739 = vmatpush1.bf16.msra.mxu0 0
      %740 = vmatprep.subr.bf16.mxu0 0
      %741 = vmatpush1.bf16.msra.mxu0 0
      %742 = vmatprep.subr.bf16.mxu0 0
      %743 = vmatpush1.bf16.msra.mxu0 0
      %744 = vmatprep.subr.bf16.mxu0 0
      %745 = vmatpush1.bf16.msra.mxu0 0
      %746 = vmatprep.subr.bf16.mxu0 0
      %747 = vmatpush1.bf16.msra.mxu0 0
      %748 = vmatprep.subr.bf16.mxu0 0
      %749 = vmatpush1.bf16.msra.mxu0 0
      %750 = vmatprep.subr.bf16.mxu0 0
      %751 = vmatpush1.bf16.msra.mxu0 0
      %752 = vmatprep.subr.bf16.mxu0 0
      %753 = vmatpush1.bf16.msra.mxu0 0
      %754 = vmatprep.subr.bf16.mxu0 0
      %755 = vmatpush1.bf16.msra.mxu0 0
      %756 = vmatprep.subr.bf16.mxu0 0
      %757 = vmatpush1.bf16.msra.mxu0 0
      %758 = vmatprep.mubr.bf16.mxu0 0
      %759 = vmatmul.mubr.bf16.gmra.mrb[0].mxu0 %v674
      %v760 = vpop.f32.mrb[0].mxu0
      %v761 = vadd.f32 0.0, %v760
      %v762 = vpop.f32.mrb[0].mxu0
      %v763 = vpop.f32.mrb[0].mxu0
      %v764 = vpop.f32.mrb[0].mxu0
      %765 = vdwg.mxu0
      %v766 = vadd.f32 %v649, %v720
      %v767 = vadd.f32 %v650, %v722
      %v768 = vadd.f32 %v651, %v761
      %v769 = vld [vmem:[%s192] sm:$0xff]
      %v770 = vld [vmem:[%s192 + $0x8] sm:$0xf]
      %v772 = vcombine.high %v769, %v769
      %v774 = vpack.c.bf16 %v769, %v769
      %v775 = vpack.c.bf16 %v772, %v772
      %v776 = vpack.c.bf16 %v770, %v770
      %v777 = vld [vmem:[%s1 + $0x8] sm:$0xc]
      %v779 = vunpack.c.l.b16 %v777
      %v780 = vpack.c.b16 %v779, %v779
      %v781 = vrot.slane %v780, 2
      %785 = vrot.lane.b32.xlu0 %v774, 108
      %v786 = vpop.permute.xlu0 %785
      %787 = vrot.lane.b32.xlu0 %v775, 108
      %v788 = vpop.permute.xlu0 %787
      %789 = vrot.lane.b32.xlu0 %v776, 108
      %v790 = vpop.permute.xlu0 %789
      %vm791 = vcmask 883712
      %v792 = vsel %vm791, %v786, %v788
      %v793 = vsel %vm791, %v788, %v790
      %v795 = vsel %vm226, %v781, 0
      %v798 = vsel %vm230, %v792, 0
      %v801 = vsel %vm230, %v793, 0
      %v804 = vsel %vm230, %v790, 0
      %806 = vmatprep.subr.bf16.mxu0 %v801
      %807 = vmatpush1.bf16.msra.mxu0 %v798
      %808 = vmatprep.subr.bf16.mxu0 0
      %809 = vmatpush1.bf16.msra.mxu0 0
      %810 = vmatprep.subr.bf16.mxu0 0
      %811 = vmatpush1.bf16.msra.mxu0 0
      %812 = vmatprep.subr.bf16.mxu0 0
      %813 = vmatpush1.bf16.msra.mxu0 0
      %814 = vmatprep.subr.bf16.mxu0 0
      %815 = vmatpush1.bf16.msra.mxu0 0
      %816 = vmatprep.subr.bf16.mxu0 0
      %817 = vmatpush1.bf16.msra.mxu0 0
      %818 = vmatprep.subr.bf16.mxu0 0
      %819 = vmatpush1.bf16.msra.mxu0 0
      %820 = vmatprep.subr.bf16.mxu0 0
      %821 = vmatpush1.bf16.msra.mxu0 0
      %822 = vmatprep.subr.bf16.mxu0 0
      %823 = vmatpush1.bf16.msra.mxu0 0
      %824 = vmatprep.subr.bf16.mxu0 0
      %825 = vmatpush1.bf16.msra.mxu0 0
      %826 = vmatprep.subr.bf16.mxu0 0
      %827 = vmatpush1.bf16.msra.mxu0 0
      %828 = vmatprep.subr.bf16.mxu0 0
      %829 = vmatpush1.bf16.msra.mxu0 0
      %830 = vmatprep.subr.bf16.mxu0 0
      %831 = vmatpush1.bf16.msra.mxu0 0
      %832 = vmatprep.subr.bf16.mxu0 0
      %833 = vmatpush1.bf16.msra.mxu0 0
      %834 = vmatprep.subr.bf16.mxu0 0
      %835 = vmatpush1.bf16.msra.mxu0 0
      %836 = vmatprep.subr.bf16.mxu0 0
      %837 = vmatpush1.bf16.msra.mxu0 0
      %838 = vmatprep.mubr.bf16.mxu0 0
      %839 = vmatmul.mubr.bf16.gmra.mrb[0].mxu0 %v795
      %v840 = vpop.f32.mrb[0].mxu0
      %v841 = vadd.f32 0.0, %v840
      %v842 = vpop.f32.mrb[0].mxu0
      %v843 = vadd.f32 0.0, %v842
      %v844 = vpop.f32.mrb[0].mxu0
      %v845 = vpop.f32.mrb[0].mxu0
      %846 = vdwg.mxu0
      %847 = vmatprep.subr.bf16.mxu0 0
      %848 = vmatpush1.bf16.msra.mxu0 %v804
      %849 = vmatprep.subr.bf16.mxu0 0
      %850 = vmatpush1.bf16.msra.mxu0 0
      %851 = vmatprep.subr.bf16.mxu0 0
      %852 = vmatpush1.bf16.msra.mxu0 0
      %853 = vmatprep.subr.bf16.mxu0 0
      %854 = vmatpush1.bf16.msra.mxu0 0
      %855 = vmatprep.subr.bf16.mxu0 0
      %856 = vmatpush1.bf16.msra.mxu0 0
      %857 = vmatprep.subr.bf16.mxu0 0
      %858 = vmatpush1.bf16.msra.mxu0 0
      %859 = vmatprep.subr.bf16.mxu0 0
      %860 = vmatpush1.bf16.msra.mxu0 0
      %861 = vmatprep.subr.bf16.mxu0 0
      %862 = vmatpush1.bf16.msra.mxu0 0
      %863 = vmatprep.subr.bf16.mxu0 0
      %864 = vmatpush1.bf16.msra.mxu0 0
      %865 = vmatprep.subr.bf16.mxu0 0
      %866 = vmatpush1.bf16.msra.mxu0 0
      %867 = vmatprep.subr.bf16.mxu0 0
      %868 = vmatpush1.bf16.msra.mxu0 0
      %869 = vmatprep.subr.bf16.mxu0 0
      %870 = vmatpush1.bf16.msra.mxu0 0
      %871 = vmatprep.subr.bf16.mxu0 0
      %872 = vmatpush1.bf16.msra.mxu0 0
      %873 = vmatprep.subr.bf16.mxu0 0
      %874 = vmatpush1.bf16.msra.mxu0 0
      %875 = vmatprep.subr.bf16.mxu0 0
      %876 = vmatpush1.bf16.msra.mxu0 0
      %877 = vmatprep.subr.bf16.mxu0 0
      %878 = vmatpush1.bf16.msra.mxu0 0
      %879 = vmatprep.mubr.bf16.mxu0 0
      %880 = vmatmul.mubr.bf16.gmra.mrb[0].mxu0 %v795
      %v881 = vpop.f32.mrb[0].mxu0
      %v882 = vadd.f32 0.0, %v881
      %v883 = vpop.f32.mrb[0].mxu0
      %v884 = vpop.f32.mrb[0].mxu0
      %v885 = vpop.f32.mrb[0].mxu0
      %886 = vdwg.mxu0
      %v887 = vadd.f32 %v766, %v841
      %v888 = vadd.f32 %v767, %v843
      %v889 = vadd.f32 %v768, %v882
      %v890 = vld [vmem:[%s192] sm:$0xff]
      %v891 = vld [vmem:[%s192 + $0x8] sm:$0xf]
      %v893 = vcombine.high %v890, %v890
      %v895 = vpack.c.bf16 %v890, %v890
      %v896 = vpack.c.bf16 %v893, %v893
      %v897 = vpack.c.bf16 %v891, %v891
      %v898 = vld [vmem:[%s1 + $0xc] sm:$0x3]
      %902 = vrot.lane.b32.xlu0 %v895, 92
      %v903 = vpop.permute.xlu0 %902
      %904 = vrot.lane.b32.xlu0 %v896, 92
      %v905 = vpop.permute.xlu0 %904
      %906 = vrot.lane.b32.xlu0 %v897, 92
      %v907 = vpop.permute.xlu0 %906
      %vm908 = vcmask 752640
      %v909 = vsel %vm908, %v903, %v905
      %v910 = vsel %vm908, %v905, %v907
      %v912 = vsel %vm226, %v898, 0
      %v915 = vsel %vm230, %v909, 0
      %v918 = vsel %vm230, %v910, 0
      %v921 = vsel %vm230, %v907, 0
      %923 = vmatprep.subr.bf16.mxu0 %v918
      %924 = vmatpush1.bf16.msra.mxu0 %v915
      %925 = vmatprep.subr.bf16.mxu0 0
      %926 = vmatpush1.bf16.msra.mxu0 0
      %927 = vmatprep.subr.bf16.mxu0 0
      %928 = vmatpush1.bf16.msra.mxu0 0
      %929 = vmatprep.subr.bf16.mxu0 0
      %930 = vmatpush1.bf16.msra.mxu0 0
      %931 = vmatprep.subr.bf16.mxu0 0
      %932 = vmatpush1.bf16.msra.mxu0 0
      %933 = vmatprep.subr.bf16.mxu0 0
      %934 = vmatpush1.bf16.msra.mxu0 0
      %935 = vmatprep.subr.bf16.mxu0 0
      %936 = vmatpush1.bf16.msra.mxu0 0
      %937 = vmatprep.subr.bf16.mxu0 0
      %938 = vmatpush1.bf16.msra.mxu0 0
      %939 = vmatprep.subr.bf16.mxu0 0
      %940 = vmatpush1.bf16.msra.mxu0 0
      %941 = vmatprep.subr.bf16.mxu0 0
      %942 = vmatpush1.bf16.msra.mxu0 0
      %943 = vmatprep.subr.bf16.mxu0 0
      %944 = vmatpush1.bf16.msra.mxu0 0
      %945 = vmatprep.subr.bf16.mxu0 0
      %946 = vmatpush1.bf16.msra.mxu0 0
      %947 = vmatprep.subr.bf16.mxu0 0
      %948 = vmatpush1.bf16.msra.mxu0 0
      %949 = vmatprep.subr.bf16.mxu0 0
      %950 = vmatpush1.bf16.msra.mxu0 0
      %951 = vmatprep.subr.bf16.mxu0 0
      %952 = vmatpush1.bf16.msra.mxu0 0
      %953 = vmatprep.subr.bf16.mxu0 0
      %954 = vmatpush1.bf16.msra.mxu0 0
      %955 = vmatprep.mubr.bf16.mxu0 0
      %956 = vmatmul.mubr.bf16.gmra.mrb[0].mxu0 %v912
      %v957 = vpop.f32.mrb[0].mxu0
      %v958 = vadd.f32 0.0, %v957
      %v959 = vpop.f32.mrb[0].mxu0
      %v960 = vadd.f32 0.0, %v959
      %v961 = vpop.f32.mrb[0].mxu0
      %v962 = vpop.f32.mrb[0].mxu0
      %963 = vdwg.mxu0
      %964 = vmatprep.subr.bf16.mxu0 0
      %965 = vmatpush1.bf16.msra.mxu0 %v921
      %966 = vmatprep.subr.bf16.mxu0 0
      %967 = vmatpush1.bf16.msra.mxu0 0
      %968 = vmatprep.subr.bf16.mxu0 0
      %969 = vmatpush1.bf16.msra.mxu0 0
      %970 = vmatprep.subr.bf16.mxu0 0
      %971 = vmatpush1.bf16.msra.mxu0 0
      %972 = vmatprep.subr.bf16.mxu0 0
      %973 = vmatpush1.bf16.msra.mxu0 0
      %974 = vmatprep.subr.bf16.mxu0 0
      %975 = vmatpush1.bf16.msra.mxu0 0
      %976 = vmatprep.subr.bf16.mxu0 0
      %977 = vmatpush1.bf16.msra.mxu0 0
      %978 = vmatprep.subr.bf16.mxu0 0
      %979 = vmatpush1.bf16.msra.mxu0 0
      %980 = vmatprep.subr.bf16.mxu0 0
      %981 = vmatpush1.bf16.msra.mxu0 0
      %982 = vmatprep.subr.bf16.mxu0 0
      %983 = vmatpush1.bf16.msra.mxu0 0
      %984 = vmatprep.subr.bf16.mxu0 0
      %985 = vmatpush1.bf16.msra.mxu0 0
      %986 = vmatprep.subr.bf16.mxu0 0
      %987 = vmatpush1.bf16.msra.mxu0 0
      %988 = vmatprep.subr.bf16.mxu0 0
      %989 = vmatpush1.bf16.msra.mxu0 0
      %990 = vmatprep.subr.bf16.mxu0 0
      %991 = vmatpush1.bf16.msra.mxu0 0
      %992 = vmatprep.subr.bf16.mxu0 0
      %993 = vmatpush1.bf16.msra.mxu0 0
      %994 = vmatprep.subr.bf16.mxu0 0
      %995 = vmatpush1.bf16.msra.mxu0 0
      %996 = vmatprep.mubr.bf16.mxu0 0
      %997 = vmatmul.mubr.bf16.gmra.mrb[0].mxu0 %v912
      %v998 = vpop.f32.mrb[0].mxu0
      %v999 = vadd.f32 0.0, %v998
      %v1000 = vpop.f32.mrb[0].mxu0
      %v1001 = vpop.f32.mrb[0].mxu0
      %v1002 = vpop.f32.mrb[0].mxu0
      %1003 = vdwg.mxu0
      %v1004 = vadd.f32 %v887, %v958
      %v1005 = vadd.f32 %v888, %v960
      %v1006 = vadd.f32 %v889, %v999
      %v1007 = vld [vmem:[%s192] sm:$0xff]
      %v1008 = vld [vmem:[%s192 + $0x8] sm:$0xf]
      %v1010 = vcombine.high %v1007, %v1007
      %v1012 = vpack.c.bf16 %v1007, %v1007
      %v1013 = vpack.c.bf16 %v1010, %v1010
      %v1014 = vpack.c.bf16 %v1008, %v1008
      %v1015 = vld [vmem:[%s1 + $0xc] sm:$0xc]
      %v1017 = vunpack.c.l.b16 %v1015
      %v1018 = vpack.c.b16 %v1017, %v1017
      %v1019 = vrot.slane %v1018, 2
      %1023 = vrot.lane.b32.xlu0 %v1012, 91
      %v1024 = vpop.permute.xlu0 %1023
      %1025 = vrot.lane.b32.xlu0 %v1013, 91
      %v1026 = vpop.permute.xlu0 %1025
      %1027 = vrot.lane.b32.xlu0 %v1014, 91
      %v1028 = vpop.permute.xlu0 %1027
      %vm1029 = vcmask 744448
      %v1030 = vsel %vm1029, %v1024, %v1026
      %v1031 = vsel %vm1029, %v1026, %v1028
      %v1033 = vsel %vm226, %v1019, 0
      %v1036 = vsel %vm230, %v1030, 0
      %v1039 = vsel %vm230, %v1031, 0
      %v1042 = vsel %vm230, %v1028, 0
      %1044 = vmatprep.subr.bf16.mxu0 %v1039
      %1045 = vmatpush1.bf16.msra.mxu0 %v1036
      %1046 = vmatprep.subr.bf16.mxu0 0
      %1047 = vmatpush1.bf16.msra.mxu0 0
      %1048 = vmatprep.subr.bf16.mxu0 0
      %1049 = vmatpush1.bf16.msra.mxu0 0
      %1050 = vmatprep.subr.bf16.mxu0 0
      %1051 = vmatpush1.bf16.msra.mxu0 0
      %1052 = vmatprep.subr.bf16.mxu0 0
      %1053 = vmatpush1.bf16.msra.mxu0 0
      %1054 = vmatprep.subr.bf16.mxu0 0
      %1055 = vmatpush1.bf16.msra.mxu0 0
      %1056 = vmatprep.subr.bf16.mxu0 0
      %1057 = vmatpush1.bf16.msra.mxu0 0
      %1058 = vmatprep.subr.bf16.mxu0 0
      %1059 = vmatpush1.bf16.msra.mxu0 0
      %1060 = vmatprep.subr.bf16.mxu0 0
      %1061 = vmatpush1.bf16.msra.mxu0 0
      %1062 = vmatprep.subr.bf16.mxu0 0
      %1063 = vmatpush1.bf16.msra.mxu0 0
      %1064 = vmatprep.subr.bf16.mxu0 0
      %1065 = vmatpush1.bf16.msra.mxu0 0
      %1066 = vmatprep.subr.bf16.mxu0 0
      %1067 = vmatpush1.bf16.msra.mxu0 0
      %1068 = vmatprep.subr.bf16.mxu0 0
      %1069 = vmatpush1.bf16.msra.mxu0 0
      %1070 = vmatprep.subr.bf16.mxu0 0
      %1071 = vmatpush1.bf16.msra.mxu0 0
      %1072 = vmatprep.subr.bf16.mxu0 0
      %1073 = vmatpush1.bf16.msra.mxu0 0
      %1074 = vmatprep.subr.bf16.mxu0 0
      %1075 = vmatpush1.bf16.msra.mxu0 0
      %1076 = vmatprep.mubr.bf16.mxu0 0
      %1077 = vmatmul.mubr.bf16.gmra.mrb[0].mxu0 %v1033
      %v1078 = vpop.f32.mrb[0].mxu0
      %v1079 = vadd.f32 0.0, %v1078
      %v1080 = vpop.f32.mrb[0].mxu0
      %v1081 = vadd.f32 0.0, %v1080
      %v1082 = vpop.f32.mrb[0].mxu0
      %v1083 = vpop.f32.mrb[0].mxu0
      %1084 = vdwg.mxu0
      %1085 = vmatprep.subr.bf16.mxu0 0
      %1086 = vmatpush1.bf16.msra.mxu0 %v1042
      %1087 = vmatprep.subr.bf16.mxu0 0
      %1088 = vmatpush1.bf16.msra.mxu0 0
      %1089 = vmatprep.subr.bf16.mxu0 0
      %1090 = vmatpush1.bf16.msra.mxu0 0
      %1091 = vmatprep.subr.bf16.mxu0 0
      %1092 = vmatpush1.bf16.msra.mxu0 0
      %1093 = vmatprep.subr.bf16.mxu0 0
      %1094 = vmatpush1.bf16.msra.mxu0 0
      %1095 = vmatprep.subr.bf16.mxu0 0
      %1096 = vmatpush1.bf16.msra.mxu0 0
      %1097 = vmatprep.subr.bf16.mxu0 0
      %1098 = vmatpush1.bf16.msra.mxu0 0
      %1099 = vmatprep.subr.bf16.mxu0 0
      %1100 = vmatpush1.bf16.msra.mxu0 0
      %1101 = vmatprep.subr.bf16.mxu0 0
      %1102 = vmatpush1.bf16.msra.mxu0 0
      %1103 = vmatprep.subr.bf16.mxu0 0
      %1104 = vmatpush1.bf16.msra.mxu0 0
      %1105 = vmatprep.subr.bf16.mxu0 0
      %1106 = vmatpush1.bf16.msra.mxu0 0
      %1107 = vmatprep.subr.bf16.mxu0 0
      %1108 = vmatpush1.bf16.msra.mxu0 0
      %1109 = vmatprep.subr.bf16.mxu0 0
      %1110 = vmatpush1.bf16.msra.mxu0 0
      %1111 = vmatprep.subr.bf16.mxu0 0
      %1112 = vmatpush1.bf16.msra.mxu0 0
      %1113 = vmatprep.subr.bf16.mxu0 0
      %1114 = vmatpush1.bf16.msra.mxu0 0
      %1115 = vmatprep.subr.bf16.mxu0 0
      %1116 = vmatpush1.bf16.msra.mxu0 0
      %1117 = vmatprep.mubr.bf16.mxu0 0
      %1118 = vmatmul.mubr.bf16.gmra.mrb[0].mxu0 %v1033
      %v1119 = vpop.f32.mrb[0].mxu0
      %v1120 = vadd.f32 0.0, %v1119
      %v1121 = vpop.f32.mrb[0].mxu0
      %v1122 = vpop.f32.mrb[0].mxu0
      %v1123 = vpop.f32.mrb[0].mxu0
      %1124 = vdwg.mxu0
      %v1125 = vadd.f32 %v1004, %v1079
      %v1126 = vadd.f32 %v1005, %v1081
      %v1127 = vadd.f32 %v1006, %v1120
      %v1128 = vld [vmem:[%s192] sm:$0xff]
      %v1129 = vld [vmem:[%s192 + $0x8] sm:$0xf]
      %v1131 = vcombine.high %v1128, %v1128
      %v1133 = vpack.c.bf16 %v1128, %v1128
      %v1134 = vpack.c.bf16 %v1131, %v1131
      %v1135 = vpack.c.bf16 %v1129, %v1129
      %v1136 = vld [vmem:[%s1 + $0x10] sm:$0x3]
      %1140 = vrot.lane.b32.xlu0 %v1133, 90
      %v1141 = vpop.permute.xlu0 %1140
      %1142 = vrot.lane.b32.xlu0 %v1134, 90
      %v1143 = vpop.permute.xlu0 %1142
      %1144 = vrot.lane.b32.xlu0 %v1135, 90
      %v1145 = vpop.permute.xlu0 %1144
      %vm1146 = vcmask 736256
      %v1147 = vsel %vm1146, %v1141, %v1143
      %v1148 = vsel %vm1146, %v1143, %v1145
      %v1150 = vsel %vm226, %v1136, 0
      %v1153 = vsel %vm230, %v1147, 0
      %v1156 = vsel %vm230, %v1148, 0
      %v1159 = vsel %vm230, %v1145, 0
      %1161 = vmatprep.subr.bf16.mxu0 %v1156
      %1162 = vmatpush1.bf16.msra.mxu0 %v1153
      %1163 = vmatprep.subr.bf16.mxu0 0
      %1164 = vmatpush1.bf16.msra.mxu0 0
      %1165 = vmatprep.subr.bf16.mxu0 0
      %1166 = vmatpush1.bf16.msra.mxu0 0
      %1167 = vmatprep.subr.bf16.mxu0 0
      %1168 = vmatpush1.bf16.msra.mxu0 0
      %1169 = vmatprep.subr.bf16.mxu0 0
      %1170 = vmatpush1.bf16.msra.mxu0 0
      %1171 = vmatprep.subr.bf16.mxu0 0
      %1172 = vmatpush1.bf16.msra.mxu0 0
      %1173 = vmatprep.subr.bf16.mxu0 0
      %1174 = vmatpush1.bf16.msra.mxu0 0
      %1175 = vmatprep.subr.bf16.mxu0 0
      %1176 = vmatpush1.bf16.msra.mxu0 0
      %1177 = vmatprep.subr.bf16.mxu0 0
      %1178 = vmatpush1.bf16.msra.mxu0 0
      %1179 = vmatprep.subr.bf16.mxu0 0
      %1180 = vmatpush1.bf16.msra.mxu0 0
      %1181 = vmatprep.subr.bf16.mxu0 0
      %1182 = vmatpush1.bf16.msra.mxu0 0
      %1183 = vmatprep.subr.bf16.mxu0 0
      %1184 = vmatpush1.bf16.msra.mxu0 0
      %1185 = vmatprep.subr.bf16.mxu0 0
      %1186 = vmatpush1.bf16.msra.mxu0 0
      %1187 = vmatprep.subr.bf16.mxu0 0
      %1188 = vmatpush1.bf16.msra.mxu0 0
      %1189 = vmatprep.subr.bf16.mxu0 0
      %1190 = vmatpush1.bf16.msra.mxu0 0
      %1191 = vmatprep.subr.bf16.mxu0 0
      %1192 = vmatpush1.bf16.msra.mxu0 0
      %1193 = vmatprep.mubr.bf16.mxu0 0
      %1194 = vmatmul.mubr.bf16.gmra.mrb[0].mxu0 %v1150
      %v1195 = vpop.f32.mrb[0].mxu0
      %v1196 = vadd.f32 0.0, %v1195
      %v1197 = vpop.f32.mrb[0].mxu0
      %v1198 = vadd.f32 0.0, %v1197
      %v1199 = vpop.f32.mrb[0].mxu0
      %v1200 = vpop.f32.mrb[0].mxu0
      %1201 = vdwg.mxu0
      %1202 = vmatprep.subr.bf16.mxu0 0
      %1203 = vmatpush1.bf16.msra.mxu0 %v1159
      %1204 = vmatprep.subr.bf16.mxu0 0
      %1205 = vmatpush1.bf16.msra.mxu0 0
      %1206 = vmatprep.subr.bf16.mxu0 0
      %1207 = vmatpush1.bf16.msra.mxu0 0
      %1208 = vmatprep.subr.bf16.mxu0 0
      %1209 = vmatpush1.bf16.msra.mxu0 0
      %1210 = vmatprep.subr.bf16.mxu0 0
      %1211 = vmatpush1.bf16.msra.mxu0 0
      %1212 = vmatprep.subr.bf16.mxu0 0
      %1213 = vmatpush1.bf16.msra.mxu0 0
      %1214 = vmatprep.subr.bf16.mxu0 0
      %1215 = vmatpush1.bf16.msra.mxu0 0
      %1216 = vmatprep.subr.bf16.mxu0 0
      %1217 = vmatpush1.bf16.msra.mxu0 0
      %1218 = vmatprep.subr.bf16.mxu0 0
      %1219 = vmatpush1.bf16.msra.mxu0 0
      %1220 = vmatprep.subr.bf16.mxu0 0
      %1221 = vmatpush1.bf16.msra.mxu0 0
      %1222 = vmatprep.subr.bf16.mxu0 0
      %1223 = vmatpush1.bf16.msra.mxu0 0
      %1224 = vmatprep.subr.bf16.mxu0 0
      %1225 = vmatpush1.bf16.msra.mxu0 0
      %1226 = vmatprep.subr.bf16.mxu0 0
      %1227 = vmatpush1.bf16.msra.mxu0 0
      %1228 = vmatprep.subr.bf16.mxu0 0
      %1229 = vmatpush1.bf16.msra.mxu0 0
      %1230 = vmatprep.subr.bf16.mxu0 0
      %1231 = vmatpush1.bf16.msra.mxu0 0
      %1232 = vmatprep.subr.bf16.mxu0 0
      %1233 = vmatpush1.bf16.msra.mxu0 0
      %1234 = vmatprep.mubr.bf16.mxu0 0
      %1235 = vmatmul.mubr.bf16.gmra.mrb[0].mxu0 %v1150
      %v1236 = vpop.f32.mrb[0].mxu0
      %v1237 = vadd.f32 0.0, %v1236
      %v1238 = vpop.f32.mrb[0].mxu0
      %v1239 = vpop.f32.mrb[0].mxu0
      %v1240 = vpop.f32.mrb[0].mxu0
      %1241 = vdwg.mxu0
      %v1242 = vadd.f32 %v1125, %v1196
      %v1243 = vadd.f32 %v1126, %v1198
      %v1244 = vadd.f32 %v1127, %v1237
      %v1246 = vlaneseq
      %v1247 = vshrl.u32 %v1246, 7
      %v1248 = vsub.s32 0, %v1247
      %v1249 = vrot.slane %v199, %v1248
      %v1250 = vlaneseq
      %v1251 = vshrl.u32 %v1250, 7
      %v1252 = vsub.s32 1, %v1251
      %v1253 = vrot.slane %v199, %v1252
      %v1254 = vlaneseq
      %v1255 = vshrl.u32 %v1254, 7
      %v1256 = vsub.s32 2, %v1255
      %v1257 = vrot.slane %v199, %v1256
      %v1261 = vmul.f32 %v1242, %v1249
      %v1262 = vmul.f32 %v1243, %v1253
      %v1263 = vmul.f32 %v1244, %v1257
      %vm1264 = vcmask 1043456
      %v1265 = vsel %vm1264, %v1261, 0.0
      %v1266 = vsel %vm1264, %v1262, 0.0
      %v1267 = vadd.f32 %v1265, %v1266
      %vm1268 = vcmask 257024
      %v1269 = vsel %vm1268, %v1263, 0.0
      %v1270 = vadd.f32 %v1267, %v1269
      %1271 = vadd.xlane.f32.xlu0 %v1270
      %v1272 = vpop.xlane.xlu0 %1271
      %v1273 = vmul.f32 %v1242, %v1242
      %v1274 = vmul.f32 %v1243, %v1243
      %v1275 = vmul.f32 %v1244, %v1244
      %v1276 = vmul.f32 %v1273, %v1249
      %v1277 = vmul.f32 %v1274, %v1253
      %v1278 = vmul.f32 %v1275, %v1257
      %v1279 = vsel %vm1264, %v1276, 0.0
      %v1280 = vsel %vm1264, %v1277, 0.0
      %v1281 = vadd.f32 %v1279, %v1280
      %v1282 = vsel %vm1268, %v1278, 0.0
      %v1283 = vadd.f32 %v1281, %v1282
      %1284 = vadd.xlane.f32.xlu0 %v1283
      %v1285 = vpop.xlane.xlu0 %1284
      %v1286 = vmul.f32 %v1272, 0.00390625
      %v1287 = vmul.f32 %v1285, 0.00390625
      %v1288 = vmul.f32 %v1286, %v1286
      %v1289 = vsub.f32 %v1287, %v1288
      %v1290 = vmax.f32 %v1289, 0.0
      %v1291 = vadd.f32 %v1290, 1e-05
      %v1292 = vrsqrt.pop %v1291
      %v1293 = vsub.f32 %v1242, %v1286
      %v1294 = vsub.f32 %v1243, %v1286
      %v1295 = vsub.f32 %v1244, %v1286
      %v1296 = vmul.f32 %v1293, %v1292
      %v1297 = vmul.f32 %v1294, %v1292
      %v1298 = vmul.f32 %v1295, %v1292
      %v1299 = vmax.f32 %v1296, 0.0
      %v1300 = vmax.f32 %v1297, 0.0
      %v1301 = vmax.f32 %v1298, 0.0
      %1302 = vst [vmem:[#allocation2] sm:$0xff] 0.0
      %vm1303 = vcmask 568320
      %1304 = vst.msk [vmem:[#allocation2 + $0x8] sm:$0xf] %vm1303, 0.0
      %v1308 = vcombine.low %v1299, %v1300
      %1309 = vrot.lane.b32.xlu0 %v1308, 19
      %v1310 = vpop.permute.xlu0 %1309
      %1311 = vrot.lane.b32.xlu0 %v1301, 19
      %v1312 = vpop.permute.xlu0 %1311
      %v1313 = vrot.slane %v1310, 4
      %vm1314 = vcmask 154624
      %v1315 = vsel %vm1314, %v1313, %v1310
      %v1316 = vsel %vm1314, %v1313, %v1312
      %vm1319 = vcmask 1043608
      %vm1320 = vcmask 1047556
      %vm1321 = vmor %vm1320, %vm1319
      %1322 = vst.msk [vmem:[#allocation2] sm:$0xff] %vm1321, %v1315
      %vm1323 = vcmask 412672
      %1324 = vst.msk [vmem:[#allocation2 + $0x8] sm:$0xf] %vm1323, %v1316
      %1325 = vrot.lane.b32.xlu0 %v1299, 111
      %v1326 = vpop.permute.xlu0 %1325
      %vm1328 = vcmask 134152
      %1329 = vst.msk [vmem:[#allocation2] sm:$0xf] %vm1328, %v1326
      %v1330 = vcombine.low %v1300, %v1301
      %1331 = vrot.lane.b32.xlu0 %v1330, 55
      %v1332 = vpop.permute.xlu0 %1331
      %v1333 = vrot.slane %v1332, 4
      %vm1334 = vcmask 449536
      %v1335 = vsel %vm1334, %v1332, %v1333
      %vm1337 = vcmask 544152
      %1338 = vst.msk [vmem:[#allocation2 + $0x8] sm:$0xf] %vm1337, %v1335
      %1339 = vrot.lane.b32.xlu0 %v1299, 17
      %v1340 = vpop.permute.xlu0 %1339
      %vm1342 = vcmask 150672
      %1343 = vst.msk [vmem:[#allocation2] sm:$0xf] %vm1342, %v1340
      %1344 = vrot.lane.b32.xlu0 %v1299, 21
      %v1345 = vpop.permute.xlu0 %1344
      %vm1347 = vcmask 290072
      %1348 = vst.msk [vmem:[#allocation2] sm:$0xf] %vm1347, %v1345
      %vm1349 = vcmask 298272
      %1350 = vst.msk [vmem:[#allocation2] sm:$0xf] %vm1349, %v1340
      %vm1351 = vcmask 437672
      %1352 = vst.msk [vmem:[#allocation2] sm:$0xf] %vm1351, %v1345
      %vm1353 = vcmask 445872
      %1354 = vst.msk [vmem:[#allocation2] sm:$0xf] %vm1353, %v1340
      %vm1355 = vcmask 585272
      %1356 = vst.msk [vmem:[#allocation2] sm:$0xf] %vm1355, %v1345
      %vm1357 = vcmask 593472
      %1358 = vst.msk [vmem:[#allocation2] sm:$0xf] %vm1357, %v1340
      %vm1359 = vcmask 732872
      %1360 = vst.msk [vmem:[#allocation2] sm:$0xf] %vm1359, %v1345
      %vm1361 = vcmask 741072
      %1362 = vst.msk [vmem:[#allocation2] sm:$0xf] %vm1361, %v1340
      %vm1363 = vcmask 880472
      %1364 = vst.msk [vmem:[#allocation2] sm:$0xf] %vm1363, %v1345
      %vm1365 = vcmask 888672
      %1366 = vst.msk [vmem:[#allocation2] sm:$0xf] %vm1365, %v1340
      %vm1367 = vcmask 1028072
      %1368 = vst.msk [vmem:[#allocation2] sm:$0xf] %vm1367, %v1345
      %vm1369 = vcmask 1036272
      %1370 = vst.msk [vmem:[#allocation2] sm:$0xf] %vm1369, %v1340
      %vm1371 = vcmask 126072
      %1372 = vst.msk [vmem:[#allocation2 + $0x4] sm:$0xf] %vm1371, %v1345
      %vm1373 = vcmask 134272
      %1374 = vst.msk [vmem:[#allocation2 + $0x4] sm:$0xf] %vm1373, %v1340
      %1375 = vrot.lane.b32.xlu0 %v1300, 21
      %v1376 = vpop.permute.xlu0 %1375
      %vm1378 = vcmask 273672
      %1379 = vst.msk [vmem:[#allocation2 + $0x4] sm:$0xf] %vm1378, %v1376
      %1380 = vrot.lane.b32.xlu0 %v1300, 17
      %v1381 = vpop.permute.xlu0 %1380
      %vm1383 = vcmask 281872
      %1384 = vst.msk [vmem:[#allocation2 + $0x4] sm:$0xf] %vm1383, %v1381
      %vm1385 = vcmask 421272
      %1386 = vst.msk [vmem:[#allocation2 + $0x4] sm:$0xf] %vm1385, %v1376
      %vm1387 = vcmask 429472
      %1388 = vst.msk [vmem:[#allocation2 + $0x4] sm:$0xf] %vm1387, %v1381
      %vm1389 = vcmask 568872
      %1390 = vst.msk [vmem:[#allocation2 + $0x4] sm:$0xf] %vm1389, %v1376
      %vm1391 = vcmask 577072
      %1392 = vst.msk [vmem:[#allocation2 + $0x4] sm:$0xf] %vm1391, %v1381
      %vm1393 = vcmask 716472
      %1394 = vst.msk [vmem:[#allocation2 + $0x4] sm:$0xf] %vm1393, %v1376
      %vm1395 = vcmask 724672
      %1396 = vst.msk [vmem:[#allocation2 + $0x4] sm:$0xf] %vm1395, %v1381
      %vm1397 = vcmask 864072
      %1398 = vst.msk [vmem:[#allocation2 + $0x4] sm:$0xf] %vm1397, %v1376
      %vm1399 = vcmask 872272
      %1400 = vst.msk [vmem:[#allocation2 + $0x4] sm:$0xf] %vm1399, %v1381
      %vm1401 = vcmask 1011672
      %1402 = vst.msk [vmem:[#allocation2 + $0x4] sm:$0xf] %vm1401, %v1376
      %vm1403 = vcmask 1019872
      %1404 = vst.msk [vmem:[#allocation2 + $0x4] sm:$0xf] %vm1403, %v1381
      %vm1405 = vcmask 109672
      %1406 = vst.msk [vmem:[#allocation2 + $0x8] sm:$0xf] %vm1405, %v1376
      %vm1407 = vcmask 117872
      %1408 = vst.msk [vmem:[#allocation2 + $0x8] sm:$0xf] %vm1407, %v1381
      %1409 = vrot.lane.b32.xlu0 %v1301, 21
      %v1410 = vpop.permute.xlu0 %1409
      %vm1412 = vcmask 257272
      %1413 = vst.msk [vmem:[#allocation2 + $0x8] sm:$0xf] %vm1412, %v1410
      %1414 = vrot.lane.b32.xlu0 %v1301, 17
      %v1415 = vpop.permute.xlu0 %1414
      %vm1417 = vcmask 265472
      %1418 = vst.msk [vmem:[#allocation2 + $0x8] sm:$0xf] %vm1417, %v1415
      %vm1419 = vcmask 404872
      %1420 = vst.msk [vmem:[#allocation2 + $0x8] sm:$0xf] %vm1419, %v1410
      %1421 = vrot.lane.b32.xlu0 %v1299, 109
      %v1422 = vpop.permute.xlu0 %1421
      %vm1424 = vcmask 3072
      %1425 = vst.msk [vmem:[#allocation2] sm:$0xf] %vm1424, %v1422
      %1426 = vrot.lane.b32.xlu0 %v1299, 113
      %v1427 = vpop.permute.xlu0 %1426
      %vm1429 = vcmask 142472
      %1430 = vst.msk [vmem:[#allocation2] sm:$0xf] %vm1429, %v1427
      %1431 = vrot.lane.b32.xlu0 %v1300, 53
      %v1432 = vpop.permute.xlu0 %1431
      %vm1434 = vcmask 413072
      %1435 = vst.msk [vmem:[#allocation2 + $0x8] sm:$0xf] %vm1434, %v1432
      %1436 = vrot.lane.b32.xlu0 %v1301, 57
      %v1437 = vpop.permute.xlu0 %1436
      %vm1439 = vcmask 552472
      %1440 = vst.msk [vmem:[#allocation2 + $0x8] sm:$0xf] %vm1439, %v1437
      %v1441 = vld [vmem:[#allocation2] sm:$0xff]
      %v1442 = vld [vmem:[#allocation2 + $0x8] sm:$0xf]
      %v1444 = vcombine.high %v1441, %v1441
      %v1446 = vpack.c.bf16 %v1441, %v1441
      %v1447 = vpack.c.bf16 %v1444, %v1444
      %v1448 = vpack.c.bf16 %v1442, %v1442
      %v1449 = vld [vmem:[%s2] sm:$0x3]
      %v1450 = vld [vmem:[%s2] sm:$0xc]
      %v1452 = vunpack.c.l.b16 %v1450
      %v1453 = vpack.c.b16 %v1452, %v1452
      %v1454 = vrot.slane %v1453, 2
      %1458 = vrot.lane.b32.xlu0 %v1446, 127
      %v1459 = vpop.permute.xlu0 %1458
      %1460 = vrot.lane.b32.xlu0 %v1447, 127
      %v1461 = vpop.permute.xlu0 %1460
      %1462 = vrot.lane.b32.xlu0 %v1448, 127
      %v1463 = vpop.permute.xlu0 %1462
      %v1464 = vsel %vm223, %v1459, %v1461
      %v1465 = vsel %vm223, %v1461, %v1463
      %v1467 = vsel %vm226, %v1454, 0
      %v1470 = vsel %vm230, %v1464, 0
      %v1473 = vsel %vm230, %v1465, 0
      %v1476 = vsel %vm230, %v1463, 0
      %1478 = vmatprep.subr.bf16.mxu0 %v1473
      %1479 = vmatpush1.bf16.msra.mxu0 %v1470
      %1480 = vmatprep.subr.bf16.mxu0 0
      %1481 = vmatpush1.bf16.msra.mxu0 0
      %1482 = vmatprep.subr.bf16.mxu0 0
      %1483 = vmatpush1.bf16.msra.mxu0 0
      %1484 = vmatprep.subr.bf16.mxu0 0
      %1485 = vmatpush1.bf16.msra.mxu0 0
      %1486 = vmatprep.subr.bf16.mxu0 0
      %1487 = vmatpush1.bf16.msra.mxu0 0
      %1488 = vmatprep.subr.bf16.mxu0 0
      %1489 = vmatpush1.bf16.msra.mxu0 0
      %1490 = vmatprep.subr.bf16.mxu0 0
      %1491 = vmatpush1.bf16.msra.mxu0 0
      %1492 = vmatprep.subr.bf16.mxu0 0
      %1493 = vmatpush1.bf16.msra.mxu0 0
      %1494 = vmatprep.subr.bf16.mxu0 0
      %1495 = vmatpush1.bf16.msra.mxu0 0
      %1496 = vmatprep.subr.bf16.mxu0 0
      %1497 = vmatpush1.bf16.msra.mxu0 0
      %1498 = vmatprep.subr.bf16.mxu0 0
      %1499 = vmatpush1.bf16.msra.mxu0 0
      %1500 = vmatprep.subr.bf16.mxu0 0
      %1501 = vmatpush1.bf16.msra.mxu0 0
      %1502 = vmatprep.subr.bf16.mxu0 0
      %1503 = vmatpush1.bf16.msra.mxu0 0
      %1504 = vmatprep.subr.bf16.mxu0 0
      %1505 = vmatpush1.bf16.msra.mxu0 0
      %1506 = vmatprep.subr.bf16.mxu0 0
      %1507 = vmatpush1.bf16.msra.mxu0 0
      %1508 = vmatprep.subr.bf16.mxu0 0
      %1509 = vmatpush1.bf16.msra.mxu0 0
      %1510 = vmatprep.mubr.bf16.mxu0 0
      %1511 = vmatmul.mubr.bf16.gmra.mrb[0].mxu0 %v1467
      %v1512 = vpop.f32.mrb[0].mxu0
      %v1513 = vadd.f32 0.0, %v1512
      %v1514 = vpop.f32.mrb[0].mxu0
      %v1515 = vadd.f32 0.0, %v1514
      %v1516 = vpop.f32.mrb[0].mxu0
      %v1517 = vpop.f32.mrb[0].mxu0
      %1518 = vdwg.mxu0
      %1519 = vmatprep.subr.bf16.mxu0 0
      %1520 = vmatpush1.bf16.msra.mxu0 %v1476
      %1521 = vmatprep.subr.bf16.mxu0 0
      %1522 = vmatpush1.bf16.msra.mxu0 0
      %1523 = vmatprep.subr.bf16.mxu0 0
      %1524 = vmatpush1.bf16.msra.mxu0 0
      %1525 = vmatprep.subr.bf16.mxu0 0
      %1526 = vmatpush1.bf16.msra.mxu0 0
      %1527 = vmatprep.subr.bf16.mxu0 0
      %1528 = vmatpush1.bf16.msra.mxu0 0
      %1529 = vmatprep.subr.bf16.mxu0 0
      %1530 = vmatpush1.bf16.msra.mxu0 0
      %1531 = vmatprep.subr.bf16.mxu0 0
      %1532 = vmatpush1.bf16.msra.mxu0 0
      %1533 = vmatprep.subr.bf16.mxu0 0
      %1534 = vmatpush1.bf16.msra.mxu0 0
      %1535 = vmatprep.subr.bf16.mxu0 0
      %1536 = vmatpush1.bf16.msra.mxu0 0
      %1537 = vmatprep.subr.bf16.mxu0 0
      %1538 = vmatpush1.bf16.msra.mxu0 0
      %1539 = vmatprep.subr.bf16.mxu0 0
      %1540 = vmatpush1.bf16.msra.mxu0 0
      %1541 = vmatprep.subr.bf16.mxu0 0
      %1542 = vmatpush1.bf16.msra.mxu0 0
      %1543 = vmatprep.subr.bf16.mxu0 0
      %1544 = vmatpush1.bf16.msra.mxu0 0
      %1545 = vmatprep.subr.bf16.mxu0 0
      %1546 = vmatpush1.bf16.msra.mxu0 0
      %1547 = vmatprep.subr.bf16.mxu0 0
      %1548 = vmatpush1.bf16.msra.mxu0 0
      %1549 = vmatprep.subr.bf16.mxu0 0
      %1550 = vmatpush1.bf16.msra.mxu0 0
      %1551 = vmatprep.mubr.bf16.mxu0 0
      %1552 = vmatmul.mubr.bf16.gmra.mrb[0].mxu0 %v1467
      %v1553 = vpop.f32.mrb[0].mxu0
      %v1554 = vadd.f32 0.0, %v1553
      %v1555 = vpop.f32.mrb[0].mxu0
      %v1556 = vpop.f32.mrb[0].mxu0
      %v1557 = vpop.f32.mrb[0].mxu0
      %1558 = vdwg.mxu0
      %v1560 = vsel %vm226, %v1449, 0
      %v1563 = vsel %vm230, %v1446, 0
      %v1566 = vsel %vm230, %v1447, 0
      %v1569 = vsel %vm230, %v1448, 0
      %1571 = vmatprep.subr.bf16.mxu0 %v1566
      %1572 = vmatpush1.bf16.msra.mxu0 %v1563
      %1573 = vmatprep.subr.bf16.mxu0 0
      %1574 = vmatpush1.bf16.msra.mxu0 0
      %1575 = vmatprep.subr.bf16.mxu0 0
      %1576 = vmatpush1.bf16.msra.mxu0 0
      %1577 = vmatprep.subr.bf16.mxu0 0
      %1578 = vmatpush1.bf16.msra.mxu0 0
      %1579 = vmatprep.subr.bf16.mxu0 0
      %1580 = vmatpush1.bf16.msra.mxu0 0
      %1581 = vmatprep.subr.bf16.mxu0 0
      %1582 = vmatpush1.bf16.msra.mxu0 0
      %1583 = vmatprep.subr.bf16.mxu0 0
      %1584 = vmatpush1.bf16.msra.mxu0 0
      %1585 = vmatprep.subr.bf16.mxu0 0
      %1586 = vmatpush1.bf16.msra.mxu0 0
      %1587 = vmatprep.subr.bf16.mxu0 0
      %1588 = vmatpush1.bf16.msra.mxu0 0
      %1589 = vmatprep.subr.bf16.mxu0 0
      %1590 = vmatpush1.bf16.msra.mxu0 0
      %1591 = vmatprep.subr.bf16.mxu0 0
      %1592 = vmatpush1.bf16.msra.mxu0 0
      %1593 = vmatprep.subr.bf16.mxu0 0
      %1594 = vmatpush1.bf16.msra.mxu0 0
      %1595 = vmatprep.subr.bf16.mxu0 0
      %1596 = vmatpush1.bf16.msra.mxu0 0
      %1597 = vmatprep.subr.bf16.mxu0 0
      %1598 = vmatpush1.bf16.msra.mxu0 0
      %1599 = vmatprep.subr.bf16.mxu0 0
      %1600 = vmatpush1.bf16.msra.mxu0 0
      %1601 = vmatprep.subr.bf16.mxu0 0
      %1602 = vmatpush1.bf16.msra.mxu0 0
      %1603 = vmatprep.mubr.bf16.mxu0 0
      %1604 = vmatmul.mubr.bf16.gmra.mrb[0].mxu0 %v1560
      %v1605 = vpop.f32.mrb[0].mxu0
      %v1606 = vadd.f32 %v1513, %v1605
      %v1607 = vpop.f32.mrb[0].mxu0
      %v1608 = vadd.f32 %v1515, %v1607
      %v1609 = vpop.f32.mrb[0].mxu0
      %v1610 = vpop.f32.mrb[0].mxu0
      %1611 = vdwg.mxu0
      %1612 = vmatprep.subr.bf16.mxu0 0
      %1613 = vmatpush1.bf16.msra.mxu0 %v1569
      %1614 = vmatprep.subr.bf16.mxu0 0
      %1615 = vmatpush1.bf16.msra.mxu0 0
      %1616 = vmatprep.subr.bf16.mxu0 0
      %1617 = vmatpush1.bf16.msra.mxu0 0
      %1618 = vmatprep.subr.bf16.mxu0 0
      %1619 = vmatpush1.bf16.msra.mxu0 0
      %1620 = vmatprep.subr.bf16.mxu0 0
      %1621 = vmatpush1.bf16.msra.mxu0 0
      %1622 = vmatprep.subr.bf16.mxu0 0
      %1623 = vmatpush1.bf16.msra.mxu0 0
      %1624 = vmatprep.subr.bf16.mxu0 0
      %1625 = vmatpush1.bf16.msra.mxu0 0
      %1626 = vmatprep.subr.bf16.mxu0 0
      %1627 = vmatpush1.bf16.msra.mxu0 0
      %1628 = vmatprep.subr.bf16.mxu0 0
      %1629 = vmatpush1.bf16.msra.mxu0 0
      %1630 = vmatprep.subr.bf16.mxu0 0
      %1631 = vmatpush1.bf16.msra.mxu0 0
      %1632 = vmatprep.subr.bf16.mxu0 0
      %1633 = vmatpush1.bf16.msra.mxu0 0
      %1634 = vmatprep.subr.bf16.mxu0 0
      %1635 = vmatpush1.bf16.msra.mxu0 0
      %1636 = vmatprep.subr.bf16.mxu0 0
      %1637 = vmatpush1.bf16.msra.mxu0 0
      %1638 = vmatprep.subr.bf16.mxu0 0
      %1639 = vmatpush1.bf16.msra.mxu0 0
      %1640 = vmatprep.subr.bf16.mxu0 0
      %1641 = vmatpush1.bf16.msra.mxu0 0
      %1642 = vmatprep.subr.bf16.mxu0 0
      %1643 = vmatpush1.bf16.msra.mxu0 0
      %1644 = vmatprep.mubr.bf16.mxu0 0
      %1645 = vmatmul.mubr.bf16.gmra.mrb[0].mxu0 %v1560
      %v1646 = vpop.f32.mrb[0].mxu0
      %v1647 = vadd.f32 %v1554, %v1646
      %v1648 = vpop.f32.mrb[0].mxu0
      %v1649 = vpop.f32.mrb[0].mxu0
      %v1650 = vpop.f32.mrb[0].mxu0
      %1651 = vdwg.mxu0
      %v1652 = vld [vmem:[#allocation2] sm:$0xff]
      %v1653 = vld [vmem:[#allocation2 + $0x8] sm:$0xf]
      %v1655 = vcombine.high %v1652, %v1652
      %v1657 = vpack.c.bf16 %v1652, %v1652
      %v1658 = vpack.c.bf16 %v1655, %v1655
      %v1659 = vpack.c.bf16 %v1653, %v1653
      %v1660 = vld [vmem:[%s2 + $0x4] sm:$0x3]
      %1664 = vrot.lane.b32.xlu0 %v1657, 126
      %v1665 = vpop.permute.xlu0 %1664
      %1666 = vrot.lane.b32.xlu0 %v1658, 126
      %v1667 = vpop.permute.xlu0 %1666
      %1668 = vrot.lane.b32.xlu0 %v1659, 126
      %v1669 = vpop.permute.xlu0 %1668
      %v1670 = vsel %vm432, %v1665, %v1667
      %v1671 = vsel %vm432, %v1667, %v1669
      %v1673 = vsel %vm226, %v1660, 0
      %v1676 = vsel %vm230, %v1670, 0
      %v1679 = vsel %vm230, %v1671, 0
      %v1682 = vsel %vm230, %v1669, 0
      %1684 = vmatprep.subr.bf16.mxu0 %v1679
      %1685 = vmatpush1.bf16.msra.mxu0 %v1676
      %1686 = vmatprep.subr.bf16.mxu0 0
      %1687 = vmatpush1.bf16.msra.mxu0 0
      %1688 = vmatprep.subr.bf16.mxu0 0
      %1689 = vmatpush1.bf16.msra.mxu0 0
      %1690 = vmatprep.subr.bf16.mxu0 0
      %1691 = vmatpush1.bf16.msra.mxu0 0
      %1692 = vmatprep.subr.bf16.mxu0 0
      %1693 = vmatpush1.bf16.msra.mxu0 0
      %1694 = vmatprep.subr.bf16.mxu0 0
      %1695 = vmatpush1.bf16.msra.mxu0 0
      %1696 = vmatprep.subr.bf16.mxu0 0
      %1697 = vmatpush1.bf16.msra.mxu0 0
      %1698 = vmatprep.subr.bf16.mxu0 0
      %1699 = vmatpush1.bf16.msra.mxu0 0
      %1700 = vmatprep.subr.bf16.mxu0 0
      %1701 = vmatpush1.bf16.msra.mxu0 0
      %1702 = vmatprep.subr.bf16.mxu0 0
      %1703 = vmatpush1.bf16.msra.mxu0 0
      %1704 = vmatprep.subr.bf16.mxu0 0
      %1705 = vmatpush1.bf16.msra.mxu0 0
      %1706 = vmatprep.subr.bf16.mxu0 0
      %1707 = vmatpush1.bf16.msra.mxu0 0
      %1708 = vmatprep.subr.bf16.mxu0 0
      %1709 = vmatpush1.bf16.msra.mxu0 0
      %1710 = vmatprep.subr.bf16.mxu0 0
      %1711 = vmatpush1.bf16.msra.mxu0 0
      %1712 = vmatprep.subr.bf16.mxu0 0
      %1713 = vmatpush1.bf16.msra.mxu0 0
      %1714 = vmatprep.subr.bf16.mxu0 0
      %1715 = vmatpush1.bf16.msra.mxu0 0
      %1716 = vmatprep.mubr.bf16.mxu0 0
      %1717 = vmatmul.mubr.bf16.gmra.mrb[0].mxu0 %v1673
      %v1718 = vpop.f32.mrb[0].mxu0
      %v1719 = vadd.f32 0.0, %v1718
      %v1720 = vpop.f32.mrb[0].mxu0
      %v1721 = vadd.f32 0.0, %v1720
      %v1722 = vpop.f32.mrb[0].mxu0
      %v1723 = vpop.f32.mrb[0].mxu0
      %1724 = vdwg.mxu0
      %1725 = vmatprep.subr.bf16.mxu0 0
      %1726 = vmatpush1.bf16.msra.mxu0 %v1682
      %1727 = vmatprep.subr.bf16.mxu0 0
      %1728 = vmatpush1.bf16.msra.mxu0 0
      %1729 = vmatprep.subr.bf16.mxu0 0
      %1730 = vmatpush1.bf16.msra.mxu0 0
      %1731 = vmatprep.subr.bf16.mxu0 0
      %1732 = vmatpush1.bf16.msra.mxu0 0
      %1733 = vmatprep.subr.bf16.mxu0 0
      %1734 = vmatpush1.bf16.msra.mxu0 0
      %1735 = vmatprep.subr.bf16.mxu0 0
      %1736 = vmatpush1.bf16.msra.mxu0 0
      %1737 = vmatprep.subr.bf16.mxu0 0
      %1738 = vmatpush1.bf16.msra.mxu0 0
      %1739 = vmatprep.subr.bf16.mxu0 0
      %1740 = vmatpush1.bf16.msra.mxu0 0
      %1741 = vmatprep.subr.bf16.mxu0 0
      %1742 = vmatpush1.bf16.msra.mxu0 0
      %1743 = vmatprep.subr.bf16.mxu0 0
      %1744 = vmatpush1.bf16.msra.mxu0 0
      %1745 = vmatprep.subr.bf16.mxu0 0
      %1746 = vmatpush1.bf16.msra.mxu0 0
      %1747 = vmatprep.subr.bf16.mxu0 0
      %1748 = vmatpush1.bf16.msra.mxu0 0
      %1749 = vmatprep.subr.bf16.mxu0 0
      %1750 = vmatpush1.bf16.msra.mxu0 0
      %1751 = vmatprep.subr.bf16.mxu0 0
      %1752 = vmatpush1.bf16.msra.mxu0 0
      %1753 = vmatprep.subr.bf16.mxu0 0
      %1754 = vmatpush1.bf16.msra.mxu0 0
      %1755 = vmatprep.subr.bf16.mxu0 0
      %1756 = vmatpush1.bf16.msra.mxu0 0
      %1757 = vmatprep.mubr.bf16.mxu0 0
      %1758 = vmatmul.mubr.bf16.gmra.mrb[0].mxu0 %v1673
      %v1759 = vpop.f32.mrb[0].mxu0
      %v1760 = vadd.f32 0.0, %v1759
      %v1761 = vpop.f32.mrb[0].mxu0
      %v1762 = vpop.f32.mrb[0].mxu0
      %v1763 = vpop.f32.mrb[0].mxu0
      %1764 = vdwg.mxu0
      %v1765 = vadd.f32 %v1606, %v1719
      %v1766 = vadd.f32 %v1608, %v1721
      %v1767 = vadd.f32 %v1647, %v1760
      %v1768 = vld [vmem:[#allocation2] sm:$0xff]
      %v1769 = vld [vmem:[#allocation2 + $0x8] sm:$0xf]
      %v1771 = vcombine.high %v1768, %v1768
      %v1773 = vpack.c.bf16 %v1768, %v1768
      %v1774 = vpack.c.bf16 %v1771, %v1771
      %v1775 = vpack.c.bf16 %v1769, %v1769
      %v1776 = vld [vmem:[%s2 + $0x4] sm:$0xc]
      %v1778 = vunpack.c.l.b16 %v1776
      %v1779 = vpack.c.b16 %v1778, %v1778
      %v1780 = vrot.slane %v1779, 2
      %1784 = vrot.lane.b32.xlu0 %v1773, 110
      %v1785 = vpop.permute.xlu0 %1784
      %1786 = vrot.lane.b32.xlu0 %v1774, 110
      %v1787 = vpop.permute.xlu0 %1786
      %1788 = vrot.lane.b32.xlu0 %v1775, 110
      %v1789 = vpop.permute.xlu0 %1788
      %v1790 = vsel %vm553, %v1785, %v1787
      %v1791 = vsel %vm553, %v1787, %v1789
      %v1793 = vsel %vm226, %v1780, 0
      %v1796 = vsel %vm230, %v1790, 0
      %v1799 = vsel %vm230, %v1791, 0
      %v1802 = vsel %vm230, %v1789, 0
      %1804 = vmatprep.subr.bf16.mxu0 %v1799
      %1805 = vmatpush1.bf16.msra.mxu0 %v1796
      %1806 = vmatprep.subr.bf16.mxu0 0
      %1807 = vmatpush1.bf16.msra.mxu0 0
      %1808 = vmatprep.subr.bf16.mxu0 0
      %1809 = vmatpush1.bf16.msra.mxu0 0
      %1810 = vmatprep.subr.bf16.mxu0 0
      %1811 = vmatpush1.bf16.msra.mxu0 0
      %1812 = vmatprep.subr.bf16.mxu0 0
      %1813 = vmatpush1.bf16.msra.mxu0 0
      %1814 = vmatprep.subr.bf16.mxu0 0
      %1815 = vmatpush1.bf16.msra.mxu0 0
      %1816 = vmatprep.subr.bf16.mxu0 0
      %1817 = vmatpush1.bf16.msra.mxu0 0
      %1818 = vmatprep.subr.bf16.mxu0 0
      %1819 = vmatpush1.bf16.msra.mxu0 0
      %1820 = vmatprep.subr.bf16.mxu0 0
      %1821 = vmatpush1.bf16.msra.mxu0 0
      %1822 = vmatprep.subr.bf16.mxu0 0
      %1823 = vmatpush1.bf16.msra.mxu0 0
      %1824 = vmatprep.subr.bf16.mxu0 0
      %1825 = vmatpush1.bf16.msra.mxu0 0
      %1826 = vmatprep.subr.bf16.mxu0 0
      %1827 = vmatpush1.bf16.msra.mxu0 0
      %1828 = vmatprep.subr.bf16.mxu0 0
      %1829 = vmatpush1.bf16.msra.mxu0 0
      %1830 = vmatprep.subr.bf16.mxu0 0
      %1831 = vmatpush1.bf16.msra.mxu0 0
      %1832 = vmatprep.subr.bf16.mxu0 0
      %1833 = vmatpush1.bf16.msra.mxu0 0
      %1834 = vmatprep.subr.bf16.mxu0 0
      %1835 = vmatpush1.bf16.msra.mxu0 0
      %1836 = vmatprep.mubr.bf16.mxu0 0
      %1837 = vmatmul.mubr.bf16.gmra.mrb[0].mxu0 %v1793
      %v1838 = vpop.f32.mrb[0].mxu0
      %v1839 = vadd.f32 0.0, %v1838
      %v1840 = vpop.f32.mrb[0].mxu0
      %v1841 = vadd.f32 0.0, %v1840
      %v1842 = vpop.f32.mrb[0].mxu0
      %v1843 = vpop.f32.mrb[0].mxu0
      %1844 = vdwg.mxu0
      %1845 = vmatprep.subr.bf16.mxu0 0
      %1846 = vmatpush1.bf16.msra.mxu0 %v1802
      %1847 = vmatprep.subr.bf16.mxu0 0
      %1848 = vmatpush1.bf16.msra.mxu0 0
      %1849 = vmatprep.subr.bf16.mxu0 0
      %1850 = vmatpush1.bf16.msra.mxu0 0
      %1851 = vmatprep.subr.bf16.mxu0 0
      %1852 = vmatpush1.bf16.msra.mxu0 0
      %1853 = vmatprep.subr.bf16.mxu0 0
      %1854 = vmatpush1.bf16.msra.mxu0 0
      %1855 = vmatprep.subr.bf16.mxu0 0
      %1856 = vmatpush1.bf16.msra.mxu0 0
      %1857 = vmatprep.subr.bf16.mxu0 0
      %1858 = vmatpush1.bf16.msra.mxu0 0
      %1859 = vmatprep.subr.bf16.mxu0 0
      %1860 = vmatpush1.bf16.msra.mxu0 0
      %1861 = vmatprep.subr.bf16.mxu0 0
      %1862 = vmatpush1.bf16.msra.mxu0 0
      %1863 = vmatprep.subr.bf16.mxu0 0
      %1864 = vmatpush1.bf16.msra.mxu0 0
      %1865 = vmatprep.subr.bf16.mxu0 0
      %1866 = vmatpush1.bf16.msra.mxu0 0
      %1867 = vmatprep.subr.bf16.mxu0 0
      %1868 = vmatpush1.bf16.msra.mxu0 0
      %1869 = vmatprep.subr.bf16.mxu0 0
      %1870 = vmatpush1.bf16.msra.mxu0 0
      %1871 = vmatprep.subr.bf16.mxu0 0
      %1872 = vmatpush1.bf16.msra.mxu0 0
      %1873 = vmatprep.subr.bf16.mxu0 0
      %1874 = vmatpush1.bf16.msra.mxu0 0
      %1875 = vmatprep.subr.bf16.mxu0 0
      %1876 = vmatpush1.bf16.msra.mxu0 0
      %1877 = vmatprep.mubr.bf16.mxu0 0
      %1878 = vmatmul.mubr.bf16.gmra.mrb[0].mxu0 %v1793
      %v1879 = vpop.f32.mrb[0].mxu0
      %v1880 = vadd.f32 0.0, %v1879
      %v1881 = vpop.f32.mrb[0].mxu0
      %v1882 = vpop.f32.mrb[0].mxu0
      %v1883 = vpop.f32.mrb[0].mxu0
      %1884 = vdwg.mxu0
      %v1885 = vadd.f32 %v1765, %v1839
      %v1886 = vadd.f32 %v1766, %v1841
      %v1887 = vadd.f32 %v1767, %v1880
      %v1888 = vld [vmem:[#allocation2] sm:$0xff]
      %v1889 = vld [vmem:[#allocation2 + $0x8] sm:$0xf]
      %v1891 = vcombine.high %v1888, %v1888
      %v1893 = vpack.c.bf16 %v1888, %v1888
      %v1894 = vpack.c.bf16 %v1891, %v1891
      %v1895 = vpack.c.bf16 %v1889, %v1889
      %v1896 = vld [vmem:[%s2 + $0x8] sm:$0x3]
      %1900 = vrot.lane.b32.xlu0 %v1893, 109
      %v1901 = vpop.permute.xlu0 %1900
      %1902 = vrot.lane.b32.xlu0 %v1894, 109
      %v1903 = vpop.permute.xlu0 %1902
      %1904 = vrot.lane.b32.xlu0 %v1895, 109
      %v1905 = vpop.permute.xlu0 %1904
      %v1906 = vsel %vm670, %v1901, %v1903
      %v1907 = vsel %vm670, %v1903, %v1905
      %v1909 = vsel %vm226, %v1896, 0
      %v1912 = vsel %vm230, %v1906, 0
      %v1915 = vsel %vm230, %v1907, 0
      %v1918 = vsel %vm230, %v1905, 0
      %1920 = vmatprep.subr.bf16.mxu0 %v1915
      %1921 = vmatpush1.bf16.msra.mxu0 %v1912
      %1922 = vmatprep.subr.bf16.mxu0 0
      %1923 = vmatpush1.bf16.msra.mxu0 0
      %1924 = vmatprep.subr.bf16.mxu0 0
      %1925 = vmatpush1.bf16.msra.mxu0 0
      %1926 = vmatprep.subr.bf16.mxu0 0
      %1927 = vmatpush1.bf16.msra.mxu0 0
      %1928 = vmatprep.subr.bf16.mxu0 0
      %1929 = vmatpush1.bf16.msra.mxu0 0
      %1930 = vmatprep.subr.bf16.mxu0 0
      %1931 = vmatpush1.bf16.msra.mxu0 0
      %1932 = vmatprep.subr.bf16.mxu0 0
      %1933 = vmatpush1.bf16.msra.mxu0 0
      %1934 = vmatprep.subr.bf16.mxu0 0
      %1935 = vmatpush1.bf16.msra.mxu0 0
      %1936 = vmatprep.subr.bf16.mxu0 0
      %1937 = vmatpush1.bf16.msra.mxu0 0
      %1938 = vmatprep.subr.bf16.mxu0 0
      %1939 = vmatpush1.bf16.msra.mxu0 0
      %1940 = vmatprep.subr.bf16.mxu0 0
      %1941 = vmatpush1.bf16.msra.mxu0 0
      %1942 = vmatprep.subr.bf16.mxu0 0
      %1943 = vmatpush1.bf16.msra.mxu0 0
      %1944 = vmatprep.subr.bf16.mxu0 0
      %1945 = vmatpush1.bf16.msra.mxu0 0
      %1946 = vmatprep.subr.bf16.mxu0 0
      %1947 = vmatpush1.bf16.msra.mxu0 0
      %1948 = vmatprep.subr.bf16.mxu0 0
      %1949 = vmatpush1.bf16.msra.mxu0 0
      %1950 = vmatprep.subr.bf16.mxu0 0
      %1951 = vmatpush1.bf16.msra.mxu0 0
      %1952 = vmatprep.mubr.bf16.mxu0 0
      %1953 = vmatmul.mubr.bf16.gmra.mrb[0].mxu0 %v1909
      %v1954 = vpop.f32.mrb[0].mxu0
      %v1955 = vadd.f32 0.0, %v1954
      %v1956 = vpop.f32.mrb[0].mxu0
      %v1957 = vadd.f32 0.0, %v1956
      %v1958 = vpop.f32.mrb[0].mxu0
      %v1959 = vpop.f32.mrb[0].mxu0
      %1960 = vdwg.mxu0
      %1961 = vmatprep.subr.bf16.mxu0 0
      %1962 = vmatpush1.bf16.msra.mxu0 %v1918
      %1963 = vmatprep.subr.bf16.mxu0 0
      %1964 = vmatpush1.bf16.msra.mxu0 0
      %1965 = vmatprep.subr.bf16.mxu0 0
      %1966 = vmatpush1.bf16.msra.mxu0 0
      %1967 = vmatprep.subr.bf16.mxu0 0
      %1968 = vmatpush1.bf16.msra.mxu0 0
      %1969 = vmatprep.subr.bf16.mxu0 0
      %1970 = vmatpush1.bf16.msra.mxu0 0
      %1971 = vmatprep.subr.bf16.mxu0 0
      %1972 = vmatpush1.bf16.msra.mxu0 0
      %1973 = vmatprep.subr.bf16.mxu0 0
      %1974 = vmatpush1.bf16.msra.mxu0 0
      %1975 = vmatprep.subr.bf16.mxu0 0
      %1976 = vmatpush1.bf16.msra.mxu0 0
      %1977 = vmatprep.subr.bf16.mxu0 0
      %1978 = vmatpush1.bf16.msra.mxu0 0
      %1979 = vmatprep.subr.bf16.mxu0 0
      %1980 = vmatpush1.bf16.msra.mxu0 0
      %1981 = vmatprep.subr.bf16.mxu0 0
      %1982 = vmatpush1.bf16.msra.mxu0 0
      %1983 = vmatprep.subr.bf16.mxu0 0
      %1984 = vmatpush1.bf16.msra.mxu0 0
      %1985 = vmatprep.subr.bf16.mxu0 0
      %1986 = vmatpush1.bf16.msra.mxu0 0
      %1987 = vmatprep.subr.bf16.mxu0 0
      %1988 = vmatpush1.bf16.msra.mxu0 0
      %1989 = vmatprep.subr.bf16.mxu0 0
      %1990 = vmatpush1.bf16.msra.mxu0 0
      %1991 = vmatprep.subr.bf16.mxu0 0
      %1992 = vmatpush1.bf16.msra.mxu0 0
      %1993 = vmatprep.mubr.bf16.mxu0 0
      %1994 = vmatmul.mubr.bf16.gmra.mrb[0].mxu0 %v1909
      %v1995 = vpop.f32.mrb[0].mxu0
      %v1996 = vadd.f32 0.0, %v1995
      %v1997 = vpop.f32.mrb[0].mxu0
      %v1998 = vpop.f32.mrb[0].mxu0
      %v1999 = vpop.f32.mrb[0].mxu0
      %2000 = vdwg.mxu0
      %v2001 = vadd.f32 %v1885, %v1955
      %v2002 = vadd.f32 %v1886, %v1957
      %v2003 = vadd.f32 %v1887, %v1996
      %v2004 = vld [vmem:[#allocation2] sm:$0xff]
      %v2005 = vld [vmem:[#allocation2 + $0x8] sm:$0xf]
      %v2007 = vcombine.high %v2004, %v2004
      %v2009 = vpack.c.bf16 %v2004, %v2004
      %v2010 = vpack.c.bf16 %v2007, %v2007
      %v2011 = vpack.c.bf16 %v2005, %v2005
      %v2012 = vld [vmem:[%s2 + $0x8] sm:$0xc]
      %v2014 = vunpack.c.l.b16 %v2012
      %v2015 = vpack.c.b16 %v2014, %v2014
      %v2016 = vrot.slane %v2015, 2
      %2020 = vrot.lane.b32.xlu0 %v2009, 108
      %v2021 = vpop.permute.xlu0 %2020
      %2022 = vrot.lane.b32.xlu0 %v2010, 108
      %v2023 = vpop.permute.xlu0 %2022
      %2024 = vrot.lane.b32.xlu0 %v2011, 108
      %v2025 = vpop.permute.xlu0 %2024
      %v2026 = vsel %vm791, %v2021, %v2023
      %v2027 = vsel %vm791, %v2023, %v2025
      %v2029 = vsel %vm226, %v2016, 0
      %v2032 = vsel %vm230, %v2026, 0
      %v2035 = vsel %vm230, %v2027, 0
      %v2038 = vsel %vm230, %v2025, 0
      %2040 = vmatprep.subr.bf16.mxu0 %v2035
      %2041 = vmatpush1.bf16.msra.mxu0 %v2032
      %2042 = vmatprep.subr.bf16.mxu0 0
      %2043 = vmatpush1.bf16.msra.mxu0 0
      %2044 = vmatprep.subr.bf16.mxu0 0
      %2045 = vmatpush1.bf16.msra.mxu0 0
      %2046 = vmatprep.subr.bf16.mxu0 0
      %2047 = vmatpush1.bf16.msra.mxu0 0
      %2048 = vmatprep.subr.bf16.mxu0 0
      %2049 = vmatpush1.bf16.msra.mxu0 0
      %2050 = vmatprep.subr.bf16.mxu0 0
      %2051 = vmatpush1.bf16.msra.mxu0 0
      %2052 = vmatprep.subr.bf16.mxu0 0
      %2053 = vmatpush1.bf16.msra.mxu0 0
      %2054 = vmatprep.subr.bf16.mxu0 0
      %2055 = vmatpush1.bf16.msra.mxu0 0
      %2056 = vmatprep.subr.bf16.mxu0 0
      %2057 = vmatpush1.bf16.msra.mxu0 0
      %2058 = vmatprep.subr.bf16.mxu0 0
      %2059 = vmatpush1.bf16.msra.mxu0 0
      %2060 = vmatprep.subr.bf16.mxu0 0
      %2061 = vmatpush1.bf16.msra.mxu0 0
      %2062 = vmatprep.subr.bf16.mxu0 0
      %2063 = vmatpush1.bf16.msra.mxu0 0
      %2064 = vmatprep.subr.bf16.mxu0 0
      %2065 = vmatpush1.bf16.msra.mxu0 0
      %2066 = vmatprep.subr.bf16.mxu0 0
      %2067 = vmatpush1.bf16.msra.mxu0 0
      %2068 = vmatprep.subr.bf16.mxu0 0
      %2069 = vmatpush1.bf16.msra.mxu0 0
      %2070 = vmatprep.subr.bf16.mxu0 0
      %2071 = vmatpush1.bf16.msra.mxu0 0
      %2072 = vmatprep.mubr.bf16.mxu0 0
      %2073 = vmatmul.mubr.bf16.gmra.mrb[0].mxu0 %v2029
      %v2074 = vpop.f32.mrb[0].mxu0
      %v2075 = vadd.f32 0.0, %v2074
      %v2076 = vpop.f32.mrb[0].mxu0
      %v2077 = vadd.f32 0.0, %v2076
      %v2078 = vpop.f32.mrb[0].mxu0
      %v2079 = vpop.f32.mrb[0].mxu0
      %2080 = vdwg.mxu0
      %2081 = vmatprep.subr.bf16.mxu0 0
      %2082 = vmatpush1.bf16.msra.mxu0 %v2038
      %2083 = vmatprep.subr.bf16.mxu0 0
      %2084 = vmatpush1.bf16.msra.mxu0 0
      %2085 = vmatprep.subr.bf16.mxu0 0
      %2086 = vmatpush1.bf16.msra.mxu0 0
      %2087 = vmatprep.subr.bf16.mxu0 0
      %2088 = vmatpush1.bf16.msra.mxu0 0
      %2089 = vmatprep.subr.bf16.mxu0 0
      %2090 = vmatpush1.bf16.msra.mxu0 0
      %2091 = vmatprep.subr.bf16.mxu0 0
      %2092 = vmatpush1.bf16.msra.mxu0 0
      %2093 = vmatprep.subr.bf16.mxu0 0
      %2094 = vmatpush1.bf16.msra.mxu0 0
      %2095 = vmatprep.subr.bf16.mxu0 0
      %2096 = vmatpush1.bf16.msra.mxu0 0
      %2097 = vmatprep.subr.bf16.mxu0 0
      %2098 = vmatpush1.bf16.msra.mxu0 0
      %2099 = vmatprep.subr.bf16.mxu0 0
      %2100 = vmatpush1.bf16.msra.mxu0 0
      %2101 = vmatprep.subr.bf16.mxu0 0
      %2102 = vmatpush1.bf16.msra.mxu0 0
      %2103 = vmatprep.subr.bf16.mxu0 0
      %2104 = vmatpush1.bf16.msra.mxu0 0
      %2105 = vmatprep.subr.bf16.mxu0 0
      %2106 = vmatpush1.bf16.msra.mxu0 0
      %2107 = vmatprep.subr.bf16.mxu0 0
      %2108 = vmatpush1.bf16.msra.mxu0 0
      %2109 = vmatprep.subr.bf16.mxu0 0
      %2110 = vmatpush1.bf16.msra.mxu0 0
      %2111 = vmatprep.subr.bf16.mxu0 0
      %2112 = vmatpush1.bf16.msra.mxu0 0
      %2113 = vmatprep.mubr.bf16.mxu0 0
      %2114 = vmatmul.mubr.bf16.gmra.mrb[0].mxu0 %v2029
      %v2115 = vpop.f32.mrb[0].mxu0
      %v2116 = vadd.f32 0.0, %v2115
      %v2117 = vpop.f32.mrb[0].mxu0
      %v2118 = vpop.f32.mrb[0].mxu0
      %v2119 = vpop.f32.mrb[0].mxu0
      %2120 = vdwg.mxu0
      %v2121 = vadd.f32 %v2001, %v2075
      %v2122 = vadd.f32 %v2002, %v2077
      %v2123 = vadd.f32 %v2003, %v2116
      %v2124 = vld [vmem:[#allocation2] sm:$0xff]
      %v2125 = vld [vmem:[#allocation2 + $0x8] sm:$0xf]
      %v2127 = vcombine.high %v2124, %v2124
      %v2129 = vpack.c.bf16 %v2124, %v2124
      %v2130 = vpack.c.bf16 %v2127, %v2127
      %v2131 = vpack.c.bf16 %v2125, %v2125
      %v2132 = vld [vmem:[%s2 + $0xc] sm:$0x3]
      %2136 = vrot.lane.b32.xlu0 %v2129, 92
      %v2137 = vpop.permute.xlu0 %2136
      %2138 = vrot.lane.b32.xlu0 %v2130, 92
      %v2139 = vpop.permute.xlu0 %2138
      %2140 = vrot.lane.b32.xlu0 %v2131, 92
      %v2141 = vpop.permute.xlu0 %2140
      %v2142 = vsel %vm908, %v2137, %v2139
      %v2143 = vsel %vm908, %v2139, %v2141
      %v2145 = vsel %vm226, %v2132, 0
      %v2148 = vsel %vm230, %v2142, 0
      %v2151 = vsel %vm230, %v2143, 0
      %v2154 = vsel %vm230, %v2141, 0
      %2156 = vmatprep.subr.bf16.mxu0 %v2151
      %2157 = vmatpush1.bf16.msra.mxu0 %v2148
      %2158 = vmatprep.subr.bf16.mxu0 0
      %2159 = vmatpush1.bf16.msra.mxu0 0
      %2160 = vmatprep.subr.bf16.mxu0 0
      %2161 = vmatpush1.bf16.msra.mxu0 0
      %2162 = vmatprep.subr.bf16.mxu0 0
      %2163 = vmatpush1.bf16.msra.mxu0 0
      %2164 = vmatprep.subr.bf16.mxu0 0
      %2165 = vmatpush1.bf16.msra.mxu0 0
      %2166 = vmatprep.subr.bf16.mxu0 0
      %2167 = vmatpush1.bf16.msra.mxu0 0
      %2168 = vmatprep.subr.bf16.mxu0 0
      %2169 = vmatpush1.bf16.msra.mxu0 0
      %2170 = vmatprep.subr.bf16.mxu0 0
      %2171 = vmatpush1.bf16.msra.mxu0 0
      %2172 = vmatprep.subr.bf16.mxu0 0
      %2173 = vmatpush1.bf16.msra.mxu0 0
      %2174 = vmatprep.subr.bf16.mxu0 0
      %2175 = vmatpush1.bf16.msra.mxu0 0
      %2176 = vmatprep.subr.bf16.mxu0 0
      %2177 = vmatpush1.bf16.msra.mxu0 0
      %2178 = vmatprep.subr.bf16.mxu0 0
      %2179 = vmatpush1.bf16.msra.mxu0 0
      %2180 = vmatprep.subr.bf16.mxu0 0
      %2181 = vmatpush1.bf16.msra.mxu0 0
      %2182 = vmatprep.subr.bf16.mxu0 0
      %2183 = vmatpush1.bf16.msra.mxu0 0
      %2184 = vmatprep.subr.bf16.mxu0 0
      %2185 = vmatpush1.bf16.msra.mxu0 0
      %2186 = vmatprep.subr.bf16.mxu0 0
      %2187 = vmatpush1.bf16.msra.mxu0 0
      %2188 = vmatprep.mubr.bf16.mxu0 0
      %2189 = vmatmul.mubr.bf16.gmra.mrb[0].mxu0 %v2145
      %v2190 = vpop.f32.mrb[0].mxu0
      %v2191 = vadd.f32 0.0, %v2190
      %v2192 = vpop.f32.mrb[0].mxu0
      %v2193 = vadd.f32 0.0, %v2192
      %v2194 = vpop.f32.mrb[0].mxu0
      %v2195 = vpop.f32.mrb[0].mxu0
      %2196 = vdwg.mxu0
      %2197 = vmatprep.subr.bf16.mxu0 0
      %2198 = vmatpush1.bf16.msra.mxu0 %v2154
      %2199 = vmatprep.subr.bf16.mxu0 0
      %2200 = vmatpush1.bf16.msra.mxu0 0
      %2201 = vmatprep.subr.bf16.mxu0 0
      %2202 = vmatpush1.bf16.msra.mxu0 0
      %2203 = vmatprep.subr.bf16.mxu0 0
      %2204 = vmatpush1.bf16.msra.mxu0 0
      %2205 = vmatprep.subr.bf16.mxu0 0
      %2206 = vmatpush1.bf16.msra.mxu0 0
      %2207 = vmatprep.subr.bf16.mxu0 0
      %2208 = vmatpush1.bf16.msra.mxu0 0
      %2209 = vmatprep.subr.bf16.mxu0 0
      %2210 = vmatpush1.bf16.msra.mxu0 0
      %2211 = vmatprep.subr.bf16.mxu0 0
      %2212 = vmatpush1.bf16.msra.mxu0 0
      %2213 = vmatprep.subr.bf16.mxu0 0
      %2214 = vmatpush1.bf16.msra.mxu0 0
      %2215 = vmatprep.subr.bf16.mxu0 0
      %2216 = vmatpush1.bf16.msra.mxu0 0
      %2217 = vmatprep.subr.bf16.mxu0 0
      %2218 = vmatpush1.bf16.msra.mxu0 0
      %2219 = vmatprep.subr.bf16.mxu0 0
      %2220 = vmatpush1.bf16.msra.mxu0 0
      %2221 = vmatprep.subr.bf16.mxu0 0
      %2222 = vmatpush1.bf16.msra.mxu0 0
      %2223 = vmatprep.subr.bf16.mxu0 0
      %2224 = vmatpush1.bf16.msra.mxu0 0
      %2225 = vmatprep.subr.bf16.mxu0 0
      %2226 = vmatpush1.bf16.msra.mxu0 0
      %2227 = vmatprep.subr.bf16.mxu0 0
      %2228 = vmatpush1.bf16.msra.mxu0 0
      %2229 = vmatprep.mubr.bf16.mxu0 0
      %2230 = vmatmul.mubr.bf16.gmra.mrb[0].mxu0 %v2145
      %v2231 = vpop.f32.mrb[0].mxu0
      %v2232 = vadd.f32 0.0, %v2231
      %v2233 = vpop.f32.mrb[0].mxu0
      %v2234 = vpop.f32.mrb[0].mxu0
      %v2235 = vpop.f32.mrb[0].mxu0
      %2236 = vdwg.mxu0
      %v2237 = vadd.f32 %v2121, %v2191
      %v2238 = vadd.f32 %v2122, %v2193
      %v2239 = vadd.f32 %v2123, %v2232
      %v2240 = vld [vmem:[#allocation2] sm:$0xff]
      %v2241 = vld [vmem:[#allocation2 + $0x8] sm:$0xf]
      %v2243 = vcombine.high %v2240, %v2240
      %v2245 = vpack.c.bf16 %v2240, %v2240
      %v2246 = vpack.c.bf16 %v2243, %v2243
      %v2247 = vpack.c.bf16 %v2241, %v2241
      %v2248 = vld [vmem:[%s2 + $0xc] sm:$0xc]
      %v2250 = vunpack.c.l.b16 %v2248
      %v2251 = vpack.c.b16 %v2250, %v2250
      %v2252 = vrot.slane %v2251, 2
      %2256 = vrot.lane.b32.xlu0 %v2245, 91
      %v2257 = vpop.permute.xlu0 %2256
      %2258 = vrot.lane.b32.xlu0 %v2246, 91
      %v2259 = vpop.permute.xlu0 %2258
      %2260 = vrot.lane.b32.xlu0 %v2247, 91
      %v2261 = vpop.permute.xlu0 %2260
      %v2262 = vsel %vm1029, %v2257, %v2259
      %v2263 = vsel %vm1029, %v2259, %v2261
      %v2265 = vsel %vm226, %v2252, 0
      %v2268 = vsel %vm230, %v2262, 0
      %v2271 = vsel %vm230, %v2263, 0
      %v2274 = vsel %vm230, %v2261, 0
      %2276 = vmatprep.subr.bf16.mxu0 %v2271
      %2277 = vmatpush1.bf16.msra.mxu0 %v2268
      %2278 = vmatprep.subr.bf16.mxu0 0
      %2279 = vmatpush1.bf16.msra.mxu0 0
      %2280 = vmatprep.subr.bf16.mxu0 0
      %2281 = vmatpush1.bf16.msra.mxu0 0
      %2282 = vmatprep.subr.bf16.mxu0 0
      %2283 = vmatpush1.bf16.msra.mxu0 0
      %2284 = vmatprep.subr.bf16.mxu0 0
      %2285 = vmatpush1.bf16.msra.mxu0 0
      %2286 = vmatprep.subr.bf16.mxu0 0
      %2287 = vmatpush1.bf16.msra.mxu0 0
      %2288 = vmatprep.subr.bf16.mxu0 0
      %2289 = vmatpush1.bf16.msra.mxu0 0
      %2290 = vmatprep.subr.bf16.mxu0 0
      %2291 = vmatpush1.bf16.msra.mxu0 0
      %2292 = vmatprep.subr.bf16.mxu0 0
      %2293 = vmatpush1.bf16.msra.mxu0 0
      %2294 = vmatprep.subr.bf16.mxu0 0
      %2295 = vmatpush1.bf16.msra.mxu0 0
      %2296 = vmatprep.subr.bf16.mxu0 0
      %2297 = vmatpush1.bf16.msra.mxu0 0
      %2298 = vmatprep.subr.bf16.mxu0 0
      %2299 = vmatpush1.bf16.msra.mxu0 0
      %2300 = vmatprep.subr.bf16.mxu0 0
      %2301 = vmatpush1.bf16.msra.mxu0 0
      %2302 = vmatprep.subr.bf16.mxu0 0
      %2303 = vmatpush1.bf16.msra.mxu0 0
      %2304 = vmatprep.subr.bf16.mxu0 0
      %2305 = vmatpush1.bf16.msra.mxu0 0
      %2306 = vmatprep.subr.bf16.mxu0 0
      %2307 = vmatpush1.bf16.msra.mxu0 0
      %2308 = vmatprep.mubr.bf16.mxu0 0
      %2309 = vmatmul.mubr.bf16.gmra.mrb[0].mxu0 %v2265
      %v2310 = vpop.f32.mrb[0].mxu0
      %v2311 = vadd.f32 0.0, %v2310
      %v2312 = vpop.f32.mrb[0].mxu0
      %v2313 = vadd.f32 0.0, %v2312
      %v2314 = vpop.f32.mrb[0].mxu0
      %v2315 = vpop.f32.mrb[0].mxu0
      %2316 = vdwg.mxu0
      %2317 = vmatprep.subr.bf16.mxu0 0
      %2318 = vmatpush1.bf16.msra.mxu0 %v2274
      %2319 = vmatprep.subr.bf16.mxu0 0
      %2320 = vmatpush1.bf16.msra.mxu0 0
      %2321 = vmatprep.subr.bf16.mxu0 0
      %2322 = vmatpush1.bf16.msra.mxu0 0
      %2323 = vmatprep.subr.bf16.mxu0 0
      %2324 = vmatpush1.bf16.msra.mxu0 0
      %2325 = vmatprep.subr.bf16.mxu0 0
      %2326 = vmatpush1.bf16.msra.mxu0 0
      %2327 = vmatprep.subr.bf16.mxu0 0
      %2328 = vmatpush1.bf16.msra.mxu0 0
      %2329 = vmatprep.subr.bf16.mxu0 0
      %2330 = vmatpush1.bf16.msra.mxu0 0
      %2331 = vmatprep.subr.bf16.mxu0 0
      %2332 = vmatpush1.bf16.msra.mxu0 0
      %2333 = vmatprep.subr.bf16.mxu0 0
      %2334 = vmatpush1.bf16.msra.mxu0 0
      %2335 = vmatprep.subr.bf16.mxu0 0
      %2336 = vmatpush1.bf16.msra.mxu0 0
      %2337 = vmatprep.subr.bf16.mxu0 0
      %2338 = vmatpush1.bf16.msra.mxu0 0
      %2339 = vmatprep.subr.bf16.mxu0 0
      %2340 = vmatpush1.bf16.msra.mxu0 0
      %2341 = vmatprep.subr.bf16.mxu0 0
      %2342 = vmatpush1.bf16.msra.mxu0 0
      %2343 = vmatprep.subr.bf16.mxu0 0
      %2344 = vmatpush1.bf16.msra.mxu0 0
      %2345 = vmatprep.subr.bf16.mxu0 0
      %2346 = vmatpush1.bf16.msra.mxu0 0
      %2347 = vmatprep.subr.bf16.mxu0 0
      %2348 = vmatpush1.bf16.msra.mxu0 0
      %2349 = vmatprep.mubr.bf16.mxu0 0
      %2350 = vmatmul.mubr.bf16.gmra.mrb[0].mxu0 %v2265
      %v2351 = vpop.f32.mrb[0].mxu0
      %v2352 = vadd.f32 0.0, %v2351
      %v2353 = vpop.f32.mrb[0].mxu0
      %v2354 = vpop.f32.mrb[0].mxu0
      %v2355 = vpop.f32.mrb[0].mxu0
      %2356 = vdwg.mxu0
      %v2357 = vadd.f32 %v2237, %v2311
      %v2358 = vadd.f32 %v2238, %v2313
      %v2359 = vadd.f32 %v2239, %v2352
      %v2360 = vld [vmem:[#allocation2] sm:$0xff]
      %v2361 = vld [vmem:[#allocation2 + $0x8] sm:$0xf]
      %v2363 = vcombine.high %v2360, %v2360
      %v2365 = vpack.c.bf16 %v2360, %v2360
      %v2366 = vpack.c.bf16 %v2363, %v2363
      %v2367 = vpack.c.bf16 %v2361, %v2361
      %v2368 = vld [vmem:[%s2 + $0x10] sm:$0x3]
      %2372 = vrot.lane.b32.xlu0 %v2365, 90
      %v2373 = vpop.permute.xlu0 %2372
      %2374 = vrot.lane.b32.xlu0 %v2366, 90
      %v2375 = vpop.permute.xlu0 %2374
      %2376 = vrot.lane.b32.xlu0 %v2367, 90
      %v2377 = vpop.permute.xlu0 %2376
      %v2378 = vsel %vm1146, %v2373, %v2375
      %v2379 = vsel %vm1146, %v2375, %v2377
      %v2381 = vsel %vm226, %v2368, 0
      %v2384 = vsel %vm230, %v2378, 0
      %v2387 = vsel %vm230, %v2379, 0
      %v2390 = vsel %vm230, %v2377, 0
      %2392 = vmatprep.subr.bf16.mxu0 %v2387
      %2393 = vmatpush1.bf16.msra.mxu0 %v2384
      %2394 = vmatprep.subr.bf16.mxu0 0
      %2395 = vmatpush1.bf16.msra.mxu0 0
      %2396 = vmatprep.subr.bf16.mxu0 0
      %2397 = vmatpush1.bf16.msra.mxu0 0
      %2398 = vmatprep.subr.bf16.mxu0 0
      %2399 = vmatpush1.bf16.msra.mxu0 0
      %2400 = vmatprep.subr.bf16.mxu0 0
      %2401 = vmatpush1.bf16.msra.mxu0 0
      %2402 = vmatprep.subr.bf16.mxu0 0
      %2403 = vmatpush1.bf16.msra.mxu0 0
      %2404 = vmatprep.subr.bf16.mxu0 0
      %2405 = vmatpush1.bf16.msra.mxu0 0
      %2406 = vmatprep.subr.bf16.mxu0 0
      %2407 = vmatpush1.bf16.msra.mxu0 0
      %2408 = vmatprep.subr.bf16.mxu0 0
      %2409 = vmatpush1.bf16.msra.mxu0 0
      %2410 = vmatprep.subr.bf16.mxu0 0
      %2411 = vmatpush1.bf16.msra.mxu0 0
      %2412 = vmatprep.subr.bf16.mxu0 0
      %2413 = vmatpush1.bf16.msra.mxu0 0
      %2414 = vmatprep.subr.bf16.mxu0 0
      %2415 = vmatpush1.bf16.msra.mxu0 0
      %2416 = vmatprep.subr.bf16.mxu0 0
      %2417 = vmatpush1.bf16.msra.mxu0 0
      %2418 = vmatprep.subr.bf16.mxu0 0
      %2419 = vmatpush1.bf16.msra.mxu0 0
      %2420 = vmatprep.subr.bf16.mxu0 0
      %2421 = vmatpush1.bf16.msra.mxu0 0
      %2422 = vmatprep.subr.bf16.mxu0 0
      %2423 = vmatpush1.bf16.msra.mxu0 0
      %2424 = vmatprep.mubr.bf16.mxu0 0
      %2425 = vmatmul.mubr.bf16.gmra.mrb[0].mxu0 %v2381
      %v2426 = vpop.f32.mrb[0].mxu0
      %v2427 = vadd.f32 0.0, %v2426
      %v2428 = vpop.f32.mrb[0].mxu0
      %v2429 = vadd.f32 0.0, %v2428
      %v2430 = vpop.f32.mrb[0].mxu0
      %v2431 = vpop.f32.mrb[0].mxu0
      %2432 = vdwg.mxu0
      %2433 = vmatprep.subr.bf16.mxu0 0
      %2434 = vmatpush1.bf16.msra.mxu0 %v2390
      %2435 = vmatprep.subr.bf16.mxu0 0
      %2436 = vmatpush1.bf16.msra.mxu0 0
      %2437 = vmatprep.subr.bf16.mxu0 0
      %2438 = vmatpush1.bf16.msra.mxu0 0
      %2439 = vmatprep.subr.bf16.mxu0 0
      %2440 = vmatpush1.bf16.msra.mxu0 0
      %2441 = vmatprep.subr.bf16.mxu0 0
      %2442 = vmatpush1.bf16.msra.mxu0 0
      %2443 = vmatprep.subr.bf16.mxu0 0
      %2444 = vmatpush1.bf16.msra.mxu0 0
      %2445 = vmatprep.subr.bf16.mxu0 0
      %2446 = vmatpush1.bf16.msra.mxu0 0
      %2447 = vmatprep.subr.bf16.mxu0 0
      %2448 = vmatpush1.bf16.msra.mxu0 0
      %2449 = vmatprep.subr.bf16.mxu0 0
      %2450 = vmatpush1.bf16.msra.mxu0 0
      %2451 = vmatprep.subr.bf16.mxu0 0
      %2452 = vmatpush1.bf16.msra.mxu0 0
      %2453 = vmatprep.subr.bf16.mxu0 0
      %2454 = vmatpush1.bf16.msra.mxu0 0
      %2455 = vmatprep.subr.bf16.mxu0 0
      %2456 = vmatpush1.bf16.msra.mxu0 0
      %2457 = vmatprep.subr.bf16.mxu0 0
      %2458 = vmatpush1.bf16.msra.mxu0 0
      %2459 = vmatprep.subr.bf16.mxu0 0
      %2460 = vmatpush1.bf16.msra.mxu0 0
      %2461 = vmatprep.subr.bf16.mxu0 0
      %2462 = vmatpush1.bf16.msra.mxu0 0
      %2463 = vmatprep.subr.bf16.mxu0 0
      %2464 = vmatpush1.bf16.msra.mxu0 0
      %2465 = vmatprep.mubr.bf16.mxu0 0
      %2466 = vmatmul.mubr.bf16.gmra.mrb[0].mxu0 %v2381
      %v2467 = vpop.f32.mrb[0].mxu0
      %v2468 = vadd.f32 0.0, %v2467
      %v2469 = vpop.f32.mrb[0].mxu0
      %v2470 = vpop.f32.mrb[0].mxu0
      %v2471 = vpop.f32.mrb[0].mxu0
      %2472 = vdwg.mxu0
      %v2473 = vadd.f32 %v2357, %v2427
      %v2474 = vadd.f32 %v2358, %v2429
      %v2475 = vadd.f32 %v2359, %v2468
      %v2476 = vmul.f32 %v2473, %v1249
      %v2477 = vmul.f32 %v2474, %v1253
      %v2478 = vmul.f32 %v2475, %v1257
      %v2479 = vsel %vm1264, %v2476, 0.0
      %v2480 = vsel %vm1264, %v2477, 0.0
      %v2481 = vadd.f32 %v2479, %v2480
      %v2482 = vsel %vm1268, %v2478, 0.0
      %v2483 = vadd.f32 %v2481, %v2482
      %2484 = vadd.xlane.f32.xlu0 %v2483
      %v2485 = vpop.xlane.xlu0 %2484
      %v2486 = vmul.f32 %v2473, %v2473
      %v2487 = vmul.f32 %v2474, %v2474
      %v2488 = vmul.f32 %v2475, %v2475
      %v2489 = vmul.f32 %v2486, %v1249
      %v2490 = vmul.f32 %v2487, %v1253
      %v2491 = vmul.f32 %v2488, %v1257
      %v2492 = vsel %vm1264, %v2489, 0.0
      %v2493 = vsel %vm1264, %v2490, 0.0
      %v2494 = vadd.f32 %v2492, %v2493
      %v2495 = vsel %vm1268, %v2491, 0.0
      %v2496 = vadd.f32 %v2494, %v2495
      %2497 = vadd.xlane.f32.xlu0 %v2496
      %v2498 = vpop.xlane.xlu0 %2497
      %v2499 = vmul.f32 %v2485, 0.00390625
      %v2500 = vmul.f32 %v2498, 0.00390625
      %v2501 = vmul.f32 %v2499, %v2499
      %v2502 = vsub.f32 %v2500, %v2501
      %v2503 = vmax.f32 %v2502, 0.0
      %v2504 = vadd.f32 %v2503, 1e-05
      %v2505 = vrsqrt.pop %v2504
      %v2506 = vsub.f32 %v2473, %v2499
      %v2507 = vsub.f32 %v2474, %v2499
      %v2508 = vsub.f32 %v2475, %v2499
      %v2509 = vmul.f32 %v2506, %v2505
      %v2510 = vmul.f32 %v2507, %v2505
      %v2511 = vmul.f32 %v2508, %v2505
      %v2512 = vmax.f32 %v2509, 0.0
      %v2513 = vmax.f32 %v2510, 0.0
      %v2514 = vmax.f32 %v2511, 0.0
      %v2515 = vld [vmem:[%s192] sm:$0xff]
      %v2516 = vld [vmem:[%s192 + $0x8] sm:$0xf]
      %v2519 = vcombine.high %v2515, %v2515
      %2520 = vrot.lane.b32.xlu0 %v2515, 109
      %v2521 = vpop.permute.xlu0 %2520
      %2522 = vrot.lane.b32.xlu0 %v2519, 109
      %v2523 = vpop.permute.xlu0 %2522
      %2524 = vrot.lane.b32.xlu0 %v2516, 109
      %v2525 = vpop.permute.xlu0 %2524
      %vm2526 = vcmask 891904
      %v2527 = vsel %vm2526, %v2521, %v2523
      %v2528 = vsel %vm2526, %v2523, %v2525
      %v2532 = vadd.f32 %v2512, %v2527
      %v2533 = vadd.f32 %v2513, %v2528
      %v2534 = vadd.f32 %v2514, %v2525
      %v2537 = vcombine.low %v2532, %v2533
      %2539 = vst [vmem:[%s197] sm:$0xff] %v2537
      %2540 = vst.msk [vmem:[%s197 + $0x8] sm:$0xf] %vm1268, %v2534
      %p2541 = scmp.lt.s32.totalorder %s15, 1
      %s2542 = scalar_select %p2541, %s15, 1
      %s2543 = smul.addr %s2542, 3
      %s2544 = smul.addr %s2543, 4
      %s2545 = scalar_lea.vmem %s4, %s2544
      // Predicated region
      $region37: #{resnet_block.1} parent=35 // pred_check
        %p2546 = pneg %p122
      $region38: #{resnet_block.1} parent=35 // pred_check_branch
        %2548 = sbr.rel (%p2546) target = $region40
      $region39: #{resnet_block.1} parent=35 // pred_region
        _
      $region40: #{resnet_block.1} parent=35 // pred_fallthru
        _
    $region36: #{resnet_block.1} parent=5 // pred_fallthru
      _
    %p2549 = scmp.le.s32.totalorder 2, %s10
    // Predicated region
    $region41: #{resnet_block.1} parent=5 // pred_check
      %p2550 = pneg %p2549
    $region42: #{resnet_block.1} parent=5 // pred_check_branch
      %2552 = sbr.rel (%p2550) target = $region44
    $region43: #{resnet_block.1} parent=5 // pred_region
      %s2553 = ssub.s32 %s10, 2
      // Predicated region
      $region45: #{resnet_block.1} parent=43 // pred_check
        %p2554 = pneg %p128
      $region46: #{resnet_block.1} parent=43 // pred_check_branch
        %2556 = sbr.rel (%p2554) target = $region48
      $region47: #{resnet_block.1} parent=43 // pred_region
        %p2557 = scmp.lt.s32.totalorder %s16, 1
        %s2558 = scalar_select %p2557, %s16, 1
        %s2559 = smul.addr %s2558, 3
        %s2560 = smul.addr %s2559, 4
        %s2561 = scalar_lea.vmem %s4, %s2560
      $region48: #{resnet_block.1} parent=43 // pred_fallthru
        _
    $region44: #{resnet_block.1} parent=5 // pred_fallthru
      _
  $region6: #{resnet_block.1} parent=0 // loop_footer
    %s14 = sadd.s32 1, %s10
  $region7: #{resnet_block.1} parent=0 // loop_footer_branch
    %9 = sbr.rel target = $region3
  $region8: #{resnet_block.1} parent=0 // loop_exit
    _

</llo_original>
